<compile_context>
chip_gen: v6e
topology: v6e:2x2x1
jax: 0.10.0
libtpu: 0.0.40
codegen_flags: <defaults>
</compile_context>

<pallas_src>
import jax
import jax.numpy as jnp
from jax.experimental import pallas as pl
from jax.experimental.pallas import tpu as pltpu

D_MODEL = 32
N_HEADS = 4
D_FF = 64
EPS = 1e-6


def encoder_layer_kernel(x_ref, amask_ref, wqkv_ref, bqkv_ref, wo_ref,
                         w1_ref, w2_ref, sp_ref, out_ref):
    B, S, D = x_ref.shape
    HB, _, three_dk = wqkv_ref.shape          # leading axis = h * B + b
    H = HB // B
    dk = three_dk // 3
    dff = w1_ref.shape[1]
    T = B * S
    scale = 1.0 / float(dk) ** 0.5

    # packed small params: row0=b1, row1=bo, row2=b2, rows 3..6 = ln1a,ln1b,ln2a,ln2b
    b1 = sp_ref[0:1, 0:dff]
    bo = sp_ref[1:2, 0:D]
    b2 = sp_ref[2:3, 0:D]
    ln1a = sp_ref[3:4, 0:D]
    ln1b = sp_ref[4:5, 0:D]
    ln2a = sp_ref[5:6, 0:D]
    ln2b = sp_ref[6:7, 0:D]

    def layer_norm(y, a, b):
        # matches torch: unbiased std (N-1), eps added to std (not variance)
        mean = jnp.mean(y, axis=-1, keepdims=True)
        diff = y - mean
        var = jnp.sum(diff * diff, axis=-1, keepdims=True) * (1.0 / (D - 1))
        inv = pl.reciprocal(jnp.sqrt(var) + EPS, approx=True)      # EUP slot
        return a * (diff * inv) + b

    x = x_ref[...]                               # (B, S, D)
    xf = x.reshape(T, D)                         # fold tokens (major-dim merge)

    # ---------------- sublayer 0: x + self_attn(LN(x)) ----------------
    xn = layer_norm(xf, ln1a, ln1b)              # (T, D)
    xn3 = xn.reshape(B, S, D)
    # replicate tokens onto the (head*batch) leading axis: index n = h*B + b
    xnb = jnp.concatenate([xn3] * H, axis=0)     # (H*B, S, D)

    # fused QKV projection, batched over (head, batch)
    qkv = jnp.einsum('nsd,nde->nse', xnb, wqkv_ref[...],
                     preferred_element_type=jnp.float32) + bqkv_ref[...]   # (HB,S,3dk)
    q = qkv[:, :, 0:dk]
    k = qkv[:, :, dk:2 * dk]
    v = qkv[:, :, 2 * dk:3 * dk]

    s = jnp.einsum('nqd,nkd->nqk', q, k,
                   preferred_element_type=jnp.float32) * scale             # (HB,S,S)
    s = s + amask_ref[...]                       # additive mask (HB,1,S)
    s = s - jnp.max(s, axis=-1, keepdims=True)
    p = jnp.exp(s)
    p = p * pl.reciprocal(jnp.sum(p, axis=-1, keepdims=True), approx=True)
    ctx = jnp.einsum('nqk,nkd->nqd', p, v,
                     preferred_element_type=jnp.float32)                   # (HB,S,dk)

    # per-head output projection (per-head rows of Wo), then sum over heads
    ho = jnp.einsum('nsd,nde->nse', ctx, wo_ref[...],
                    preferred_element_type=jnp.float32)                    # (HB,S,D)
    hor = ho.reshape(H, B, S, D)
    attn3 = hor[0]
    for j in range(1, H):                        # static unroll, major-dim slices
        attn3 = attn3 + hor[j]
    x1 = xf + (attn3.reshape(T, D) + bo)         # dropout == identity

    # ---------------- sublayer 1: x + feed_forward(LN(x)) ----------------
    xn2 = layer_norm(x1, ln2a, ln2b)
    h1 = jnp.maximum(
        jnp.dot(xn2, w1_ref[...], preferred_element_type=jnp.float32) + b1, 0.0)
    ff = jnp.dot(h1, w2_ref[...], preferred_element_type=jnp.float32) + b2
    out_ref[...] = (x1 + ff).reshape(B, S, D)


def encoder_layer(x, mask, params):
    B, S, D = x.shape
    assert D == D_MODEL
    H = N_HEADS
    dk = D // H
    HB = H * B

    # ---- re-pack weights so heads live on a leading axis (index = h*B + b) ----
    def split_cols(w):                         # (D, D) -> (H, D, dk) per-head columns
        return w.reshape(D, H, dk).transpose(1, 0, 2)

    wqkv_h = jnp.concatenate(
        [split_cols(params["wq"]), split_cols(params["wk"]), split_cols(params["wv"])],
        axis=-1)                                                   # (H, D, 3dk)
    wqkv_hb = jnp.broadcast_to(wqkv_h[:, None], (H, B, D, 3 * dk)).reshape(HB, D, 3 * dk)

    def split_bias(b):                         # (1, D) -> (H, 1, dk)
        return b.reshape(H, 1, dk)

    bqkv_h = jnp.concatenate(
        [split_bias(params["bq"]), split_bias(params["bk"]), split_bias(params["bv"])],
        axis=-1)                                                   # (H, 1, 3dk)
    bqkv_hb = jnp.broadcast_to(bqkv_h[:, None], (H, B, 1, 3 * dk)).reshape(HB, 1, 3 * dk)

    wo_h = params["wo"].reshape(H, dk, D)                          # per-head rows of Wo
    wo_hb = jnp.broadcast_to(wo_h[:, None], (H, B, dk, D)).reshape(HB, dk, D)

    # additive attention mask (0 keep / -1e9 masked), tiled per head
    amask = jnp.where(mask == 0.0, -1e9, 0.0).astype(jnp.float32)  # (B, 1, S)
    amask_hb = jnp.broadcast_to(amask[None], (H, B, 1, S)).reshape(HB, 1, S)

    # pack every small bias / LayerNorm parameter into one (8, D_FF) slab
    def row(v):
        v = v.reshape(-1)
        return jnp.pad(v, (0, D_FF - v.shape[0]))

    small = jnp.stack([row(params["b1"]), row(params["bo"]), row(params["b2"]),
                       row(params["ln1_a"]), row(params["ln1_b"]),
                       row(params["ln2_a"]), row(params["ln2_b"]),
                       jnp.zeros((D_FF,), jnp.float32)])           # (8, D_FF)

    def full_spec(shape):
        n = len(shape)
        return pl.BlockSpec(shape, lambda i, _n=n: (0,) * _n)

    in_specs = [
        full_spec((B, S, D)),             # x
        full_spec((HB, 1, S)),            # additive mask, per (head, batch)
        full_spec((HB, D, 3 * dk)),       # fused QKV weights, per (head, batch)
        full_spec((HB, 1, 3 * dk)),       # fused QKV bias
        full_spec((HB, dk, D)),           # per-head Wo rows
        full_spec((D, D_FF)),             # w1
        full_spec((D_FF, D)),             # w2
        full_spec((8, D_FF)),             # packed small params
    ]

    return pl.pallas_call(
        encoder_layer_kernel,
        out_shape=jax.ShapeDtypeStruct((B, S, D), jnp.float32),
        grid=(1,),                        # whole problem in one grid step
        in_specs=in_specs,
        out_specs=full_spec((B, S, D)),
        compiler_params=pltpu.CompilerParams(
            dimension_semantics=("arbitrary",)),
    )(x, amask_hb, wqkv_hb, bqkv_hb, wo_hb, params["w1"], params["w2"], small)


# ------------------------- pure-JAX reference -------------------------------
def encoder_layer_ref(x, mask, p):
    d_k = D_MODEL // N_HEADS

    def ln(y, a, b):
        mean = jnp.mean(y, axis=-1, keepdims=True)
        diff = y - mean
        var = jnp.sum(diff * diff, axis=-1, keepdims=True) / (y.shape[-1] - 1)
        return a * diff / (jnp.sqrt(var) + EPS) + b

    xn = ln(x, p["ln1_a"][0], p["ln1_b"][0])
    q = xn @ p["wq"] + p["bq"][0]
    k = xn @ p["wk"] + p["bk"][0]
    v = xn @ p["wv"] + p["bv"][0]
    B, S, _ = x.shape
    qh = q.reshape(B, S, N_HEADS, d_k).transpose(0, 2, 1, 3)
    kh = k.reshape(B, S, N_HEADS, d_k).transpose(0, 2, 1, 3)
    vh = v.reshape(B, S, N_HEADS, d_k).transpose(0, 2, 1, 3)
    scores = jnp.einsum("bhqd,bhkd->bhqk", qh, kh) / jnp.sqrt(jnp.float32(d_k))
    scores = jnp.where(mask[:, None, :, :] == 0.0, -1e9, scores)
    pattn = jax.nn.softmax(scores, axis=-1)
    attn = jnp.einsum("bhqk,bhkd->bhqd", pattn, vh)
    attn = attn.transpose(0, 2, 1, 3).reshape(B, S, D_MODEL)
    attn = attn @ p["wo"] + p["bo"][0]
    x1 = x + attn
    xn2 = ln(x1, p["ln2_a"][0], p["ln2_b"][0])
    ff = jnp.maximum(xn2 @ p["w1"] + p["b1"][0], 0.0) @ p["w2"] + p["b2"][0]
    return x1 + ff


if __name__ == "__main__":
    B, S = 2, 8
    key = jax.random.PRNGKey(0)
    keys = jax.random.split(key, 12)

    x = jax.random.normal(keys[0], (B, S, D_MODEL), dtype=jnp.float32)
    # mask: 1.0 = attend, 0.0 = padding; pad last two positions of batch 1
    mask = jnp.ones((B, 1, S), dtype=jnp.float32)
    mask = mask.at[1, 0, 6:].set(0.0)

    sc = 0.1
    params = {
        "wq": sc * jax.random.normal(keys[1], (D_MODEL, D_MODEL), jnp.float32),
        "bq": sc * jax.random.normal(keys[2], (1, D_MODEL), jnp.float32),
        "wk": sc * jax.random.normal(keys[3], (D_MODEL, D_MODEL), jnp.float32),
        "bk": sc * jax.random.normal(keys[4], (1, D_MODEL), jnp.float32),
        "wv": sc * jax.random.normal(keys[5], (D_MODEL, D_MODEL), jnp.float32),
        "bv": sc * jax.random.normal(keys[6], (1, D_MODEL), jnp.float32),
        "wo": sc * jax.random.normal(keys[7], (D_MODEL, D_MODEL), jnp.float32),
        "bo": sc * jax.random.normal(keys[8], (1, D_MODEL), jnp.float32),
        "w1": sc * jax.random.normal(keys[9], (D_MODEL, D_FF), jnp.float32),
        "b1": sc * jax.random.normal(keys[10], (1, D_FF), jnp.float32),
        "w2": sc * jax.random.normal(keys[11], (D_FF, D_MODEL), jnp.float32),
        "b2": jnp.zeros((1, D_MODEL), jnp.float32),
        # LayerNorm params: the reference module inits BOTH a2 and b2 to ones
        "ln1_a": jnp.ones((1, D_MODEL), jnp.float32),
        "ln1_b": jnp.ones((1, D_MODEL), jnp.float32),
        "ln2_a": jnp.ones((1, D_MODEL), jnp.float32),
        "ln2_b": jnp.ones((1, D_MODEL), jnp.float32),
    }

    out = encoder_layer(x, mask, params)
    out = jax.block_until_ready(out)

    ref = encoder_layer_ref(x, mask, params)
    assert out.shape == (B, S, D_MODEL)
    # tolerance accounts for the approximate EUP reciprocals (softmax denom and
    # LayerNorm 1/(std+eps)) used inside the kernel; math is otherwise exact.
    assert jnp.allclose(out, ref, atol=2e-2, rtol=2e-2), "mismatch vs reference"
    print("KERNEL_OK")
</pallas_src>

<mosaic_0001>
module attributes {stable_mosaic.version = 11 : i64} {
  func.func @encoder_layer_kernel(%arg0: i32, %arg1: memref<2x8x32xf32, #tpu.memory_space<vmem>>, %arg2: memref<8x1x8xf32, #tpu.memory_space<vmem>>, %arg3: memref<8x32x24xf32, #tpu.memory_space<vmem>>, %arg4: memref<8x1x24xf32, #tpu.memory_space<vmem>>, %arg5: memref<8x8x32xf32, #tpu.memory_space<vmem>>, %arg6: memref<32x64xf32, #tpu.memory_space<vmem>>, %arg7: memref<64x32xf32, #tpu.memory_space<vmem>>, %arg8: memref<8x64xf32, #tpu.memory_space<vmem>>, %arg9: memref<2x8x32xf32, #tpu.memory_space<vmem>>) attributes {dimension_semantics = [#tpu.dimension_semantics<arbitrary>], iteration_bounds = array<i64: 1>, scalar_prefetch = 0 : i64, scratch_operands = 0 : i64, tpu.core_type = #tpu.core_type<tc>, window_params = [{pipeline_mode = #tpu.pipeline_mode<synchronous>, transform_indices = @transform_0, window_bounds = array<i64: 2, 8, 32>}, {pipeline_mode = #tpu.pipeline_mode<synchronous>, transform_indices = @transform_1, window_bounds = array<i64: 8, 1, 8>}, {pipeline_mode = #tpu.pipeline_mode<synchronous>, transform_indices = @transform_2, window_bounds = array<i64: 8, 32, 24>}, {pipeline_mode = #tpu.pipeline_mode<synchronous>, transform_indices = @transform_3, window_bounds = array<i64: 8, 1, 24>}, {pipeline_mode = #tpu.pipeline_mode<synchronous>, transform_indices = @transform_4, window_bounds = array<i64: 8, 8, 32>}, {pipeline_mode = #tpu.pipeline_mode<synchronous>, transform_indices = @transform_5, window_bounds = array<i64: 32, 64>}, {pipeline_mode = #tpu.pipeline_mode<synchronous>, transform_indices = @transform_6, window_bounds = array<i64: 64, 32>}, {pipeline_mode = #tpu.pipeline_mode<synchronous>, transform_indices = @transform_7, window_bounds = array<i64: 8, 64>}, {pipeline_mode = #tpu.pipeline_mode<synchronous>, transform_indices = @transform_8, window_bounds = array<i64: 2, 8, 32>}]} {
    %c0 = arith.constant 0 : index
    %c0_0 = arith.constant 0 : index
    %0 = vector.load %arg8[%c0, %c0_0] : memref<8x64xf32, #tpu.memory_space<vmem>>, vector<1x64xf32>
    %c1 = arith.constant 1 : index
    %c0_1 = arith.constant 0 : index
    %1 = vector.load %arg8[%c1, %c0_1] : memref<8x64xf32, #tpu.memory_space<vmem>>, vector<1x32xf32>
    %c2 = arith.constant 2 : index
    %c0_2 = arith.constant 0 : index
    %2 = vector.load %arg8[%c2, %c0_2] : memref<8x64xf32, #tpu.memory_space<vmem>>, vector<1x32xf32>
    %c3 = arith.constant 3 : index
    %c0_3 = arith.constant 0 : index
    %3 = vector.load %arg8[%c3, %c0_3] : memref<8x64xf32, #tpu.memory_space<vmem>>, vector<1x32xf32>
    %c4 = arith.constant 4 : index
    %c0_4 = arith.constant 0 : index
    %4 = vector.load %arg8[%c4, %c0_4] : memref<8x64xf32, #tpu.memory_space<vmem>>, vector<1x32xf32>
    %c5 = arith.constant 5 : index
    %c0_5 = arith.constant 0 : index
    %5 = vector.load %arg8[%c5, %c0_5] : memref<8x64xf32, #tpu.memory_space<vmem>>, vector<1x32xf32>
    %c6 = arith.constant 6 : index
    %c0_6 = arith.constant 0 : index
    %6 = vector.load %arg8[%c6, %c0_6] : memref<8x64xf32, #tpu.memory_space<vmem>>, vector<1x32xf32>
    %c0_7 = arith.constant 0 : index
    %c0_8 = arith.constant 0 : index
    %c0_9 = arith.constant 0 : index
    %7 = vector.load %arg1[%c0_7, %c0_8, %c0_9] : memref<2x8x32xf32, #tpu.memory_space<vmem>>, vector<2x8x32xf32>
    %8 = vector.shape_cast %7 : vector<2x8x32xf32> to vector<16x32xf32>
    %cst = arith.constant dense<0.000000e+00> : vector<16xf32>
    %9 = vector.multi_reduction <add>, %8, %cst [1] : vector<16x32xf32> to vector<16xf32>
    %10 = vector.shape_cast %9 : vector<16xf32> to vector<16x1xf32>
    %cst_10 = arith.constant 3.200000e+01 : f32
    %11 = vector.broadcast %cst_10 : f32 to vector<16x1xf32>
    %12 = arith.divf %10, %11 : vector<16x1xf32>
    %13 = vector.broadcast %12 : vector<16x1xf32> to vector<16x32xf32>
    %14 = arith.subf %8, %13 : vector<16x32xf32>
    %15 = arith.mulf %14, %14 : vector<16x32xf32>
    %cst_11 = arith.constant dense<0.000000e+00> : vector<16xf32>
    %16 = vector.multi_reduction <add>, %15, %cst_11 [1] : vector<16x32xf32> to vector<16xf32>
    %17 = vector.shape_cast %16 : vector<16xf32> to vector<16x1xf32>
    %cst_12 = arith.constant 0.0322580636 : f32
    %18 = vector.broadcast %cst_12 : f32 to vector<16x1xf32>
    %19 = arith.mulf %17, %18 : vector<16x1xf32>
    %20 = math.sqrt %19 : vector<16x1xf32>
    %cst_13 = arith.constant 9.99999997E-7 : f32
    %21 = vector.broadcast %cst_13 : f32 to vector<16x1xf32>
    %22 = arith.addf %20, %21 : vector<16x1xf32>
    %23 = tpu.reciprocal %22 {approx = true} : vector<16x1xf32> -> vector<16x1xf32>
    %24 = vector.broadcast %23 : vector<16x1xf32> to vector<16x32xf32>
    %25 = arith.mulf %14, %24 : vector<16x32xf32>
    %26 = vector.broadcast %3 : vector<1x32xf32> to vector<16x32xf32>
    %27 = arith.mulf %26, %25 : vector<16x32xf32>
    %28 = vector.broadcast %4 : vector<1x32xf32> to vector<16x32xf32>
    %29 = arith.addf %27, %28 : vector<16x32xf32>
    %30 = vector.shape_cast %29 : vector<16x32xf32> to vector<2x8x32xf32>
    %31 = tpu.concatenate %30, %30, %30, %30 in 0 : vector<2x8x32xf32>, vector<2x8x32xf32>, vector<2x8x32xf32>, vector<2x8x32xf32> -> vector<8x8x32xf32>
    %c0_14 = arith.constant 0 : index
    %c0_15 = arith.constant 0 : index
    %c0_16 = arith.constant 0 : index
    %32 = vector.load %arg3[%c0_14, %c0_15, %c0_16] : memref<8x32x24xf32, #tpu.memory_space<vmem>>, vector<8x32x24xf32>
    "tpu.trace_start"() <{level = 10 : i32, message = "nsd,nde->nse"}> : () -> ()
    %cst_17 = arith.constant dense<0.000000e+00> : vector<8x8x24xf32>
    %33 = tpu.matmul %31, %32, %cst_17 {dimension_numbers = #tpu.dot_dimension_numbers<[2], [1], [1], [2], [0, 0, 0, 1, 1, 2], [0], [0]>} : vector<8x8x32xf32>, vector<8x32x24xf32>, vector<8x8x24xf32> -> vector<8x8x24xf32>
    "tpu.trace_stop"() : () -> ()
    %c0_18 = arith.constant 0 : index
    %c0_19 = arith.constant 0 : index
    %c0_20 = arith.constant 0 : index
    %34 = vector.load %arg4[%c0_18, %c0_19, %c0_20] : memref<8x1x24xf32, #tpu.memory_space<vmem>>, vector<8x1x24xf32>
    %35 = vector.broadcast %34 : vector<8x1x24xf32> to vector<8x8x24xf32>
    %36 = arith.addf %33, %35 : vector<8x8x24xf32>
    %37 = vector.extract_strided_slice %36 {offsets = [0, 0, 0], sizes = [8, 8, 8], strides = [1, 1, 1]} : vector<8x8x24xf32> to vector<8x8x8xf32>
    %38 = vector.extract_strided_slice %36 {offsets = [0, 0, 8], sizes = [8, 8, 8], strides = [1, 1, 1]} : vector<8x8x24xf32> to vector<8x8x8xf32>
    %39 = vector.extract_strided_slice %36 {offsets = [0, 0, 16], sizes = [8, 8, 8], strides = [1, 1, 1]} : vector<8x8x24xf32> to vector<8x8x8xf32>
    "tpu.trace_start"() <{level = 10 : i32, message = "nqd,nkd->nqk"}> : () -> ()
    %cst_21 = arith.constant dense<0.000000e+00> : vector<8x8x8xf32>
    %40 = tpu.matmul %37, %38, %cst_21 {dimension_numbers = #tpu.dot_dimension_numbers<[2], [2], [1], [1], [0, 0, 0, 1, 1, 1], [0], [0]>} : vector<8x8x8xf32>, vector<8x8x8xf32>, vector<8x8x8xf32> -> vector<8x8x8xf32>
    "tpu.trace_stop"() : () -> ()
    %cst_22 = arith.constant 0.353553385 : f32
    %41 = vector.broadcast %cst_22 : f32 to vector<8x8x8xf32>
    %42 = arith.mulf %40, %41 : vector<8x8x8xf32>
    %c0_23 = arith.constant 0 : index
    %c0_24 = arith.constant 0 : index
    %c0_25 = arith.constant 0 : index
    %43 = vector.load %arg2[%c0_23, %c0_24, %c0_25] : memref<8x1x8xf32, #tpu.memory_space<vmem>>, vector<8x1x8xf32>
    %44 = vector.broadcast %43 : vector<8x1x8xf32> to vector<8x8x8xf32>
    %45 = arith.addf %42, %44 : vector<8x8x8xf32>
    %cst_26 = arith.constant dense<0xFF800000> : vector<8x8xf32>
    %46 = vector.multi_reduction <maximumf>, %45, %cst_26 [2] : vector<8x8x8xf32> to vector<8x8xf32>
    %47 = vector.shape_cast %46 : vector<8x8xf32> to vector<8x8x1xf32>
    %48 = vector.broadcast %47 : vector<8x8x1xf32> to vector<8x8x8xf32>
    %49 = arith.subf %45, %48 : vector<8x8x8xf32>
    %50 = math.exp %49 : vector<8x8x8xf32>
    %cst_27 = arith.constant dense<0.000000e+00> : vector<8x8xf32>
    %51 = vector.multi_reduction <add>, %50, %cst_27 [2] : vector<8x8x8xf32> to vector<8x8xf32>
    %52 = vector.shape_cast %51 : vector<8x8xf32> to vector<8x8x1xf32>
    %53 = tpu.reciprocal %52 {approx = true} : vector<8x8x1xf32> -> vector<8x8x1xf32>
    %54 = vector.broadcast %53 : vector<8x8x1xf32> to vector<8x8x8xf32>
    %55 = arith.mulf %50, %54 : vector<8x8x8xf32>
    "tpu.trace_start"() <{level = 10 : i32, message = "nqk,nkd->nqd"}> : () -> ()
    %cst_28 = arith.constant dense<0.000000e+00> : vector<8x8x8xf32>
    %56 = tpu.matmul %55, %39, %cst_28 {dimension_numbers = #tpu.dot_dimension_numbers<[2], [1], [1], [2], [0, 0, 0, 1, 1, 2], [0], [0]>} : vector<8x8x8xf32>, vector<8x8x8xf32>, vector<8x8x8xf32> -> vector<8x8x8xf32>
    "tpu.trace_stop"() : () -> ()
    %c0_29 = arith.constant 0 : index
    %c0_30 = arith.constant 0 : index
    %c0_31 = arith.constant 0 : index
    %57 = vector.load %arg5[%c0_29, %c0_30, %c0_31] : memref<8x8x32xf32, #tpu.memory_space<vmem>>, vector<8x8x32xf32>
    "tpu.trace_start"() <{level = 10 : i32, message = "nsd,nde->nse"}> : () -> ()
    %cst_32 = arith.constant dense<0.000000e+00> : vector<8x8x32xf32>
    %58 = tpu.matmul %56, %57, %cst_32 {dimension_numbers = #tpu.dot_dimension_numbers<[2], [1], [1], [2], [0, 0, 0, 1, 1, 2], [0], [0]>} : vector<8x8x8xf32>, vector<8x8x32xf32>, vector<8x8x32xf32> -> vector<8x8x32xf32>
    "tpu.trace_stop"() : () -> ()
    %59 = vector.shape_cast %58 : vector<8x8x32xf32> to vector<4x2x8x32xf32>
    %60 = vector.extract_strided_slice %59 {offsets = [0, 0, 0, 0], sizes = [1, 2, 8, 32], strides = [1, 1, 1, 1]} : vector<4x2x8x32xf32> to vector<1x2x8x32xf32>
    %61 = vector.shape_cast %60 : vector<1x2x8x32xf32> to vector<2x8x32xf32>
    %62 = vector.extract_strided_slice %59 {offsets = [1, 0, 0, 0], sizes = [1, 2, 8, 32], strides = [1, 1, 1, 1]} : vector<4x2x8x32xf32> to vector<1x2x8x32xf32>
    %63 = vector.shape_cast %62 : vector<1x2x8x32xf32> to vector<2x8x32xf32>
    %64 = arith.addf %61, %63 : vector<2x8x32xf32>
    %65 = vector.extract_strided_slice %59 {offsets = [2, 0, 0, 0], sizes = [1, 2, 8, 32], strides = [1, 1, 1, 1]} : vector<4x2x8x32xf32> to vector<1x2x8x32xf32>
    %66 = vector.shape_cast %65 : vector<1x2x8x32xf32> to vector<2x8x32xf32>
    %67 = arith.addf %64, %66 : vector<2x8x32xf32>
    %68 = vector.extract_strided_slice %59 {offsets = [3, 0, 0, 0], sizes = [1, 2, 8, 32], strides = [1, 1, 1, 1]} : vector<4x2x8x32xf32> to vector<1x2x8x32xf32>
    %69 = vector.shape_cast %68 : vector<1x2x8x32xf32> to vector<2x8x32xf32>
    %70 = arith.addf %67, %69 : vector<2x8x32xf32>
    %71 = vector.shape_cast %70 : vector<2x8x32xf32> to vector<16x32xf32>
    %72 = vector.broadcast %1 : vector<1x32xf32> to vector<16x32xf32>
    %73 = arith.addf %71, %72 : vector<16x32xf32>
    %74 = arith.addf %8, %73 : vector<16x32xf32>
    %cst_33 = arith.constant dense<0.000000e+00> : vector<16xf32>
    %75 = vector.multi_reduction <add>, %74, %cst_33 [1] : vector<16x32xf32> to vector<16xf32>
    %76 = vector.shape_cast %75 : vector<16xf32> to vector<16x1xf32>
    %cst_34 = arith.constant 3.200000e+01 : f32
    %77 = vector.broadcast %cst_34 : f32 to vector<16x1xf32>
    %78 = arith.divf %76, %77 : vector<16x1xf32>
    %79 = vector.broadcast %78 : vector<16x1xf32> to vector<16x32xf32>
    %80 = arith.subf %74, %79 : vector<16x32xf32>
    %81 = arith.mulf %80, %80 : vector<16x32xf32>
    %cst_35 = arith.constant dense<0.000000e+00> : vector<16xf32>
    %82 = vector.multi_reduction <add>, %81, %cst_35 [1] : vector<16x32xf32> to vector<16xf32>
    %83 = vector.shape_cast %82 : vector<16xf32> to vector<16x1xf32>
    %cst_36 = arith.constant 0.0322580636 : f32
    %84 = vector.broadcast %cst_36 : f32 to vector<16x1xf32>
    %85 = arith.mulf %83, %84 : vector<16x1xf32>
    %86 = math.sqrt %85 : vector<16x1xf32>
    %cst_37 = arith.constant 9.99999997E-7 : f32
    %87 = vector.broadcast %cst_37 : f32 to vector<16x1xf32>
    %88 = arith.addf %86, %87 : vector<16x1xf32>
    %89 = tpu.reciprocal %88 {approx = true} : vector<16x1xf32> -> vector<16x1xf32>
    %90 = vector.broadcast %89 : vector<16x1xf32> to vector<16x32xf32>
    %91 = arith.mulf %80, %90 : vector<16x32xf32>
    %92 = vector.broadcast %5 : vector<1x32xf32> to vector<16x32xf32>
    %93 = arith.mulf %92, %91 : vector<16x32xf32>
    %94 = vector.broadcast %6 : vector<1x32xf32> to vector<16x32xf32>
    %95 = arith.addf %93, %94 : vector<16x32xf32>
    %c0_38 = arith.constant 0 : index
    %c0_39 = arith.constant 0 : index
    %96 = vector.load %arg6[%c0_38, %c0_39] : memref<32x64xf32, #tpu.memory_space<vmem>>, vector<32x64xf32>
    %cst_40 = arith.constant dense<0.000000e+00> : vector<16x64xf32>
    %97 = tpu.matmul %95, %96, %cst_40 {dimension_numbers = #tpu.dot_dimension_numbers<[1], [0], [0], [1], [0, 0, 1, 1], [], []>} : vector<16x32xf32>, vector<32x64xf32>, vector<16x64xf32> -> vector<16x64xf32>
    %98 = vector.broadcast %0 : vector<1x64xf32> to vector<16x64xf32>
    %99 = arith.addf %97, %98 : vector<16x64xf32>
    %cst_41 = arith.constant 0.000000e+00 : f32
    %100 = vector.broadcast %cst_41 : f32 to vector<16x64xf32>
    %101 = arith.maximumf %99, %100 : vector<16x64xf32>
    %c0_42 = arith.constant 0 : index
    %c0_43 = arith.constant 0 : index
    %102 = vector.load %arg7[%c0_42, %c0_43] : memref<64x32xf32, #tpu.memory_space<vmem>>, vector<64x32xf32>
    %cst_44 = arith.constant dense<0.000000e+00> : vector<16x32xf32>
    %103 = tpu.matmul %101, %102, %cst_44 {dimension_numbers = #tpu.dot_dimension_numbers<[1], [0], [0], [1], [0, 0, 1, 1], [], []>} : vector<16x64xf32>, vector<64x32xf32>, vector<16x32xf32> -> vector<16x32xf32>
    %104 = vector.broadcast %2 : vector<1x32xf32> to vector<16x32xf32>
    %105 = arith.addf %103, %104 : vector<16x32xf32>
    %106 = arith.addf %74, %105 : vector<16x32xf32>
    %107 = vector.shape_cast %106 : vector<16x32xf32> to vector<2x8x32xf32>
    %c0_45 = arith.constant 0 : index
    %c0_46 = arith.constant 0 : index
    %c0_47 = arith.constant 0 : index
    %108 = vector.load %arg9[%c0_45, %c0_46, %c0_47] : memref<2x8x32xf32, #tpu.memory_space<vmem>>, vector<2x8x32xf32>
    tpu.vector_store %arg9[%c0_45, %c0_46, %c0_47], %107 {strides = array<i32>} : memref<2x8x32xf32, #tpu.memory_space<vmem>>, vector<2x8x32xf32>,
    return
  }
  func.func @transform_0(%arg0: i32) -> (i32, i32, i32) {
    %c0_i32 = arith.constant 0 : i32
    %c0_i32_0 = arith.constant 0 : i32
    %c0_i32_1 = arith.constant 0 : i32
    %c0_i32_2 = arith.constant 0 : i32
    return %c0_i32, %c0_i32_0, %c0_i32_1 : i32, i32, i32
  }
  func.func @transform_1(%arg0: i32) -> (i32, i32, i32) {
    %c0_i32 = arith.constant 0 : i32
    %c0_i32_0 = arith.constant 0 : i32
    %c0_i32_1 = arith.constant 0 : i32
    %c0_i32_2 = arith.constant 0 : i32
    return %c0_i32, %c0_i32_0, %c0_i32_1 : i32, i32, i32
  }
  func.func @transform_2(%arg0: i32) -> (i32, i32, i32) {
    %c0_i32 = arith.constant 0 : i32
    %c0_i32_0 = arith.constant 0 : i32
    %c0_i32_1 = arith.constant 0 : i32
    %c0_i32_2 = arith.constant 0 : i32
    return %c0_i32, %c0_i32_0, %c0_i32_1 : i32, i32, i32
  }
  func.func @transform_3(%arg0: i32) -> (i32, i32, i32) {
    %c0_i32 = arith.constant 0 : i32
    %c0_i32_0 = arith.constant 0 : i32
    %c0_i32_1 = arith.constant 0 : i32
    %c0_i32_2 = arith.constant 0 : i32
    return %c0_i32, %c0_i32_0, %c0_i32_1 : i32, i32, i32
  }
  func.func @transform_4(%arg0: i32) -> (i32, i32, i32) {
    %c0_i32 = arith.constant 0 : i32
    %c0_i32_0 = arith.constant 0 : i32
    %c0_i32_1 = arith.constant 0 : i32
    %c0_i32_2 = arith.constant 0 : i32
    return %c0_i32, %c0_i32_0, %c0_i32_1 : i32, i32, i32
  }
  func.func @transform_5(%arg0: i32) -> (i32, i32) {
    %c0_i32 = arith.constant 0 : i32
    %c0_i32_0 = arith.constant 0 : i32
    %c0_i32_1 = arith.constant 0 : i32
    return %c0_i32, %c0_i32_0 : i32, i32
  }
  func.func @transform_6(%arg0: i32) -> (i32, i32) {
    %c0_i32 = arith.constant 0 : i32
    %c0_i32_0 = arith.constant 0 : i32
    %c0_i32_1 = arith.constant 0 : i32
    return %c0_i32, %c0_i32_0 : i32, i32
  }
  func.func @transform_7(%arg0: i32) -> (i32, i32) {
    %c0_i32 = arith.constant 0 : i32
    %c0_i32_0 = arith.constant 0 : i32
    %c0_i32_1 = arith.constant 0 : i32
    return %c0_i32, %c0_i32_0 : i32, i32
  }
  func.func @transform_8(%arg0: i32) -> (i32, i32, i32) {
    %c0_i32 = arith.constant 0 : i32
    %c0_i32_0 = arith.constant 0 : i32
    %c0_i32_1 = arith.constant 0 : i32
    %c0_i32_2 = arith.constant 0 : i32
    return %c0_i32, %c0_i32_0, %c0_i32_1 : i32, i32, i32
  }
}

</mosaic_0001>

<llo_original>
// kernel: tpu_custom_call.1
$region0: #{tpu_custom_call.1}
  #allocation0 [shape = 'u32[]', space=smem, size = 0x4, offset = 0x4, fixed_abs, tag = 'smem constant byte address 0x4 - core index']
  #allocation1 [shape = 'u32[144,128]{1,0:T(1,128)}', space=vmem, size = 0x12000, scoped, tag = 'internal scratch']
  %s0 = inlined_call_operand.vmem [shape: f32[2,8,32], index: 0, kind: input, shape index: {}]
  %s1 = inlined_call_operand.vmem [shape: f32[8,1,8], index: 1, kind: input, shape index: {}]
  %s2 = inlined_call_operand.vmem [shape: f32[8,32,24], index: 2, kind: input, shape index: {}]
  %s3 = inlined_call_operand.vmem [shape: f32[8,1,24], index: 3, kind: input, shape index: {}]
  %s4 = inlined_call_operand.vmem [shape: f32[8,8,32], index: 4, kind: input, shape index: {}]
  %s5 = inlined_call_operand.vmem [shape: f32[32,64], index: 5, kind: input, shape index: {}]
  %s6 = inlined_call_operand.vmem [shape: f32[64,32], index: 6, kind: input, shape index: {}]
  %s7 = inlined_call_operand.vmem [shape: f32[8,64], index: 7, kind: input, shape index: {}]
  %s8 = inlined_call_operand.hbm [shape: f32[2,8,32], index: 8, kind: output, shape index: {}]
  %s9 = sld [smem:[#allocation0]]
  $region42: #{tpu_custom_call.1} parent=0
    _
  %s11 = ssub.s32 1, %s9
  %s12 = scalar_select 0, %s11, %s9
  $region1: #{tpu_custom_call.1} parent=0
    #allocation2 [shape = 'u8[8192]{0}', space=vmem, size = 0x2000, scoped, tag = 'output window, operand 0, single buffered']
    #allocation3 [shape = 's32[1]{0}', space=sflag, size = 0x4, scoped, tag = 'scoped memory for tpu_custom_call.1']
    %13 = vsyncpa [#allocation3], 0
    // Predicated region
    $region2: #{tpu_custom_call.1} parent=1 // pred_check
      _
    $region3: #{tpu_custom_call.1} parent=1 // pred_check_branch
      %15 = sbr.rel (0) target = $region5
    $region4: #{tpu_custom_call.1} parent=1 // pred_region
      _
    $region5: #{tpu_custom_call.1} parent=1 // pred_fallthru
      _
    // Predicated region
    $region6: #{tpu_custom_call.1} parent=1 // pred_check
      _
    $region7: #{tpu_custom_call.1} parent=1 // pred_check_branch
      %17 = sbr.rel (0) target = $region9
    $region8: #{tpu_custom_call.1} parent=1 // pred_region
      _
    $region9: #{tpu_custom_call.1} parent=1 // pred_fallthru
      _
    // Predicated region
    $region10: #{tpu_custom_call.1} parent=1 // pred_check
      _
    $region11: #{tpu_custom_call.1} parent=1 // pred_check_branch
      %19 = sbr.rel (0) target = $region13
    $region12: #{tpu_custom_call.1} parent=1 // pred_region
      _
    $region13: #{tpu_custom_call.1} parent=1 // pred_fallthru
      _
    // Predicated region
    $region14: #{tpu_custom_call.1} parent=1 // pred_check
      _
    $region15: #{tpu_custom_call.1} parent=1 // pred_check_branch
      %21 = sbr.rel (0) target = $region17
    $region16: #{tpu_custom_call.1} parent=1 // pred_region
      _
    $region17: #{tpu_custom_call.1} parent=1 // pred_fallthru
      _
    // Predicated region
    $region18: #{tpu_custom_call.1} parent=1 // pred_check
      _
    $region19: #{tpu_custom_call.1} parent=1 // pred_check_branch
      %23 = sbr.rel (0) target = $region21
    $region20: #{tpu_custom_call.1} parent=1 // pred_region
      _
    $region21: #{tpu_custom_call.1} parent=1 // pred_fallthru
      _
    // Predicated region
    $region22: #{tpu_custom_call.1} parent=1 // pred_check
      _
    $region23: #{tpu_custom_call.1} parent=1 // pred_check_branch
      %25 = sbr.rel (0) target = $region25
    $region24: #{tpu_custom_call.1} parent=1 // pred_region
      _
    $region25: #{tpu_custom_call.1} parent=1 // pred_fallthru
      _
    // Predicated region
    $region26: #{tpu_custom_call.1} parent=1 // pred_check
      _
    $region27: #{tpu_custom_call.1} parent=1 // pred_check_branch
      %27 = sbr.rel (0) target = $region29
    $region28: #{tpu_custom_call.1} parent=1 // pred_region
      _
    $region29: #{tpu_custom_call.1} parent=1 // pred_fallthru
      _
    // Predicated region
    $region30: #{tpu_custom_call.1} parent=1 // pred_check
      _
    $region31: #{tpu_custom_call.1} parent=1 // pred_check_branch
      %29 = sbr.rel (0) target = $region33
    $region32: #{tpu_custom_call.1} parent=1 // pred_region
      _
    $region33: #{tpu_custom_call.1} parent=1 // pred_fallthru
      _
    %v30 = vld [vmem:[%s7] sm:$0x1]
    %v31 = vld [vmem:[%s7 + $0x1] sm:$0x1]
    %v32 = vld [vmem:[%s7 + $0x2] sm:$0x1]
    %v33 = vld [vmem:[%s7 + $0x3] sm:$0x1]
    %v34 = vld [vmem:[%s7 + $0x4] sm:$0x1]
    %v35 = vld [vmem:[%s7 + $0x5] sm:$0x1]
    %v36 = vld [vmem:[%s7 + $0x6] sm:$0x1]
    %v37 = vld [vmem:[%s0] sm:$0xff]
    %v38 = vld [vmem:[%s0 + $0x8] sm:$0xff]
    %vm39 = vcmask 261120
    %v40 = vsel %vm39, %v37, 0.0
    %41 = vadd.xlane.f32.xlu0 %v40
    %v42 = vpop.xlane.xlu0 %41
    %v43 = vsel %vm39, %v38, 0.0
    %44 = vadd.xlane.f32.xlu0 %v43
    %v45 = vpop.xlane.xlu0 %44
    %v46 = vrcp.pop 32.0
    %v47 = vmul.f32 %v42, %v46
    %v48 = vmul.f32 %v45, %v46
    %v49 = vsub.f32 %v37, %v47
    %v50 = vsub.f32 %v38, %v48
    %v51 = vmul.f32 %v49, %v49
    %v52 = vmul.f32 %v50, %v50
    %v53 = vsel %vm39, %v51, 0.0
    %54 = vadd.xlane.f32.xlu0 %v53
    %v55 = vpop.xlane.xlu0 %54
    %v56 = vsel %vm39, %v52, 0.0
    %57 = vadd.xlane.f32.xlu0 %v56
    %v58 = vpop.xlane.xlu0 %57
    %v59 = vmul.f32 %v55, 0.032258064
    %v60 = vmul.f32 %v58, 0.032258064
    %v61 = vrsqrt.pop %v59
    %v62 = vmul.f32 %v59, %v61
    %vm63 = vcmp.eq.f32.partialorder %v59, inf
    %v64 = vsel %vm63, %v59, %v62
    %vm65 = vcmp.eq.f32.partialorder %v59, 0.0
    %v66 = vand.u32 %v59, 2147483648
    %v67 = vsel %vm65, %v66, %v64
    %v68 = vrsqrt.pop %v60
    %v69 = vmul.f32 %v60, %v68
    %vm70 = vcmp.eq.f32.partialorder %v60, inf
    %v71 = vsel %vm70, %v60, %v69
    %vm72 = vcmp.eq.f32.partialorder %v60, 0.0
    %v73 = vand.u32 %v60, 2147483648
    %v74 = vsel %vm72, %v73, %v71
    %v75 = vadd.f32 %v67, 1e-06
    %v76 = vadd.f32 %v74, 1e-06
    %v77 = vrcp.pop %v75
    %v78 = vrcp.pop %v76
    %v79 = vmul.f32 %v49, %v77
    %v80 = vmul.f32 %v50, %v78
    %v81 = vlaneseq
    %v82 = vshrl.u32 %v81, 7
    %v83 = vsub.s32 0, %v82
    %v84 = vrot.slane %v33, %v83
    %v85 = vmul.f32 %v84, %v79
    %v86 = vmul.f32 %v84, %v80
    %v87 = vlaneseq
    %v88 = vshrl.u32 %v87, 7
    %v89 = vsub.s32 0, %v88
    %v90 = vrot.slane %v34, %v89
    %v91 = vadd.f32 %v85, %v90
    %v92 = vadd.f32 %v86, %v90
    %v93 = vld [vmem:[%s2] sm:$0xff]
    %v94 = vld [vmem:[%s2 + $0x8] sm:$0xff]
    %v95 = vld [vmem:[%s2 + $0x10] sm:$0xff]
    %v96 = vld [vmem:[%s2 + $0x18] sm:$0xff]
    %v97 = vld [vmem:[%s2 + $0x20] sm:$0xff]
    %v98 = vld [vmem:[%s2 + $0x28] sm:$0xff]
    %v99 = vld [vmem:[%s2 + $0x30] sm:$0xff]
    %v100 = vld [vmem:[%s2 + $0x38] sm:$0xff]
    %v101 = vld [vmem:[%s2 + $0x40] sm:$0xff]
    %v102 = vld [vmem:[%s2 + $0x48] sm:$0xff]
    %v103 = vld [vmem:[%s2 + $0x50] sm:$0xff]
    %v104 = vld [vmem:[%s2 + $0x58] sm:$0xff]
    %v105 = vld [vmem:[%s2 + $0x60] sm:$0xff]
    %v106 = vld [vmem:[%s2 + $0x68] sm:$0xff]
    %v107 = vld [vmem:[%s2 + $0x70] sm:$0xff]
    %v108 = vld [vmem:[%s2 + $0x78] sm:$0xff]
    %v109 = vld [vmem:[%s2 + $0x80] sm:$0xff]
    %v110 = vld [vmem:[%s2 + $0x88] sm:$0xff]
    %v111 = vld [vmem:[%s2 + $0x90] sm:$0xff]
    %v112 = vld [vmem:[%s2 + $0x98] sm:$0xff]
    %v113 = vld [vmem:[%s2 + $0xa0] sm:$0xff]
    %v114 = vld [vmem:[%s2 + $0xa8] sm:$0xff]
    %v115 = vld [vmem:[%s2 + $0xb0] sm:$0xff]
    %v116 = vld [vmem:[%s2 + $0xb8] sm:$0xff]
    %v117 = vld [vmem:[%s2 + $0xc0] sm:$0xff]
    %v118 = vld [vmem:[%s2 + $0xc8] sm:$0xff]
    %v119 = vld [vmem:[%s2 + $0xd0] sm:$0xff]
    %v120 = vld [vmem:[%s2 + $0xd8] sm:$0xff]
    %v121 = vld [vmem:[%s2 + $0xe0] sm:$0xff]
    %v122 = vld [vmem:[%s2 + $0xe8] sm:$0xff]
    %v123 = vld [vmem:[%s2 + $0xf0] sm:$0xff]
    %v124 = vld [vmem:[%s2 + $0xf8] sm:$0xff]
    %v125 = vld [vmem:[%s3] sm:$0x1]
    %v126 = vld [vmem:[%s3 + $0x1] sm:$0x1]
    %v127 = vld [vmem:[%s3 + $0x2] sm:$0x1]
    %v128 = vld [vmem:[%s3 + $0x3] sm:$0x1]
    %v129 = vld [vmem:[%s3 + $0x4] sm:$0x1]
    %v130 = vld [vmem:[%s3 + $0x5] sm:$0x1]
    %v131 = vld [vmem:[%s3 + $0x6] sm:$0x1]
    %v132 = vld [vmem:[%s3 + $0x7] sm:$0x1]
    %v141 = vlaneseq
    %v142 = vshrl.u32 %v141, 7
    %v143 = vsub.s32 0, %v142
    %v144 = vrot.slane %v125, %v143
    %v145 = vlaneseq
    %v146 = vshrl.u32 %v145, 7
    %v147 = vsub.s32 0, %v146
    %v148 = vrot.slane %v126, %v147
    %v149 = vlaneseq
    %v150 = vshrl.u32 %v149, 7
    %v151 = vsub.s32 0, %v150
    %v152 = vrot.slane %v127, %v151
    %v153 = vlaneseq
    %v154 = vshrl.u32 %v153, 7
    %v155 = vsub.s32 0, %v154
    %v156 = vrot.slane %v128, %v155
    %v157 = vlaneseq
    %v158 = vshrl.u32 %v157, 7
    %v159 = vsub.s32 0, %v158
    %v160 = vrot.slane %v129, %v159
    %v161 = vlaneseq
    %v162 = vshrl.u32 %v161, 7
    %v163 = vsub.s32 0, %v162
    %v164 = vrot.slane %v130, %v163
    %v165 = vlaneseq
    %v166 = vshrl.u32 %v165, 7
    %v167 = vsub.s32 0, %v166
    %v168 = vrot.slane %v131, %v167
    %v169 = vlaneseq
    %v170 = vshrl.u32 %v169, 7
    %v171 = vsub.s32 0, %v170
    %v172 = vrot.slane %v132, %v171
    %v182 = vsel %vm39, %v91, 0
    %184 = vmatprep.subr.mxu0 0.0
    %185 = vmatpush1.msra.mxu0 0.0
    %186 = vmatprep.subr.mxu0 0.0
    %187 = vmatpush1.msra.mxu0 0.0
    %188 = vmatprep.subr.mxu0 0.0
    %189 = vmatpush1.msra.mxu0 0.0
    %190 = vmatprep.subr.mxu0 0.0
    %191 = vmatpush1.msra.mxu0 0.0
    %192 = vmatprep.subr.mxu0 0.0
    %193 = vmatpush1.msra.mxu0 0.0
    %194 = vmatprep.subr.mxu0 0.0
    %195 = vmatpush1.msra.mxu0 0.0
    %196 = vmatprep.subr.mxu0 0.0
    %197 = vmatpush1.msra.mxu0 0.0
    %198 = vmatprep.subr.mxu0 0.0
    %199 = vmatpush1.msra.mxu0 0.0
    %200 = vmatprep.subr.mxu0 0.0
    %201 = vmatpush1.msra.mxu0 0.0
    %202 = vmatprep.subr.mxu0 0.0
    %203 = vmatpush1.msra.mxu0 0.0
    %204 = vmatprep.subr.mxu0 0.0
    %205 = vmatpush1.msra.mxu0 0.0
    %206 = vmatprep.subr.mxu0 0.0
    %207 = vmatpush1.msra.mxu0 0.0
    %208 = vmatprep.subr.mxu0 0.0
    %209 = vmatpush1.msra.mxu0 %v96
    %210 = vmatprep.subr.mxu0 0.0
    %211 = vmatpush1.msra.mxu0 %v95
    %212 = vmatprep.subr.mxu0 0.0
    %213 = vmatpush1.msra.mxu0 %v94
    %214 = vmatprep.subr.mxu0 0.0
    %215 = vmatpush1.msra.mxu0 %v93
    %216 = vmatprep.subr.mxu0 0.0
    %217 = vmatpush2.msra.mxu0 0.0
    %218 = vmatprep.subr.mxu0 0.0
    %219 = vmatpush2.msra.mxu0 0.0
    %220 = vmatprep.subr.mxu0 0.0
    %221 = vmatpush2.msra.mxu0 0.0
    %222 = vmatprep.subr.mxu0 0.0
    %223 = vmatpush2.msra.mxu0 0.0
    %224 = vmatprep.subr.mxu0 0.0
    %225 = vmatpush2.msra.mxu0 0.0
    %226 = vmatprep.subr.mxu0 0.0
    %227 = vmatpush2.msra.mxu0 0.0
    %228 = vmatprep.subr.mxu0 0.0
    %229 = vmatpush2.msra.mxu0 0.0
    %230 = vmatprep.subr.mxu0 0.0
    %231 = vmatpush2.msra.mxu0 0.0
    %232 = vmatprep.subr.mxu0 0.0
    %233 = vmatpush2.msra.mxu0 0.0
    %234 = vmatprep.subr.mxu0 0.0
    %235 = vmatpush2.msra.mxu0 0.0
    %236 = vmatprep.subr.mxu0 0.0
    %237 = vmatpush2.msra.mxu0 0.0
    %238 = vmatprep.subr.mxu0 0.0
    %239 = vmatpush2.msra.mxu0 0.0
    %240 = vmatprep.subr.mxu0 0.0
    %241 = vmatpush2.msra.mxu0 0.0
    %242 = vmatprep.subr.mxu0 0.0
    %243 = vmatpush2.msra.mxu0 0.0
    %244 = vmatprep.subr.mxu0 0.0
    %245 = vmatpush2.msra.mxu0 0.0
    %246 = vmatprep.subr.mxu0 0.0
    %247 = vmatpush2.msra.mxu0 0.0
    %248 = vmatprep.mubr.f32.mxu0 0.0
    %249 = vmatmul.mubr.f32.gmra.mxu0 %v182
    %v250 = vpop.f32.mrf.mxu0
    %v251 = vadd.f32 %v144, %v250
    %v252 = vpop.f32.mrf.mxu0
    %253 = vdwg.mxu0
    %v255 = vsel %vm39, %v92, 0
    %257 = vmatprep.subr.mxu0 0.0
    %258 = vmatpush1.msra.mxu0 0.0
    %259 = vmatprep.subr.mxu0 0.0
    %260 = vmatpush1.msra.mxu0 0.0
    %261 = vmatprep.subr.mxu0 0.0
    %262 = vmatpush1.msra.mxu0 0.0
    %263 = vmatprep.subr.mxu0 0.0
    %264 = vmatpush1.msra.mxu0 0.0
    %265 = vmatprep.subr.mxu0 0.0
    %266 = vmatpush1.msra.mxu0 0.0
    %267 = vmatprep.subr.mxu0 0.0
    %268 = vmatpush1.msra.mxu0 0.0
    %269 = vmatprep.subr.mxu0 0.0
    %270 = vmatpush1.msra.mxu0 0.0
    %271 = vmatprep.subr.mxu0 0.0
    %272 = vmatpush1.msra.mxu0 0.0
    %273 = vmatprep.subr.mxu0 0.0
    %274 = vmatpush1.msra.mxu0 0.0
    %275 = vmatprep.subr.mxu0 0.0
    %276 = vmatpush1.msra.mxu0 0.0
    %277 = vmatprep.subr.mxu0 0.0
    %278 = vmatpush1.msra.mxu0 0.0
    %279 = vmatprep.subr.mxu0 0.0
    %280 = vmatpush1.msra.mxu0 0.0
    %281 = vmatprep.subr.mxu0 0.0
    %282 = vmatpush1.msra.mxu0 %v100
    %283 = vmatprep.subr.mxu0 0.0
    %284 = vmatpush1.msra.mxu0 %v99
    %285 = vmatprep.subr.mxu0 0.0
    %286 = vmatpush1.msra.mxu0 %v98
    %287 = vmatprep.subr.mxu0 0.0
    %288 = vmatpush1.msra.mxu0 %v97
    %289 = vmatprep.subr.mxu0 0.0
    %290 = vmatpush2.msra.mxu0 0.0
    %291 = vmatprep.subr.mxu0 0.0
    %292 = vmatpush2.msra.mxu0 0.0
    %293 = vmatprep.subr.mxu0 0.0
    %294 = vmatpush2.msra.mxu0 0.0
    %295 = vmatprep.subr.mxu0 0.0
    %296 = vmatpush2.msra.mxu0 0.0
    %297 = vmatprep.subr.mxu0 0.0
    %298 = vmatpush2.msra.mxu0 0.0
    %299 = vmatprep.subr.mxu0 0.0
    %300 = vmatpush2.msra.mxu0 0.0
    %301 = vmatprep.subr.mxu0 0.0
    %302 = vmatpush2.msra.mxu0 0.0
    %303 = vmatprep.subr.mxu0 0.0
    %304 = vmatpush2.msra.mxu0 0.0
    %305 = vmatprep.subr.mxu0 0.0
    %306 = vmatpush2.msra.mxu0 0.0
    %307 = vmatprep.subr.mxu0 0.0
    %308 = vmatpush2.msra.mxu0 0.0
    %309 = vmatprep.subr.mxu0 0.0
    %310 = vmatpush2.msra.mxu0 0.0
    %311 = vmatprep.subr.mxu0 0.0
    %312 = vmatpush2.msra.mxu0 0.0
    %313 = vmatprep.subr.mxu0 0.0
    %314 = vmatpush2.msra.mxu0 0.0
    %315 = vmatprep.subr.mxu0 0.0
    %316 = vmatpush2.msra.mxu0 0.0
    %317 = vmatprep.subr.mxu0 0.0
    %318 = vmatpush2.msra.mxu0 0.0
    %319 = vmatprep.subr.mxu0 0.0
    %320 = vmatpush2.msra.mxu0 0.0
    %321 = vmatprep.mubr.f32.mxu0 0.0
    %322 = vmatmul.mubr.f32.gmra.mxu0 %v255
    %v323 = vpop.f32.mrf.mxu0
    %v324 = vadd.f32 %v148, %v323
    %v325 = vpop.f32.mrf.mxu0
    %326 = vdwg.mxu0
    %327 = vmatprep.subr.mxu0 0.0
    %328 = vmatpush1.msra.mxu0 0.0
    %329 = vmatprep.subr.mxu0 0.0
    %330 = vmatpush1.msra.mxu0 0.0
    %331 = vmatprep.subr.mxu0 0.0
    %332 = vmatpush1.msra.mxu0 0.0
    %333 = vmatprep.subr.mxu0 0.0
    %334 = vmatpush1.msra.mxu0 0.0
    %335 = vmatprep.subr.mxu0 0.0
    %336 = vmatpush1.msra.mxu0 0.0
    %337 = vmatprep.subr.mxu0 0.0
    %338 = vmatpush1.msra.mxu0 0.0
    %339 = vmatprep.subr.mxu0 0.0
    %340 = vmatpush1.msra.mxu0 0.0
    %341 = vmatprep.subr.mxu0 0.0
    %342 = vmatpush1.msra.mxu0 0.0
    %343 = vmatprep.subr.mxu0 0.0
    %344 = vmatpush1.msra.mxu0 0.0
    %345 = vmatprep.subr.mxu0 0.0
    %346 = vmatpush1.msra.mxu0 0.0
    %347 = vmatprep.subr.mxu0 0.0
    %348 = vmatpush1.msra.mxu0 0.0
    %349 = vmatprep.subr.mxu0 0.0
    %350 = vmatpush1.msra.mxu0 0.0
    %351 = vmatprep.subr.mxu0 0.0
    %352 = vmatpush1.msra.mxu0 %v104
    %353 = vmatprep.subr.mxu0 0.0
    %354 = vmatpush1.msra.mxu0 %v103
    %355 = vmatprep.subr.mxu0 0.0
    %356 = vmatpush1.msra.mxu0 %v102
    %357 = vmatprep.subr.mxu0 0.0
    %358 = vmatpush1.msra.mxu0 %v101
    %359 = vmatprep.subr.mxu0 0.0
    %360 = vmatpush2.msra.mxu0 0.0
    %361 = vmatprep.subr.mxu0 0.0
    %362 = vmatpush2.msra.mxu0 0.0
    %363 = vmatprep.subr.mxu0 0.0
    %364 = vmatpush2.msra.mxu0 0.0
    %365 = vmatprep.subr.mxu0 0.0
    %366 = vmatpush2.msra.mxu0 0.0
    %367 = vmatprep.subr.mxu0 0.0
    %368 = vmatpush2.msra.mxu0 0.0
    %369 = vmatprep.subr.mxu0 0.0
    %370 = vmatpush2.msra.mxu0 0.0
    %371 = vmatprep.subr.mxu0 0.0
    %372 = vmatpush2.msra.mxu0 0.0
    %373 = vmatprep.subr.mxu0 0.0
    %374 = vmatpush2.msra.mxu0 0.0
    %375 = vmatprep.subr.mxu0 0.0
    %376 = vmatpush2.msra.mxu0 0.0
    %377 = vmatprep.subr.mxu0 0.0
    %378 = vmatpush2.msra.mxu0 0.0
    %379 = vmatprep.subr.mxu0 0.0
    %380 = vmatpush2.msra.mxu0 0.0
    %381 = vmatprep.subr.mxu0 0.0
    %382 = vmatpush2.msra.mxu0 0.0
    %383 = vmatprep.subr.mxu0 0.0
    %384 = vmatpush2.msra.mxu0 0.0
    %385 = vmatprep.subr.mxu0 0.0
    %386 = vmatpush2.msra.mxu0 0.0
    %387 = vmatprep.subr.mxu0 0.0
    %388 = vmatpush2.msra.mxu0 0.0
    %389 = vmatprep.subr.mxu0 0.0
    %390 = vmatpush2.msra.mxu0 0.0
    %391 = vmatprep.mubr.f32.mxu0 0.0
    %392 = vmatmul.mubr.f32.gmra.mxu0 %v182
    %v393 = vpop.f32.mrf.mxu0
    %v394 = vadd.f32 %v152, %v393
    %v395 = vpop.f32.mrf.mxu0
    %396 = vdwg.mxu0
    %397 = vmatprep.subr.mxu0 0.0
    %398 = vmatpush1.msra.mxu0 0.0
    %399 = vmatprep.subr.mxu0 0.0
    %400 = vmatpush1.msra.mxu0 0.0
    %401 = vmatprep.subr.mxu0 0.0
    %402 = vmatpush1.msra.mxu0 0.0
    %403 = vmatprep.subr.mxu0 0.0
    %404 = vmatpush1.msra.mxu0 0.0
    %405 = vmatprep.subr.mxu0 0.0
    %406 = vmatpush1.msra.mxu0 0.0
    %407 = vmatprep.subr.mxu0 0.0
    %408 = vmatpush1.msra.mxu0 0.0
    %409 = vmatprep.subr.mxu0 0.0
    %410 = vmatpush1.msra.mxu0 0.0
    %411 = vmatprep.subr.mxu0 0.0
    %412 = vmatpush1.msra.mxu0 0.0
    %413 = vmatprep.subr.mxu0 0.0
    %414 = vmatpush1.msra.mxu0 0.0
    %415 = vmatprep.subr.mxu0 0.0
    %416 = vmatpush1.msra.mxu0 0.0
    %417 = vmatprep.subr.mxu0 0.0
    %418 = vmatpush1.msra.mxu0 0.0
    %419 = vmatprep.subr.mxu0 0.0
    %420 = vmatpush1.msra.mxu0 0.0
    %421 = vmatprep.subr.mxu0 0.0
    %422 = vmatpush1.msra.mxu0 %v108
    %423 = vmatprep.subr.mxu0 0.0
    %424 = vmatpush1.msra.mxu0 %v107
    %425 = vmatprep.subr.mxu0 0.0
    %426 = vmatpush1.msra.mxu0 %v106
    %427 = vmatprep.subr.mxu0 0.0
    %428 = vmatpush1.msra.mxu0 %v105
    %429 = vmatprep.subr.mxu0 0.0
    %430 = vmatpush2.msra.mxu0 0.0
    %431 = vmatprep.subr.mxu0 0.0
    %432 = vmatpush2.msra.mxu0 0.0
    %433 = vmatprep.subr.mxu0 0.0
    %434 = vmatpush2.msra.mxu0 0.0
    %435 = vmatprep.subr.mxu0 0.0
    %436 = vmatpush2.msra.mxu0 0.0
    %437 = vmatprep.subr.mxu0 0.0
    %438 = vmatpush2.msra.mxu0 0.0
    %439 = vmatprep.subr.mxu0 0.0
    %440 = vmatpush2.msra.mxu0 0.0
    %441 = vmatprep.subr.mxu0 0.0
    %442 = vmatpush2.msra.mxu0 0.0
    %443 = vmatprep.subr.mxu0 0.0
    %444 = vmatpush2.msra.mxu0 0.0
    %445 = vmatprep.subr.mxu0 0.0
    %446 = vmatpush2.msra.mxu0 0.0
    %447 = vmatprep.subr.mxu0 0.0
    %448 = vmatpush2.msra.mxu0 0.0
    %449 = vmatprep.subr.mxu0 0.0
    %450 = vmatpush2.msra.mxu0 0.0
    %451 = vmatprep.subr.mxu0 0.0
    %452 = vmatpush2.msra.mxu0 0.0
    %453 = vmatprep.subr.mxu0 0.0
    %454 = vmatpush2.msra.mxu0 0.0
    %455 = vmatprep.subr.mxu0 0.0
    %456 = vmatpush2.msra.mxu0 0.0
    %457 = vmatprep.subr.mxu0 0.0
    %458 = vmatpush2.msra.mxu0 0.0
    %459 = vmatprep.subr.mxu0 0.0
    %460 = vmatpush2.msra.mxu0 0.0
    %461 = vmatprep.mubr.f32.mxu0 0.0
    %462 = vmatmul.mubr.f32.gmra.mxu0 %v255
    %v463 = vpop.f32.mrf.mxu0
    %v464 = vadd.f32 %v156, %v463
    %v465 = vpop.f32.mrf.mxu0
    %466 = vdwg.mxu0
    %467 = vmatprep.subr.mxu0 0.0
    %468 = vmatpush1.msra.mxu0 0.0
    %469 = vmatprep.subr.mxu0 0.0
    %470 = vmatpush1.msra.mxu0 0.0
    %471 = vmatprep.subr.mxu0 0.0
    %472 = vmatpush1.msra.mxu0 0.0
    %473 = vmatprep.subr.mxu0 0.0
    %474 = vmatpush1.msra.mxu0 0.0
    %475 = vmatprep.subr.mxu0 0.0
    %476 = vmatpush1.msra.mxu0 0.0
    %477 = vmatprep.subr.mxu0 0.0
    %478 = vmatpush1.msra.mxu0 0.0
    %479 = vmatprep.subr.mxu0 0.0
    %480 = vmatpush1.msra.mxu0 0.0
    %481 = vmatprep.subr.mxu0 0.0
    %482 = vmatpush1.msra.mxu0 0.0
    %483 = vmatprep.subr.mxu0 0.0
    %484 = vmatpush1.msra.mxu0 0.0
    %485 = vmatprep.subr.mxu0 0.0
    %486 = vmatpush1.msra.mxu0 0.0
    %487 = vmatprep.subr.mxu0 0.0
    %488 = vmatpush1.msra.mxu0 0.0
    %489 = vmatprep.subr.mxu0 0.0
    %490 = vmatpush1.msra.mxu0 0.0
    %491 = vmatprep.subr.mxu0 0.0
    %492 = vmatpush1.msra.mxu0 %v112
    %493 = vmatprep.subr.mxu0 0.0
    %494 = vmatpush1.msra.mxu0 %v111
    %495 = vmatprep.subr.mxu0 0.0
    %496 = vmatpush1.msra.mxu0 %v110
    %497 = vmatprep.subr.mxu0 0.0
    %498 = vmatpush1.msra.mxu0 %v109
    %499 = vmatprep.subr.mxu0 0.0
    %500 = vmatpush2.msra.mxu0 0.0
    %501 = vmatprep.subr.mxu0 0.0
    %502 = vmatpush2.msra.mxu0 0.0
    %503 = vmatprep.subr.mxu0 0.0
    %504 = vmatpush2.msra.mxu0 0.0
    %505 = vmatprep.subr.mxu0 0.0
    %506 = vmatpush2.msra.mxu0 0.0
    %507 = vmatprep.subr.mxu0 0.0
    %508 = vmatpush2.msra.mxu0 0.0
    %509 = vmatprep.subr.mxu0 0.0
    %510 = vmatpush2.msra.mxu0 0.0
    %511 = vmatprep.subr.mxu0 0.0
    %512 = vmatpush2.msra.mxu0 0.0
    %513 = vmatprep.subr.mxu0 0.0
    %514 = vmatpush2.msra.mxu0 0.0
    %515 = vmatprep.subr.mxu0 0.0
    %516 = vmatpush2.msra.mxu0 0.0
    %517 = vmatprep.subr.mxu0 0.0
    %518 = vmatpush2.msra.mxu0 0.0
    %519 = vmatprep.subr.mxu0 0.0
    %520 = vmatpush2.msra.mxu0 0.0
    %521 = vmatprep.subr.mxu0 0.0
    %522 = vmatpush2.msra.mxu0 0.0
    %523 = vmatprep.subr.mxu0 0.0
    %524 = vmatpush2.msra.mxu0 0.0
    %525 = vmatprep.subr.mxu0 0.0
    %526 = vmatpush2.msra.mxu0 0.0
    %527 = vmatprep.subr.mxu0 0.0
    %528 = vmatpush2.msra.mxu0 0.0
    %529 = vmatprep.subr.mxu0 0.0
    %530 = vmatpush2.msra.mxu0 0.0
    %531 = vmatprep.mubr.f32.mxu0 0.0
    %532 = vmatmul.mubr.f32.gmra.mxu0 %v182
    %v533 = vpop.f32.mrf.mxu0
    %v534 = vadd.f32 %v160, %v533
    %v535 = vpop.f32.mrf.mxu0
    %536 = vdwg.mxu0
    %537 = vmatprep.subr.mxu0 0.0
    %538 = vmatpush1.msra.mxu0 0.0
    %539 = vmatprep.subr.mxu0 0.0
    %540 = vmatpush1.msra.mxu0 0.0
    %541 = vmatprep.subr.mxu0 0.0
    %542 = vmatpush1.msra.mxu0 0.0
    %543 = vmatprep.subr.mxu0 0.0
    %544 = vmatpush1.msra.mxu0 0.0
    %545 = vmatprep.subr.mxu0 0.0
    %546 = vmatpush1.msra.mxu0 0.0
    %547 = vmatprep.subr.mxu0 0.0
    %548 = vmatpush1.msra.mxu0 0.0
    %549 = vmatprep.subr.mxu0 0.0
    %550 = vmatpush1.msra.mxu0 0.0
    %551 = vmatprep.subr.mxu0 0.0
    %552 = vmatpush1.msra.mxu0 0.0
    %553 = vmatprep.subr.mxu0 0.0
    %554 = vmatpush1.msra.mxu0 0.0
    %555 = vmatprep.subr.mxu0 0.0
    %556 = vmatpush1.msra.mxu0 0.0
    %557 = vmatprep.subr.mxu0 0.0
    %558 = vmatpush1.msra.mxu0 0.0
    %559 = vmatprep.subr.mxu0 0.0
    %560 = vmatpush1.msra.mxu0 0.0
    %561 = vmatprep.subr.mxu0 0.0
    %562 = vmatpush1.msra.mxu0 %v116
    %563 = vmatprep.subr.mxu0 0.0
    %564 = vmatpush1.msra.mxu0 %v115
    %565 = vmatprep.subr.mxu0 0.0
    %566 = vmatpush1.msra.mxu0 %v114
    %567 = vmatprep.subr.mxu0 0.0
    %568 = vmatpush1.msra.mxu0 %v113
    %569 = vmatprep.subr.mxu0 0.0
    %570 = vmatpush2.msra.mxu0 0.0
    %571 = vmatprep.subr.mxu0 0.0
    %572 = vmatpush2.msra.mxu0 0.0
    %573 = vmatprep.subr.mxu0 0.0
    %574 = vmatpush2.msra.mxu0 0.0
    %575 = vmatprep.subr.mxu0 0.0
    %576 = vmatpush2.msra.mxu0 0.0
    %577 = vmatprep.subr.mxu0 0.0
    %578 = vmatpush2.msra.mxu0 0.0
    %579 = vmatprep.subr.mxu0 0.0
    %580 = vmatpush2.msra.mxu0 0.0
    %581 = vmatprep.subr.mxu0 0.0
    %582 = vmatpush2.msra.mxu0 0.0
    %583 = vmatprep.subr.mxu0 0.0
    %584 = vmatpush2.msra.mxu0 0.0
    %585 = vmatprep.subr.mxu0 0.0
    %586 = vmatpush2.msra.mxu0 0.0
    %587 = vmatprep.subr.mxu0 0.0
    %588 = vmatpush2.msra.mxu0 0.0
    %589 = vmatprep.subr.mxu0 0.0
    %590 = vmatpush2.msra.mxu0 0.0
    %591 = vmatprep.subr.mxu0 0.0
    %592 = vmatpush2.msra.mxu0 0.0
    %593 = vmatprep.subr.mxu0 0.0
    %594 = vmatpush2.msra.mxu0 0.0
    %595 = vmatprep.subr.mxu0 0.0
    %596 = vmatpush2.msra.mxu0 0.0
    %597 = vmatprep.subr.mxu0 0.0
    %598 = vmatpush2.msra.mxu0 0.0
    %599 = vmatprep.subr.mxu0 0.0
    %600 = vmatpush2.msra.mxu0 0.0
    %601 = vmatprep.mubr.f32.mxu0 0.0
    %602 = vmatmul.mubr.f32.gmra.mxu0 %v255
    %v603 = vpop.f32.mrf.mxu0
    %v604 = vadd.f32 %v164, %v603
    %v605 = vpop.f32.mrf.mxu0
    %606 = vdwg.mxu0
    %607 = vmatprep.subr.mxu0 0.0
    %608 = vmatpush1.msra.mxu0 0.0
    %609 = vmatprep.subr.mxu0 0.0
    %610 = vmatpush1.msra.mxu0 0.0
    %611 = vmatprep.subr.mxu0 0.0
    %612 = vmatpush1.msra.mxu0 0.0
    %613 = vmatprep.subr.mxu0 0.0
    %614 = vmatpush1.msra.mxu0 0.0
    %615 = vmatprep.subr.mxu0 0.0
    %616 = vmatpush1.msra.mxu0 0.0
    %617 = vmatprep.subr.mxu0 0.0
    %618 = vmatpush1.msra.mxu0 0.0
    %619 = vmatprep.subr.mxu0 0.0
    %620 = vmatpush1.msra.mxu0 0.0
    %621 = vmatprep.subr.mxu0 0.0
    %622 = vmatpush1.msra.mxu0 0.0
    %623 = vmatprep.subr.mxu0 0.0
    %624 = vmatpush1.msra.mxu0 0.0
    %625 = vmatprep.subr.mxu0 0.0
    %626 = vmatpush1.msra.mxu0 0.0
    %627 = vmatprep.subr.mxu0 0.0
    %628 = vmatpush1.msra.mxu0 0.0
    %629 = vmatprep.subr.mxu0 0.0
    %630 = vmatpush1.msra.mxu0 0.0
    %631 = vmatprep.subr.mxu0 0.0
    %632 = vmatpush1.msra.mxu0 %v120
    %633 = vmatprep.subr.mxu0 0.0
    %634 = vmatpush1.msra.mxu0 %v119
    %635 = vmatprep.subr.mxu0 0.0
    %636 = vmatpush1.msra.mxu0 %v118
    %637 = vmatprep.subr.mxu0 0.0
    %638 = vmatpush1.msra.mxu0 %v117
    %639 = vmatprep.subr.mxu0 0.0
    %640 = vmatpush2.msra.mxu0 0.0
    %641 = vmatprep.subr.mxu0 0.0
    %642 = vmatpush2.msra.mxu0 0.0
    %643 = vmatprep.subr.mxu0 0.0
    %644 = vmatpush2.msra.mxu0 0.0
    %645 = vmatprep.subr.mxu0 0.0
    %646 = vmatpush2.msra.mxu0 0.0
    %647 = vmatprep.subr.mxu0 0.0
    %648 = vmatpush2.msra.mxu0 0.0
    %649 = vmatprep.subr.mxu0 0.0
    %650 = vmatpush2.msra.mxu0 0.0
    %651 = vmatprep.subr.mxu0 0.0
    %652 = vmatpush2.msra.mxu0 0.0
    %653 = vmatprep.subr.mxu0 0.0
    %654 = vmatpush2.msra.mxu0 0.0
    %655 = vmatprep.subr.mxu0 0.0
    %656 = vmatpush2.msra.mxu0 0.0
    %657 = vmatprep.subr.mxu0 0.0
    %658 = vmatpush2.msra.mxu0 0.0
    %659 = vmatprep.subr.mxu0 0.0
    %660 = vmatpush2.msra.mxu0 0.0
    %661 = vmatprep.subr.mxu0 0.0
    %662 = vmatpush2.msra.mxu0 0.0
    %663 = vmatprep.subr.mxu0 0.0
    %664 = vmatpush2.msra.mxu0 0.0
    %665 = vmatprep.subr.mxu0 0.0
    %666 = vmatpush2.msra.mxu0 0.0
    %667 = vmatprep.subr.mxu0 0.0
    %668 = vmatpush2.msra.mxu0 0.0
    %669 = vmatprep.subr.mxu0 0.0
    %670 = vmatpush2.msra.mxu0 0.0
    %671 = vmatprep.mubr.f32.mxu0 0.0
    %672 = vmatmul.mubr.f32.gmra.mxu0 %v182
    %v673 = vpop.f32.mrf.mxu0
    %v674 = vadd.f32 %v168, %v673
    %v675 = vpop.f32.mrf.mxu0
    %676 = vdwg.mxu0
    %677 = vmatprep.subr.mxu0 0.0
    %678 = vmatpush1.msra.mxu0 0.0
    %679 = vmatprep.subr.mxu0 0.0
    %680 = vmatpush1.msra.mxu0 0.0
    %681 = vmatprep.subr.mxu0 0.0
    %682 = vmatpush1.msra.mxu0 0.0
    %683 = vmatprep.subr.mxu0 0.0
    %684 = vmatpush1.msra.mxu0 0.0
    %685 = vmatprep.subr.mxu0 0.0
    %686 = vmatpush1.msra.mxu0 0.0
    %687 = vmatprep.subr.mxu0 0.0
    %688 = vmatpush1.msra.mxu0 0.0
    %689 = vmatprep.subr.mxu0 0.0
    %690 = vmatpush1.msra.mxu0 0.0
    %691 = vmatprep.subr.mxu0 0.0
    %692 = vmatpush1.msra.mxu0 0.0
    %693 = vmatprep.subr.mxu0 0.0
    %694 = vmatpush1.msra.mxu0 0.0
    %695 = vmatprep.subr.mxu0 0.0
    %696 = vmatpush1.msra.mxu0 0.0
    %697 = vmatprep.subr.mxu0 0.0
    %698 = vmatpush1.msra.mxu0 0.0
    %699 = vmatprep.subr.mxu0 0.0
    %700 = vmatpush1.msra.mxu0 0.0
    %701 = vmatprep.subr.mxu0 0.0
    %702 = vmatpush1.msra.mxu0 %v124
    %703 = vmatprep.subr.mxu0 0.0
    %704 = vmatpush1.msra.mxu0 %v123
    %705 = vmatprep.subr.mxu0 0.0
    %706 = vmatpush1.msra.mxu0 %v122
    %707 = vmatprep.subr.mxu0 0.0
    %708 = vmatpush1.msra.mxu0 %v121
    %709 = vmatprep.subr.mxu0 0.0
    %710 = vmatpush2.msra.mxu0 0.0
    %711 = vmatprep.subr.mxu0 0.0
    %712 = vmatpush2.msra.mxu0 0.0
    %713 = vmatprep.subr.mxu0 0.0
    %714 = vmatpush2.msra.mxu0 0.0
    %715 = vmatprep.subr.mxu0 0.0
    %716 = vmatpush2.msra.mxu0 0.0
    %717 = vmatprep.subr.mxu0 0.0
    %718 = vmatpush2.msra.mxu0 0.0
    %719 = vmatprep.subr.mxu0 0.0
    %720 = vmatpush2.msra.mxu0 0.0
    %721 = vmatprep.subr.mxu0 0.0
    %722 = vmatpush2.msra.mxu0 0.0
    %723 = vmatprep.subr.mxu0 0.0
    %724 = vmatpush2.msra.mxu0 0.0
    %725 = vmatprep.subr.mxu0 0.0
    %726 = vmatpush2.msra.mxu0 0.0
    %727 = vmatprep.subr.mxu0 0.0
    %728 = vmatpush2.msra.mxu0 0.0
    %729 = vmatprep.subr.mxu0 0.0
    %730 = vmatpush2.msra.mxu0 0.0
    %731 = vmatprep.subr.mxu0 0.0
    %732 = vmatpush2.msra.mxu0 0.0
    %733 = vmatprep.subr.mxu0 0.0
    %734 = vmatpush2.msra.mxu0 0.0
    %735 = vmatprep.subr.mxu0 0.0
    %736 = vmatpush2.msra.mxu0 0.0
    %737 = vmatprep.subr.mxu0 0.0
    %738 = vmatpush2.msra.mxu0 0.0
    %739 = vmatprep.subr.mxu0 0.0
    %740 = vmatpush2.msra.mxu0 0.0
    %741 = vmatprep.mubr.f32.mxu0 0.0
    %742 = vmatmul.mubr.f32.gmra.mxu0 %v255
    %v743 = vpop.f32.mrf.mxu0
    %v744 = vadd.f32 %v172, %v743
    %v745 = vpop.f32.mrf.mxu0
    %746 = vdwg.mxu0
    %748 = vrot.lane.b32.xlu0 %v251, 120
    %v749 = vpop.permute.xlu0 %748
    %vm750 = vcmask 64512
    %v751 = vsel %vm750, %v251, 0
    %v753 = vsel %vm750, %v749, 0
    %755 = vmatprep.subr.mxu0 0.0
    %756 = vmatpush1.xpose.msra.mxu0 0.0
    %757 = vmatprep.subr.mxu0 0.0
    %758 = vmatpush1.xpose.msra.mxu0 0.0
    %759 = vmatprep.subr.mxu0 0.0
    %760 = vmatpush1.xpose.msra.mxu0 0.0
    %761 = vmatprep.subr.mxu0 0.0
    %762 = vmatpush1.xpose.msra.mxu0 0.0
    %763 = vmatprep.subr.mxu0 0.0
    %764 = vmatpush1.xpose.msra.mxu0 0.0
    %765 = vmatprep.subr.mxu0 0.0
    %766 = vmatpush1.xpose.msra.mxu0 0.0
    %767 = vmatprep.subr.mxu0 0.0
    %768 = vmatpush1.xpose.msra.mxu0 0.0
    %769 = vmatprep.subr.mxu0 0.0
    %770 = vmatpush1.xpose.msra.mxu0 0.0
    %771 = vmatprep.subr.mxu0 0.0
    %772 = vmatpush1.xpose.msra.mxu0 0.0
    %773 = vmatprep.subr.mxu0 0.0
    %774 = vmatpush1.xpose.msra.mxu0 0.0
    %775 = vmatprep.subr.mxu0 0.0
    %776 = vmatpush1.xpose.msra.mxu0 0.0
    %777 = vmatprep.subr.mxu0 0.0
    %778 = vmatpush1.xpose.msra.mxu0 0.0
    %779 = vmatprep.subr.mxu0 0.0
    %780 = vmatpush1.xpose.msra.mxu0 0.0
    %781 = vmatprep.subr.mxu0 0.0
    %782 = vmatpush1.xpose.msra.mxu0 0.0
    %783 = vmatprep.subr.mxu0 0.0
    %784 = vmatpush1.xpose.msra.mxu0 0.0
    %785 = vmatprep.subr.mxu0 0.0
    %786 = vmatpush1.xpose.msra.mxu0 %v753
    %787 = vmatprep.subr.mxu0 0.0
    %788 = vmatpush2.xpose.msra.mxu0 0.0
    %789 = vmatprep.subr.mxu0 0.0
    %790 = vmatpush2.xpose.msra.mxu0 0.0
    %791 = vmatprep.subr.mxu0 0.0
    %792 = vmatpush2.xpose.msra.mxu0 0.0
    %793 = vmatprep.subr.mxu0 0.0
    %794 = vmatpush2.xpose.msra.mxu0 0.0
    %795 = vmatprep.subr.mxu0 0.0
    %796 = vmatpush2.xpose.msra.mxu0 0.0
    %797 = vmatprep.subr.mxu0 0.0
    %798 = vmatpush2.xpose.msra.mxu0 0.0
    %799 = vmatprep.subr.mxu0 0.0
    %800 = vmatpush2.xpose.msra.mxu0 0.0
    %801 = vmatprep.subr.mxu0 0.0
    %802 = vmatpush2.xpose.msra.mxu0 0.0
    %803 = vmatprep.subr.mxu0 0.0
    %804 = vmatpush2.xpose.msra.mxu0 0.0
    %805 = vmatprep.subr.mxu0 0.0
    %806 = vmatpush2.xpose.msra.mxu0 0.0
    %807 = vmatprep.subr.mxu0 0.0
    %808 = vmatpush2.xpose.msra.mxu0 0.0
    %809 = vmatprep.subr.mxu0 0.0
    %810 = vmatpush2.xpose.msra.mxu0 0.0
    %811 = vmatprep.subr.mxu0 0.0
    %812 = vmatpush2.xpose.msra.mxu0 0.0
    %813 = vmatprep.subr.mxu0 0.0
    %814 = vmatpush2.xpose.msra.mxu0 0.0
    %815 = vmatprep.subr.mxu0 0.0
    %816 = vmatpush2.xpose.msra.mxu0 0.0
    %817 = vmatprep.subr.mxu0 0.0
    %818 = vmatpush2.xpose.msra.mxu0 0.0
    %819 = vmatprep.mubr.f32.mxu0 0.0
    %820 = vmatmul.mubr.f32.gmra.mxu0 %v751
    %v821 = vpop.f32.mrf.mxu0
    %v822 = vadd.f32 0.0, %v821
    %v823 = vpop.f32.mrf.mxu0
    %824 = vdwg.mxu0
    %826 = vrot.lane.b32.xlu0 %v324, 120
    %v827 = vpop.permute.xlu0 %826
    %v828 = vsel %vm750, %v324, 0
    %v830 = vsel %vm750, %v827, 0
    %832 = vmatprep.subr.mxu0 0.0
    %833 = vmatpush1.xpose.msra.mxu0 0.0
    %834 = vmatprep.subr.mxu0 0.0
    %835 = vmatpush1.xpose.msra.mxu0 0.0
    %836 = vmatprep.subr.mxu0 0.0
    %837 = vmatpush1.xpose.msra.mxu0 0.0
    %838 = vmatprep.subr.mxu0 0.0
    %839 = vmatpush1.xpose.msra.mxu0 0.0
    %840 = vmatprep.subr.mxu0 0.0
    %841 = vmatpush1.xpose.msra.mxu0 0.0
    %842 = vmatprep.subr.mxu0 0.0
    %843 = vmatpush1.xpose.msra.mxu0 0.0
    %844 = vmatprep.subr.mxu0 0.0
    %845 = vmatpush1.xpose.msra.mxu0 0.0
    %846 = vmatprep.subr.mxu0 0.0
    %847 = vmatpush1.xpose.msra.mxu0 0.0
    %848 = vmatprep.subr.mxu0 0.0
    %849 = vmatpush1.xpose.msra.mxu0 0.0
    %850 = vmatprep.subr.mxu0 0.0
    %851 = vmatpush1.xpose.msra.mxu0 0.0
    %852 = vmatprep.subr.mxu0 0.0
    %853 = vmatpush1.xpose.msra.mxu0 0.0
    %854 = vmatprep.subr.mxu0 0.0
    %855 = vmatpush1.xpose.msra.mxu0 0.0
    %856 = vmatprep.subr.mxu0 0.0
    %857 = vmatpush1.xpose.msra.mxu0 0.0
    %858 = vmatprep.subr.mxu0 0.0
    %859 = vmatpush1.xpose.msra.mxu0 0.0
    %860 = vmatprep.subr.mxu0 0.0
    %861 = vmatpush1.xpose.msra.mxu0 0.0
    %862 = vmatprep.subr.mxu0 0.0
    %863 = vmatpush1.xpose.msra.mxu0 %v830
    %864 = vmatprep.subr.mxu0 0.0
    %865 = vmatpush2.xpose.msra.mxu0 0.0
    %866 = vmatprep.subr.mxu0 0.0
    %867 = vmatpush2.xpose.msra.mxu0 0.0
    %868 = vmatprep.subr.mxu0 0.0
    %869 = vmatpush2.xpose.msra.mxu0 0.0
    %870 = vmatprep.subr.mxu0 0.0
    %871 = vmatpush2.xpose.msra.mxu0 0.0
    %872 = vmatprep.subr.mxu0 0.0
    %873 = vmatpush2.xpose.msra.mxu0 0.0
    %874 = vmatprep.subr.mxu0 0.0
    %875 = vmatpush2.xpose.msra.mxu0 0.0
    %876 = vmatprep.subr.mxu0 0.0
    %877 = vmatpush2.xpose.msra.mxu0 0.0
    %878 = vmatprep.subr.mxu0 0.0
    %879 = vmatpush2.xpose.msra.mxu0 0.0
    %880 = vmatprep.subr.mxu0 0.0
    %881 = vmatpush2.xpose.msra.mxu0 0.0
    %882 = vmatprep.subr.mxu0 0.0
    %883 = vmatpush2.xpose.msra.mxu0 0.0
    %884 = vmatprep.subr.mxu0 0.0
    %885 = vmatpush2.xpose.msra.mxu0 0.0
    %886 = vmatprep.subr.mxu0 0.0
    %887 = vmatpush2.xpose.msra.mxu0 0.0
    %888 = vmatprep.subr.mxu0 0.0
    %889 = vmatpush2.xpose.msra.mxu0 0.0
    %890 = vmatprep.subr.mxu0 0.0
    %891 = vmatpush2.xpose.msra.mxu0 0.0
    %892 = vmatprep.subr.mxu0 0.0
    %893 = vmatpush2.xpose.msra.mxu0 0.0
    %894 = vmatprep.subr.mxu0 0.0
    %895 = vmatpush2.xpose.msra.mxu0 0.0
    %896 = vmatprep.mubr.f32.mxu0 0.0
    %897 = vmatmul.mubr.f32.gmra.mxu0 %v828
    %v898 = vpop.f32.mrf.mxu0
    %v899 = vadd.f32 0.0, %v898
    %v900 = vpop.f32.mrf.mxu0
    %901 = vdwg.mxu0
    %903 = vrot.lane.b32.xlu0 %v394, 120
    %v904 = vpop.permute.xlu0 %903
    %v905 = vsel %vm750, %v394, 0
    %v907 = vsel %vm750, %v904, 0
    %909 = vmatprep.subr.mxu0 0.0
    %910 = vmatpush1.xpose.msra.mxu0 0.0
    %911 = vmatprep.subr.mxu0 0.0
    %912 = vmatpush1.xpose.msra.mxu0 0.0
    %913 = vmatprep.subr.mxu0 0.0
    %914 = vmatpush1.xpose.msra.mxu0 0.0
    %915 = vmatprep.subr.mxu0 0.0
    %916 = vmatpush1.xpose.msra.mxu0 0.0
    %917 = vmatprep.subr.mxu0 0.0
    %918 = vmatpush1.xpose.msra.mxu0 0.0
    %919 = vmatprep.subr.mxu0 0.0
    %920 = vmatpush1.xpose.msra.mxu0 0.0
    %921 = vmatprep.subr.mxu0 0.0
    %922 = vmatpush1.xpose.msra.mxu0 0.0
    %923 = vmatprep.subr.mxu0 0.0
    %924 = vmatpush1.xpose.msra.mxu0 0.0
    %925 = vmatprep.subr.mxu0 0.0
    %926 = vmatpush1.xpose.msra.mxu0 0.0
    %927 = vmatprep.subr.mxu0 0.0
    %928 = vmatpush1.xpose.msra.mxu0 0.0
    %929 = vmatprep.subr.mxu0 0.0
    %930 = vmatpush1.xpose.msra.mxu0 0.0
    %931 = vmatprep.subr.mxu0 0.0
    %932 = vmatpush1.xpose.msra.mxu0 0.0
    %933 = vmatprep.subr.mxu0 0.0
    %934 = vmatpush1.xpose.msra.mxu0 0.0
    %935 = vmatprep.subr.mxu0 0.0
    %936 = vmatpush1.xpose.msra.mxu0 0.0
    %937 = vmatprep.subr.mxu0 0.0
    %938 = vmatpush1.xpose.msra.mxu0 0.0
    %939 = vmatprep.subr.mxu0 0.0
    %940 = vmatpush1.xpose.msra.mxu0 %v907
    %941 = vmatprep.subr.mxu0 0.0
    %942 = vmatpush2.xpose.msra.mxu0 0.0
    %943 = vmatprep.subr.mxu0 0.0
    %944 = vmatpush2.xpose.msra.mxu0 0.0
    %945 = vmatprep.subr.mxu0 0.0
    %946 = vmatpush2.xpose.msra.mxu0 0.0
    %947 = vmatprep.subr.mxu0 0.0
    %948 = vmatpush2.xpose.msra.mxu0 0.0
    %949 = vmatprep.subr.mxu0 0.0
    %950 = vmatpush2.xpose.msra.mxu0 0.0
    %951 = vmatprep.subr.mxu0 0.0
    %952 = vmatpush2.xpose.msra.mxu0 0.0
    %953 = vmatprep.subr.mxu0 0.0
    %954 = vmatpush2.xpose.msra.mxu0 0.0
    %955 = vmatprep.subr.mxu0 0.0
    %956 = vmatpush2.xpose.msra.mxu0 0.0
    %957 = vmatprep.subr.mxu0 0.0
    %958 = vmatpush2.xpose.msra.mxu0 0.0
    %959 = vmatprep.subr.mxu0 0.0
    %960 = vmatpush2.xpose.msra.mxu0 0.0
    %961 = vmatprep.subr.mxu0 0.0
    %962 = vmatpush2.xpose.msra.mxu0 0.0
    %963 = vmatprep.subr.mxu0 0.0
    %964 = vmatpush2.xpose.msra.mxu0 0.0
    %965 = vmatprep.subr.mxu0 0.0
    %966 = vmatpush2.xpose.msra.mxu0 0.0
    %967 = vmatprep.subr.mxu0 0.0
    %968 = vmatpush2.xpose.msra.mxu0 0.0
    %969 = vmatprep.subr.mxu0 0.0
    %970 = vmatpush2.xpose.msra.mxu0 0.0
    %971 = vmatprep.subr.mxu0 0.0
    %972 = vmatpush2.xpose.msra.mxu0 0.0
    %973 = vmatprep.mubr.f32.mxu0 0.0
    %974 = vmatmul.mubr.f32.gmra.mxu0 %v905
    %v975 = vpop.f32.mrf.mxu0
    %v976 = vadd.f32 0.0, %v975
    %v977 = vpop.f32.mrf.mxu0
    %978 = vdwg.mxu0
    %980 = vrot.lane.b32.xlu0 %v464, 120
    %v981 = vpop.permute.xlu0 %980
    %v982 = vsel %vm750, %v464, 0
    %v984 = vsel %vm750, %v981, 0
    %986 = vmatprep.subr.mxu0 0.0
    %987 = vmatpush1.xpose.msra.mxu0 0.0
    %988 = vmatprep.subr.mxu0 0.0
    %989 = vmatpush1.xpose.msra.mxu0 0.0
    %990 = vmatprep.subr.mxu0 0.0
    %991 = vmatpush1.xpose.msra.mxu0 0.0
    %992 = vmatprep.subr.mxu0 0.0
    %993 = vmatpush1.xpose.msra.mxu0 0.0
    %994 = vmatprep.subr.mxu0 0.0
    %995 = vmatpush1.xpose.msra.mxu0 0.0
    %996 = vmatprep.subr.mxu0 0.0
    %997 = vmatpush1.xpose.msra.mxu0 0.0
    %998 = vmatprep.subr.mxu0 0.0
    %999 = vmatpush1.xpose.msra.mxu0 0.0
    %1000 = vmatprep.subr.mxu0 0.0
    %1001 = vmatpush1.xpose.msra.mxu0 0.0
    %1002 = vmatprep.subr.mxu0 0.0
    %1003 = vmatpush1.xpose.msra.mxu0 0.0
    %1004 = vmatprep.subr.mxu0 0.0
    %1005 = vmatpush1.xpose.msra.mxu0 0.0
    %1006 = vmatprep.subr.mxu0 0.0
    %1007 = vmatpush1.xpose.msra.mxu0 0.0
    %1008 = vmatprep.subr.mxu0 0.0
    %1009 = vmatpush1.xpose.msra.mxu0 0.0
    %1010 = vmatprep.subr.mxu0 0.0
    %1011 = vmatpush1.xpose.msra.mxu0 0.0
    %1012 = vmatprep.subr.mxu0 0.0
    %1013 = vmatpush1.xpose.msra.mxu0 0.0
    %1014 = vmatprep.subr.mxu0 0.0
    %1015 = vmatpush1.xpose.msra.mxu0 0.0
    %1016 = vmatprep.subr.mxu0 0.0
    %1017 = vmatpush1.xpose.msra.mxu0 %v984
    %1018 = vmatprep.subr.mxu0 0.0
    %1019 = vmatpush2.xpose.msra.mxu0 0.0
    %1020 = vmatprep.subr.mxu0 0.0
    %1021 = vmatpush2.xpose.msra.mxu0 0.0
    %1022 = vmatprep.subr.mxu0 0.0
    %1023 = vmatpush2.xpose.msra.mxu0 0.0
    %1024 = vmatprep.subr.mxu0 0.0
    %1025 = vmatpush2.xpose.msra.mxu0 0.0
    %1026 = vmatprep.subr.mxu0 0.0
    %1027 = vmatpush2.xpose.msra.mxu0 0.0
    %1028 = vmatprep.subr.mxu0 0.0
    %1029 = vmatpush2.xpose.msra.mxu0 0.0
    %1030 = vmatprep.subr.mxu0 0.0
    %1031 = vmatpush2.xpose.msra.mxu0 0.0
    %1032 = vmatprep.subr.mxu0 0.0
    %1033 = vmatpush2.xpose.msra.mxu0 0.0
    %1034 = vmatprep.subr.mxu0 0.0
    %1035 = vmatpush2.xpose.msra.mxu0 0.0
    %1036 = vmatprep.subr.mxu0 0.0
    %1037 = vmatpush2.xpose.msra.mxu0 0.0
    %1038 = vmatprep.subr.mxu0 0.0
    %1039 = vmatpush2.xpose.msra.mxu0 0.0
    %1040 = vmatprep.subr.mxu0 0.0
    %1041 = vmatpush2.xpose.msra.mxu0 0.0
    %1042 = vmatprep.subr.mxu0 0.0
    %1043 = vmatpush2.xpose.msra.mxu0 0.0
    %1044 = vmatprep.subr.mxu0 0.0
    %1045 = vmatpush2.xpose.msra.mxu0 0.0
    %1046 = vmatprep.subr.mxu0 0.0
    %1047 = vmatpush2.xpose.msra.mxu0 0.0
    %1048 = vmatprep.subr.mxu0 0.0
    %1049 = vmatpush2.xpose.msra.mxu0 0.0
    %1050 = vmatprep.mubr.f32.mxu0 0.0
    %1051 = vmatmul.mubr.f32.gmra.mxu0 %v982
    %v1052 = vpop.f32.mrf.mxu0
    %v1053 = vadd.f32 0.0, %v1052
    %v1054 = vpop.f32.mrf.mxu0
    %1055 = vdwg.mxu0
    %1057 = vrot.lane.b32.xlu0 %v534, 120
    %v1058 = vpop.permute.xlu0 %1057
    %v1059 = vsel %vm750, %v534, 0
    %v1061 = vsel %vm750, %v1058, 0
    %1063 = vmatprep.subr.mxu0 0.0
    %1064 = vmatpush1.xpose.msra.mxu0 0.0
    %1065 = vmatprep.subr.mxu0 0.0
    %1066 = vmatpush1.xpose.msra.mxu0 0.0
    %1067 = vmatprep.subr.mxu0 0.0
    %1068 = vmatpush1.xpose.msra.mxu0 0.0
    %1069 = vmatprep.subr.mxu0 0.0
    %1070 = vmatpush1.xpose.msra.mxu0 0.0
    %1071 = vmatprep.subr.mxu0 0.0
    %1072 = vmatpush1.xpose.msra.mxu0 0.0
    %1073 = vmatprep.subr.mxu0 0.0
    %1074 = vmatpush1.xpose.msra.mxu0 0.0
    %1075 = vmatprep.subr.mxu0 0.0
    %1076 = vmatpush1.xpose.msra.mxu0 0.0
    %1077 = vmatprep.subr.mxu0 0.0
    %1078 = vmatpush1.xpose.msra.mxu0 0.0
    %1079 = vmatprep.subr.mxu0 0.0
    %1080 = vmatpush1.xpose.msra.mxu0 0.0
    %1081 = vmatprep.subr.mxu0 0.0
    %1082 = vmatpush1.xpose.msra.mxu0 0.0
    %1083 = vmatprep.subr.mxu0 0.0
    %1084 = vmatpush1.xpose.msra.mxu0 0.0
    %1085 = vmatprep.subr.mxu0 0.0
    %1086 = vmatpush1.xpose.msra.mxu0 0.0
    %1087 = vmatprep.subr.mxu0 0.0
    %1088 = vmatpush1.xpose.msra.mxu0 0.0
    %1089 = vmatprep.subr.mxu0 0.0
    %1090 = vmatpush1.xpose.msra.mxu0 0.0
    %1091 = vmatprep.subr.mxu0 0.0
    %1092 = vmatpush1.xpose.msra.mxu0 0.0
    %1093 = vmatprep.subr.mxu0 0.0
    %1094 = vmatpush1.xpose.msra.mxu0 %v1061
    %1095 = vmatprep.subr.mxu0 0.0
    %1096 = vmatpush2.xpose.msra.mxu0 0.0
    %1097 = vmatprep.subr.mxu0 0.0
    %1098 = vmatpush2.xpose.msra.mxu0 0.0
    %1099 = vmatprep.subr.mxu0 0.0
    %1100 = vmatpush2.xpose.msra.mxu0 0.0
    %1101 = vmatprep.subr.mxu0 0.0
    %1102 = vmatpush2.xpose.msra.mxu0 0.0
    %1103 = vmatprep.subr.mxu0 0.0
    %1104 = vmatpush2.xpose.msra.mxu0 0.0
    %1105 = vmatprep.subr.mxu0 0.0
    %1106 = vmatpush2.xpose.msra.mxu0 0.0
    %1107 = vmatprep.subr.mxu0 0.0
    %1108 = vmatpush2.xpose.msra.mxu0 0.0
    %1109 = vmatprep.subr.mxu0 0.0
    %1110 = vmatpush2.xpose.msra.mxu0 0.0
    %1111 = vmatprep.subr.mxu0 0.0
    %1112 = vmatpush2.xpose.msra.mxu0 0.0
    %1113 = vmatprep.subr.mxu0 0.0
    %1114 = vmatpush2.xpose.msra.mxu0 0.0
    %1115 = vmatprep.subr.mxu0 0.0
    %1116 = vmatpush2.xpose.msra.mxu0 0.0
    %1117 = vmatprep.subr.mxu0 0.0
    %1118 = vmatpush2.xpose.msra.mxu0 0.0
    %1119 = vmatprep.subr.mxu0 0.0
    %1120 = vmatpush2.xpose.msra.mxu0 0.0
    %1121 = vmatprep.subr.mxu0 0.0
    %1122 = vmatpush2.xpose.msra.mxu0 0.0
    %1123 = vmatprep.subr.mxu0 0.0
    %1124 = vmatpush2.xpose.msra.mxu0 0.0
    %1125 = vmatprep.subr.mxu0 0.0
    %1126 = vmatpush2.xpose.msra.mxu0 0.0
    %1127 = vmatprep.mubr.f32.mxu0 0.0
    %1128 = vmatmul.mubr.f32.gmra.mxu0 %v1059
    %v1129 = vpop.f32.mrf.mxu0
    %v1130 = vadd.f32 0.0, %v1129
    %v1131 = vpop.f32.mrf.mxu0
    %1132 = vdwg.mxu0
    %1134 = vrot.lane.b32.xlu0 %v604, 120
    %v1135 = vpop.permute.xlu0 %1134
    %v1136 = vsel %vm750, %v604, 0
    %v1138 = vsel %vm750, %v1135, 0
    %1140 = vmatprep.subr.mxu0 0.0
    %1141 = vmatpush1.xpose.msra.mxu0 0.0
    %1142 = vmatprep.subr.mxu0 0.0
    %1143 = vmatpush1.xpose.msra.mxu0 0.0
    %1144 = vmatprep.subr.mxu0 0.0
    %1145 = vmatpush1.xpose.msra.mxu0 0.0
    %1146 = vmatprep.subr.mxu0 0.0
    %1147 = vmatpush1.xpose.msra.mxu0 0.0
    %1148 = vmatprep.subr.mxu0 0.0
    %1149 = vmatpush1.xpose.msra.mxu0 0.0
    %1150 = vmatprep.subr.mxu0 0.0
    %1151 = vmatpush1.xpose.msra.mxu0 0.0
    %1152 = vmatprep.subr.mxu0 0.0
    %1153 = vmatpush1.xpose.msra.mxu0 0.0
    %1154 = vmatprep.subr.mxu0 0.0
    %1155 = vmatpush1.xpose.msra.mxu0 0.0
    %1156 = vmatprep.subr.mxu0 0.0
    %1157 = vmatpush1.xpose.msra.mxu0 0.0
    %1158 = vmatprep.subr.mxu0 0.0
    %1159 = vmatpush1.xpose.msra.mxu0 0.0
    %1160 = vmatprep.subr.mxu0 0.0
    %1161 = vmatpush1.xpose.msra.mxu0 0.0
    %1162 = vmatprep.subr.mxu0 0.0
    %1163 = vmatpush1.xpose.msra.mxu0 0.0
    %1164 = vmatprep.subr.mxu0 0.0
    %1165 = vmatpush1.xpose.msra.mxu0 0.0
    %1166 = vmatprep.subr.mxu0 0.0
    %1167 = vmatpush1.xpose.msra.mxu0 0.0
    %1168 = vmatprep.subr.mxu0 0.0
    %1169 = vmatpush1.xpose.msra.mxu0 0.0
    %1170 = vmatprep.subr.mxu0 0.0
    %1171 = vmatpush1.xpose.msra.mxu0 %v1138
    %1172 = vmatprep.subr.mxu0 0.0
    %1173 = vmatpush2.xpose.msra.mxu0 0.0
    %1174 = vmatprep.subr.mxu0 0.0
    %1175 = vmatpush2.xpose.msra.mxu0 0.0
    %1176 = vmatprep.subr.mxu0 0.0
    %1177 = vmatpush2.xpose.msra.mxu0 0.0
    %1178 = vmatprep.subr.mxu0 0.0
    %1179 = vmatpush2.xpose.msra.mxu0 0.0
    %1180 = vmatprep.subr.mxu0 0.0
    %1181 = vmatpush2.xpose.msra.mxu0 0.0
    %1182 = vmatprep.subr.mxu0 0.0
    %1183 = vmatpush2.xpose.msra.mxu0 0.0
    %1184 = vmatprep.subr.mxu0 0.0
    %1185 = vmatpush2.xpose.msra.mxu0 0.0
    %1186 = vmatprep.subr.mxu0 0.0
    %1187 = vmatpush2.xpose.msra.mxu0 0.0
    %1188 = vmatprep.subr.mxu0 0.0
    %1189 = vmatpush2.xpose.msra.mxu0 0.0
    %1190 = vmatprep.subr.mxu0 0.0
    %1191 = vmatpush2.xpose.msra.mxu0 0.0
    %1192 = vmatprep.subr.mxu0 0.0
    %1193 = vmatpush2.xpose.msra.mxu0 0.0
    %1194 = vmatprep.subr.mxu0 0.0
    %1195 = vmatpush2.xpose.msra.mxu0 0.0
    %1196 = vmatprep.subr.mxu0 0.0
    %1197 = vmatpush2.xpose.msra.mxu0 0.0
    %1198 = vmatprep.subr.mxu0 0.0
    %1199 = vmatpush2.xpose.msra.mxu0 0.0
    %1200 = vmatprep.subr.mxu0 0.0
    %1201 = vmatpush2.xpose.msra.mxu0 0.0
    %1202 = vmatprep.subr.mxu0 0.0
    %1203 = vmatpush2.xpose.msra.mxu0 0.0
    %1204 = vmatprep.mubr.f32.mxu0 0.0
    %1205 = vmatmul.mubr.f32.gmra.mxu0 %v1136
    %v1206 = vpop.f32.mrf.mxu0
    %v1207 = vadd.f32 0.0, %v1206
    %v1208 = vpop.f32.mrf.mxu0
    %1209 = vdwg.mxu0
    %1211 = vrot.lane.b32.xlu0 %v674, 120
    %v1212 = vpop.permute.xlu0 %1211
    %v1213 = vsel %vm750, %v674, 0
    %v1215 = vsel %vm750, %v1212, 0
    %1217 = vmatprep.subr.mxu0 0.0
    %1218 = vmatpush1.xpose.msra.mxu0 0.0
    %1219 = vmatprep.subr.mxu0 0.0
    %1220 = vmatpush1.xpose.msra.mxu0 0.0
    %1221 = vmatprep.subr.mxu0 0.0
    %1222 = vmatpush1.xpose.msra.mxu0 0.0
    %1223 = vmatprep.subr.mxu0 0.0
    %1224 = vmatpush1.xpose.msra.mxu0 0.0
    %1225 = vmatprep.subr.mxu0 0.0
    %1226 = vmatpush1.xpose.msra.mxu0 0.0
    %1227 = vmatprep.subr.mxu0 0.0
    %1228 = vmatpush1.xpose.msra.mxu0 0.0
    %1229 = vmatprep.subr.mxu0 0.0
    %1230 = vmatpush1.xpose.msra.mxu0 0.0
    %1231 = vmatprep.subr.mxu0 0.0
    %1232 = vmatpush1.xpose.msra.mxu0 0.0
    %1233 = vmatprep.subr.mxu0 0.0
    %1234 = vmatpush1.xpose.msra.mxu0 0.0
    %1235 = vmatprep.subr.mxu0 0.0
    %1236 = vmatpush1.xpose.msra.mxu0 0.0
    %1237 = vmatprep.subr.mxu0 0.0
    %1238 = vmatpush1.xpose.msra.mxu0 0.0
    %1239 = vmatprep.subr.mxu0 0.0
    %1240 = vmatpush1.xpose.msra.mxu0 0.0
    %1241 = vmatprep.subr.mxu0 0.0
    %1242 = vmatpush1.xpose.msra.mxu0 0.0
    %1243 = vmatprep.subr.mxu0 0.0
    %1244 = vmatpush1.xpose.msra.mxu0 0.0
    %1245 = vmatprep.subr.mxu0 0.0
    %1246 = vmatpush1.xpose.msra.mxu0 0.0
    %1247 = vmatprep.subr.mxu0 0.0
    %1248 = vmatpush1.xpose.msra.mxu0 %v1215
    %1249 = vmatprep.subr.mxu0 0.0
    %1250 = vmatpush2.xpose.msra.mxu0 0.0
    %1251 = vmatprep.subr.mxu0 0.0
    %1252 = vmatpush2.xpose.msra.mxu0 0.0
    %1253 = vmatprep.subr.mxu0 0.0
    %1254 = vmatpush2.xpose.msra.mxu0 0.0
    %1255 = vmatprep.subr.mxu0 0.0
    %1256 = vmatpush2.xpose.msra.mxu0 0.0
    %1257 = vmatprep.subr.mxu0 0.0
    %1258 = vmatpush2.xpose.msra.mxu0 0.0
    %1259 = vmatprep.subr.mxu0 0.0
    %1260 = vmatpush2.xpose.msra.mxu0 0.0
    %1261 = vmatprep.subr.mxu0 0.0
    %1262 = vmatpush2.xpose.msra.mxu0 0.0
    %1263 = vmatprep.subr.mxu0 0.0
    %1264 = vmatpush2.xpose.msra.mxu0 0.0
    %1265 = vmatprep.subr.mxu0 0.0
    %1266 = vmatpush2.xpose.msra.mxu0 0.0
    %1267 = vmatprep.subr.mxu0 0.0
    %1268 = vmatpush2.xpose.msra.mxu0 0.0
    %1269 = vmatprep.subr.mxu0 0.0
    %1270 = vmatpush2.xpose.msra.mxu0 0.0
    %1271 = vmatprep.subr.mxu0 0.0
    %1272 = vmatpush2.xpose.msra.mxu0 0.0
    %1273 = vmatprep.subr.mxu0 0.0
    %1274 = vmatpush2.xpose.msra.mxu0 0.0
    %1275 = vmatprep.subr.mxu0 0.0
    %1276 = vmatpush2.xpose.msra.mxu0 0.0
    %1277 = vmatprep.subr.mxu0 0.0
    %1278 = vmatpush2.xpose.msra.mxu0 0.0
    %1279 = vmatprep.subr.mxu0 0.0
    %1280 = vmatpush2.xpose.msra.mxu0 0.0
    %1281 = vmatprep.mubr.f32.mxu0 0.0
    %1282 = vmatmul.mubr.f32.gmra.mxu0 %v1213
    %v1283 = vpop.f32.mrf.mxu0
    %v1284 = vadd.f32 0.0, %v1283
    %v1285 = vpop.f32.mrf.mxu0
    %1286 = vdwg.mxu0
    %1288 = vrot.lane.b32.xlu0 %v744, 120
    %v1289 = vpop.permute.xlu0 %1288
    %v1290 = vsel %vm750, %v744, 0
    %v1292 = vsel %vm750, %v1289, 0
    %1294 = vmatprep.subr.mxu0 0.0
    %1295 = vmatpush1.xpose.msra.mxu0 0.0
    %1296 = vmatprep.subr.mxu0 0.0
    %1297 = vmatpush1.xpose.msra.mxu0 0.0
    %1298 = vmatprep.subr.mxu0 0.0
    %1299 = vmatpush1.xpose.msra.mxu0 0.0
    %1300 = vmatprep.subr.mxu0 0.0
    %1301 = vmatpush1.xpose.msra.mxu0 0.0
    %1302 = vmatprep.subr.mxu0 0.0
    %1303 = vmatpush1.xpose.msra.mxu0 0.0
    %1304 = vmatprep.subr.mxu0 0.0
    %1305 = vmatpush1.xpose.msra.mxu0 0.0
    %1306 = vmatprep.subr.mxu0 0.0
    %1307 = vmatpush1.xpose.msra.mxu0 0.0
    %1308 = vmatprep.subr.mxu0 0.0
    %1309 = vmatpush1.xpose.msra.mxu0 0.0
    %1310 = vmatprep.subr.mxu0 0.0
    %1311 = vmatpush1.xpose.msra.mxu0 0.0
    %1312 = vmatprep.subr.mxu0 0.0
    %1313 = vmatpush1.xpose.msra.mxu0 0.0
    %1314 = vmatprep.subr.mxu0 0.0
    %1315 = vmatpush1.xpose.msra.mxu0 0.0
    %1316 = vmatprep.subr.mxu0 0.0
    %1317 = vmatpush1.xpose.msra.mxu0 0.0
    %1318 = vmatprep.subr.mxu0 0.0
    %1319 = vmatpush1.xpose.msra.mxu0 0.0
    %1320 = vmatprep.subr.mxu0 0.0
    %1321 = vmatpush1.xpose.msra.mxu0 0.0
    %1322 = vmatprep.subr.mxu0 0.0
    %1323 = vmatpush1.xpose.msra.mxu0 0.0
    %1324 = vmatprep.subr.mxu0 0.0
    %1325 = vmatpush1.xpose.msra.mxu0 %v1292
    %1326 = vmatprep.subr.mxu0 0.0
    %1327 = vmatpush2.xpose.msra.mxu0 0.0
    %1328 = vmatprep.subr.mxu0 0.0
    %1329 = vmatpush2.xpose.msra.mxu0 0.0
    %1330 = vmatprep.subr.mxu0 0.0
    %1331 = vmatpush2.xpose.msra.mxu0 0.0
    %1332 = vmatprep.subr.mxu0 0.0
    %1333 = vmatpush2.xpose.msra.mxu0 0.0
    %1334 = vmatprep.subr.mxu0 0.0
    %1335 = vmatpush2.xpose.msra.mxu0 0.0
    %1336 = vmatprep.subr.mxu0 0.0
    %1337 = vmatpush2.xpose.msra.mxu0 0.0
    %1338 = vmatprep.subr.mxu0 0.0
    %1339 = vmatpush2.xpose.msra.mxu0 0.0
    %1340 = vmatprep.subr.mxu0 0.0
    %1341 = vmatpush2.xpose.msra.mxu0 0.0
    %1342 = vmatprep.subr.mxu0 0.0
    %1343 = vmatpush2.xpose.msra.mxu0 0.0
    %1344 = vmatprep.subr.mxu0 0.0
    %1345 = vmatpush2.xpose.msra.mxu0 0.0
    %1346 = vmatprep.subr.mxu0 0.0
    %1347 = vmatpush2.xpose.msra.mxu0 0.0
    %1348 = vmatprep.subr.mxu0 0.0
    %1349 = vmatpush2.xpose.msra.mxu0 0.0
    %1350 = vmatprep.subr.mxu0 0.0
    %1351 = vmatpush2.xpose.msra.mxu0 0.0
    %1352 = vmatprep.subr.mxu0 0.0
    %1353 = vmatpush2.xpose.msra.mxu0 0.0
    %1354 = vmatprep.subr.mxu0 0.0
    %1355 = vmatpush2.xpose.msra.mxu0 0.0
    %1356 = vmatprep.subr.mxu0 0.0
    %1357 = vmatpush2.xpose.msra.mxu0 0.0
    %1358 = vmatprep.mubr.f32.mxu0 0.0
    %1359 = vmatmul.mubr.f32.gmra.mxu0 %v1290
    %v1360 = vpop.f32.mrf.mxu0
    %v1361 = vadd.f32 0.0, %v1360
    %v1362 = vpop.f32.mrf.mxu0
    %1363 = vdwg.mxu0
    %v1364 = vmul.f32 %v822, 0.35355338
    %v1365 = vmul.f32 %v899, 0.35355338
    %v1366 = vmul.f32 %v976, 0.35355338
    %v1367 = vmul.f32 %v1053, 0.35355338
    %v1368 = vmul.f32 %v1130, 0.35355338
    %v1369 = vmul.f32 %v1207, 0.35355338
    %v1370 = vmul.f32 %v1284, 0.35355338
    %v1371 = vmul.f32 %v1361, 0.35355338
    %v1372 = vld [vmem:[%s1] sm:$0x1]
    %v1373 = vld [vmem:[%s1 + $0x1] sm:$0x1]
    %v1374 = vld [vmem:[%s1 + $0x2] sm:$0x1]
    %v1375 = vld [vmem:[%s1 + $0x3] sm:$0x1]
    %v1376 = vld [vmem:[%s1 + $0x4] sm:$0x1]
    %v1377 = vld [vmem:[%s1 + $0x5] sm:$0x1]
    %v1378 = vld [vmem:[%s1 + $0x6] sm:$0x1]
    %v1379 = vld [vmem:[%s1 + $0x7] sm:$0x1]
    %v1388 = vlaneseq
    %v1389 = vshrl.u32 %v1388, 7
    %v1390 = vsub.s32 0, %v1389
    %v1391 = vrot.slane %v1372, %v1390
    %v1392 = vlaneseq
    %v1393 = vshrl.u32 %v1392, 7
    %v1394 = vsub.s32 0, %v1393
    %v1395 = vrot.slane %v1373, %v1394
    %v1396 = vlaneseq
    %v1397 = vshrl.u32 %v1396, 7
    %v1398 = vsub.s32 0, %v1397
    %v1399 = vrot.slane %v1374, %v1398
    %v1400 = vlaneseq
    %v1401 = vshrl.u32 %v1400, 7
    %v1402 = vsub.s32 0, %v1401
    %v1403 = vrot.slane %v1375, %v1402
    %v1404 = vlaneseq
    %v1405 = vshrl.u32 %v1404, 7
    %v1406 = vsub.s32 0, %v1405
    %v1407 = vrot.slane %v1376, %v1406
    %v1408 = vlaneseq
    %v1409 = vshrl.u32 %v1408, 7
    %v1410 = vsub.s32 0, %v1409
    %v1411 = vrot.slane %v1377, %v1410
    %v1412 = vlaneseq
    %v1413 = vshrl.u32 %v1412, 7
    %v1414 = vsub.s32 0, %v1413
    %v1415 = vrot.slane %v1378, %v1414
    %v1416 = vlaneseq
    %v1417 = vshrl.u32 %v1416, 7
    %v1418 = vsub.s32 0, %v1417
    %v1419 = vrot.slane %v1379, %v1418
    %v1428 = vadd.f32 %v1364, %v1391
    %v1429 = vadd.f32 %v1365, %v1395
    %v1430 = vadd.f32 %v1366, %v1399
    %v1431 = vadd.f32 %v1367, %v1403
    %v1432 = vadd.f32 %v1368, %v1407
    %v1433 = vadd.f32 %v1369, %v1411
    %v1434 = vadd.f32 %v1370, %v1415
    %v1435 = vadd.f32 %v1371, %v1419
    %v1436 = vsel %vm750, %v1428, -inf
    %1437 = vmax.xlane.f32.xlu0 %v1436
    %v1438 = vpop.xlane.xlu0 %1437
    %v1439 = vsel %vm750, %v1429, -inf
    %1440 = vmax.xlane.f32.xlu0 %v1439
    %v1441 = vpop.xlane.xlu0 %1440
    %v1442 = vsel %vm750, %v1430, -inf
    %1443 = vmax.xlane.f32.xlu0 %v1442
    %v1444 = vpop.xlane.xlu0 %1443
    %v1445 = vsel %vm750, %v1431, -inf
    %1446 = vmax.xlane.f32.xlu0 %v1445
    %v1447 = vpop.xlane.xlu0 %1446
    %v1448 = vsel %vm750, %v1432, -inf
    %1449 = vmax.xlane.f32.xlu0 %v1448
    %v1450 = vpop.xlane.xlu0 %1449
    %v1451 = vsel %vm750, %v1433, -inf
    %1452 = vmax.xlane.f32.xlu0 %v1451
    %v1453 = vpop.xlane.xlu0 %1452
    %v1454 = vsel %vm750, %v1434, -inf
    %1455 = vmax.xlane.f32.xlu0 %v1454
    %v1456 = vpop.xlane.xlu0 %1455
    %v1457 = vsel %vm750, %v1435, -inf
    %1458 = vmax.xlane.f32.xlu0 %v1457
    %v1459 = vpop.xlane.xlu0 %1458
    %v1460 = vsub.f32 %v1428, %v1438
    %v1461 = vsub.f32 %v1429, %v1441
    %v1462 = vsub.f32 %v1430, %v1444
    %v1463 = vsub.f32 %v1431, %v1447
    %v1464 = vsub.f32 %v1432, %v1450
    %v1465 = vsub.f32 %v1433, %v1453
    %v1466 = vsub.f32 %v1434, %v1456
    %v1467 = vsub.f32 %v1435, %v1459
    %v1468 = vmul.f32 %v1460, 1.442695
    %v1469 = vpow.pop %v1468
    %v1470 = vmul.f32 %v1461, 1.442695
    %v1471 = vpow.pop %v1470
    %v1472 = vmul.f32 %v1462, 1.442695
    %v1473 = vpow.pop %v1472
    %v1474 = vmul.f32 %v1463, 1.442695
    %v1475 = vpow.pop %v1474
    %v1476 = vmul.f32 %v1464, 1.442695
    %v1477 = vpow.pop %v1476
    %v1478 = vmul.f32 %v1465, 1.442695
    %v1479 = vpow.pop %v1478
    %v1480 = vmul.f32 %v1466, 1.442695
    %v1481 = vpow.pop %v1480
    %v1482 = vmul.f32 %v1467, 1.442695
    %v1483 = vpow.pop %v1482
    %v1484 = vsel %vm750, %v1469, 0.0
    %1485 = vadd.xlane.f32.xlu0 %v1484
    %v1486 = vpop.xlane.xlu0 %1485
    %v1487 = vsel %vm750, %v1471, 0.0
    %1488 = vadd.xlane.f32.xlu0 %v1487
    %v1489 = vpop.xlane.xlu0 %1488
    %v1490 = vsel %vm750, %v1473, 0.0
    %1491 = vadd.xlane.f32.xlu0 %v1490
    %v1492 = vpop.xlane.xlu0 %1491
    %v1493 = vsel %vm750, %v1475, 0.0
    %1494 = vadd.xlane.f32.xlu0 %v1493
    %v1495 = vpop.xlane.xlu0 %1494
    %v1496 = vsel %vm750, %v1477, 0.0
    %1497 = vadd.xlane.f32.xlu0 %v1496
    %v1498 = vpop.xlane.xlu0 %1497
    %v1499 = vsel %vm750, %v1479, 0.0
    %1500 = vadd.xlane.f32.xlu0 %v1499
    %v1501 = vpop.xlane.xlu0 %1500
    %v1502 = vsel %vm750, %v1481, 0.0
    %1503 = vadd.xlane.f32.xlu0 %v1502
    %v1504 = vpop.xlane.xlu0 %1503
    %v1505 = vsel %vm750, %v1483, 0.0
    %1506 = vadd.xlane.f32.xlu0 %v1505
    %v1507 = vpop.xlane.xlu0 %1506
    %v1508 = vrcp.pop %v1486
    %v1509 = vrcp.pop %v1489
    %v1510 = vrcp.pop %v1492
    %v1511 = vrcp.pop %v1495
    %v1512 = vrcp.pop %v1498
    %v1513 = vrcp.pop %v1501
    %v1514 = vrcp.pop %v1504
    %v1515 = vrcp.pop %v1507
    %v1516 = vmul.f32 %v1469, %v1508
    %v1517 = vmul.f32 %v1471, %v1509
    %v1518 = vmul.f32 %v1473, %v1510
    %v1519 = vmul.f32 %v1475, %v1511
    %v1520 = vmul.f32 %v1477, %v1512
    %v1521 = vmul.f32 %v1479, %v1513
    %v1522 = vmul.f32 %v1481, %v1514
    %v1523 = vmul.f32 %v1483, %v1515
    %1524 = vrot.lane.b32.xlu0 %v251, 112
    %v1525 = vpop.permute.xlu0 %1524
    %v1528 = vsel %vm750, %v1516, 0
    %1530 = vmatprep.subr.mxu0 0.0
    %1531 = vmatpush1.msra.mxu0 0.0
    %1532 = vmatprep.subr.mxu0 0.0
    %1533 = vmatpush1.msra.mxu0 0.0
    %1534 = vmatprep.subr.mxu0 0.0
    %1535 = vmatpush1.msra.mxu0 0.0
    %1536 = vmatprep.subr.mxu0 0.0
    %1537 = vmatpush1.msra.mxu0 0.0
    %1538 = vmatprep.subr.mxu0 0.0
    %1539 = vmatpush1.msra.mxu0 0.0
    %1540 = vmatprep.subr.mxu0 0.0
    %1541 = vmatpush1.msra.mxu0 0.0
    %1542 = vmatprep.subr.mxu0 0.0
    %1543 = vmatpush1.msra.mxu0 0.0
    %1544 = vmatprep.subr.mxu0 0.0
    %1545 = vmatpush1.msra.mxu0 0.0
    %1546 = vmatprep.subr.mxu0 0.0
    %1547 = vmatpush1.msra.mxu0 0.0
    %1548 = vmatprep.subr.mxu0 0.0
    %1549 = vmatpush1.msra.mxu0 0.0
    %1550 = vmatprep.subr.mxu0 0.0
    %1551 = vmatpush1.msra.mxu0 0.0
    %1552 = vmatprep.subr.mxu0 0.0
    %1553 = vmatpush1.msra.mxu0 0.0
    %1554 = vmatprep.subr.mxu0 0.0
    %1555 = vmatpush1.msra.mxu0 0.0
    %1556 = vmatprep.subr.mxu0 0.0
    %1557 = vmatpush1.msra.mxu0 0.0
    %1558 = vmatprep.subr.mxu0 0.0
    %1559 = vmatpush1.msra.mxu0 0.0
    %1560 = vmatprep.subr.mxu0 0.0
    %1561 = vmatpush1.msra.mxu0 %v1525
    %1562 = vmatprep.subr.mxu0 0.0
    %1563 = vmatpush2.msra.mxu0 0.0
    %1564 = vmatprep.subr.mxu0 0.0
    %1565 = vmatpush2.msra.mxu0 0.0
    %1566 = vmatprep.subr.mxu0 0.0
    %1567 = vmatpush2.msra.mxu0 0.0
    %1568 = vmatprep.subr.mxu0 0.0
    %1569 = vmatpush2.msra.mxu0 0.0
    %1570 = vmatprep.subr.mxu0 0.0
    %1571 = vmatpush2.msra.mxu0 0.0
    %1572 = vmatprep.subr.mxu0 0.0
    %1573 = vmatpush2.msra.mxu0 0.0
    %1574 = vmatprep.subr.mxu0 0.0
    %1575 = vmatpush2.msra.mxu0 0.0
    %1576 = vmatprep.subr.mxu0 0.0
    %1577 = vmatpush2.msra.mxu0 0.0
    %1578 = vmatprep.subr.mxu0 0.0
    %1579 = vmatpush2.msra.mxu0 0.0
    %1580 = vmatprep.subr.mxu0 0.0
    %1581 = vmatpush2.msra.mxu0 0.0
    %1582 = vmatprep.subr.mxu0 0.0
    %1583 = vmatpush2.msra.mxu0 0.0
    %1584 = vmatprep.subr.mxu0 0.0
    %1585 = vmatpush2.msra.mxu0 0.0
    %1586 = vmatprep.subr.mxu0 0.0
    %1587 = vmatpush2.msra.mxu0 0.0
    %1588 = vmatprep.subr.mxu0 0.0
    %1589 = vmatpush2.msra.mxu0 0.0
    %1590 = vmatprep.subr.mxu0 0.0
    %1591 = vmatpush2.msra.mxu0 0.0
    %1592 = vmatprep.subr.mxu0 0.0
    %1593 = vmatpush2.msra.mxu0 0.0
    %1594 = vmatprep.mubr.f32.mxu0 0.0
    %1595 = vmatmul.mubr.f32.gmra.mxu0 %v1528
    %v1596 = vpop.f32.mrf.mxu0
    %v1597 = vadd.f32 0.0, %v1596
    %v1598 = vpop.f32.mrf.mxu0
    %1599 = vdwg.mxu0
    %1600 = vrot.lane.b32.xlu0 %v324, 112
    %v1601 = vpop.permute.xlu0 %1600
    %v1604 = vsel %vm750, %v1517, 0
    %1606 = vmatprep.subr.mxu0 0.0
    %1607 = vmatpush1.msra.mxu0 0.0
    %1608 = vmatprep.subr.mxu0 0.0
    %1609 = vmatpush1.msra.mxu0 0.0
    %1610 = vmatprep.subr.mxu0 0.0
    %1611 = vmatpush1.msra.mxu0 0.0
    %1612 = vmatprep.subr.mxu0 0.0
    %1613 = vmatpush1.msra.mxu0 0.0
    %1614 = vmatprep.subr.mxu0 0.0
    %1615 = vmatpush1.msra.mxu0 0.0
    %1616 = vmatprep.subr.mxu0 0.0
    %1617 = vmatpush1.msra.mxu0 0.0
    %1618 = vmatprep.subr.mxu0 0.0
    %1619 = vmatpush1.msra.mxu0 0.0
    %1620 = vmatprep.subr.mxu0 0.0
    %1621 = vmatpush1.msra.mxu0 0.0
    %1622 = vmatprep.subr.mxu0 0.0
    %1623 = vmatpush1.msra.mxu0 0.0
    %1624 = vmatprep.subr.mxu0 0.0
    %1625 = vmatpush1.msra.mxu0 0.0
    %1626 = vmatprep.subr.mxu0 0.0
    %1627 = vmatpush1.msra.mxu0 0.0
    %1628 = vmatprep.subr.mxu0 0.0
    %1629 = vmatpush1.msra.mxu0 0.0
    %1630 = vmatprep.subr.mxu0 0.0
    %1631 = vmatpush1.msra.mxu0 0.0
    %1632 = vmatprep.subr.mxu0 0.0
    %1633 = vmatpush1.msra.mxu0 0.0
    %1634 = vmatprep.subr.mxu0 0.0
    %1635 = vmatpush1.msra.mxu0 0.0
    %1636 = vmatprep.subr.mxu0 0.0
    %1637 = vmatpush1.msra.mxu0 %v1601
    %1638 = vmatprep.subr.mxu0 0.0
    %1639 = vmatpush2.msra.mxu0 0.0
    %1640 = vmatprep.subr.mxu0 0.0
    %1641 = vmatpush2.msra.mxu0 0.0
    %1642 = vmatprep.subr.mxu0 0.0
    %1643 = vmatpush2.msra.mxu0 0.0
    %1644 = vmatprep.subr.mxu0 0.0
    %1645 = vmatpush2.msra.mxu0 0.0
    %1646 = vmatprep.subr.mxu0 0.0
    %1647 = vmatpush2.msra.mxu0 0.0
    %1648 = vmatprep.subr.mxu0 0.0
    %1649 = vmatpush2.msra.mxu0 0.0
    %1650 = vmatprep.subr.mxu0 0.0
    %1651 = vmatpush2.msra.mxu0 0.0
    %1652 = vmatprep.subr.mxu0 0.0
    %1653 = vmatpush2.msra.mxu0 0.0
    %1654 = vmatprep.subr.mxu0 0.0
    %1655 = vmatpush2.msra.mxu0 0.0
    %1656 = vmatprep.subr.mxu0 0.0
    %1657 = vmatpush2.msra.mxu0 0.0
    %1658 = vmatprep.subr.mxu0 0.0
    %1659 = vmatpush2.msra.mxu0 0.0
    %1660 = vmatprep.subr.mxu0 0.0
    %1661 = vmatpush2.msra.mxu0 0.0
    %1662 = vmatprep.subr.mxu0 0.0
    %1663 = vmatpush2.msra.mxu0 0.0
    %1664 = vmatprep.subr.mxu0 0.0
    %1665 = vmatpush2.msra.mxu0 0.0
    %1666 = vmatprep.subr.mxu0 0.0
    %1667 = vmatpush2.msra.mxu0 0.0
    %1668 = vmatprep.subr.mxu0 0.0
    %1669 = vmatpush2.msra.mxu0 0.0
    %1670 = vmatprep.mubr.f32.mxu0 0.0
    %1671 = vmatmul.mubr.f32.gmra.mxu0 %v1604
    %v1672 = vpop.f32.mrf.mxu0
    %v1673 = vadd.f32 0.0, %v1672
    %v1674 = vpop.f32.mrf.mxu0
    %1675 = vdwg.mxu0
    %1676 = vrot.lane.b32.xlu0 %v394, 112
    %v1677 = vpop.permute.xlu0 %1676
    %v1680 = vsel %vm750, %v1518, 0
    %1682 = vmatprep.subr.mxu0 0.0
    %1683 = vmatpush1.msra.mxu0 0.0
    %1684 = vmatprep.subr.mxu0 0.0
    %1685 = vmatpush1.msra.mxu0 0.0
    %1686 = vmatprep.subr.mxu0 0.0
    %1687 = vmatpush1.msra.mxu0 0.0
    %1688 = vmatprep.subr.mxu0 0.0
    %1689 = vmatpush1.msra.mxu0 0.0
    %1690 = vmatprep.subr.mxu0 0.0
    %1691 = vmatpush1.msra.mxu0 0.0
    %1692 = vmatprep.subr.mxu0 0.0
    %1693 = vmatpush1.msra.mxu0 0.0
    %1694 = vmatprep.subr.mxu0 0.0
    %1695 = vmatpush1.msra.mxu0 0.0
    %1696 = vmatprep.subr.mxu0 0.0
    %1697 = vmatpush1.msra.mxu0 0.0
    %1698 = vmatprep.subr.mxu0 0.0
    %1699 = vmatpush1.msra.mxu0 0.0
    %1700 = vmatprep.subr.mxu0 0.0
    %1701 = vmatpush1.msra.mxu0 0.0
    %1702 = vmatprep.subr.mxu0 0.0
    %1703 = vmatpush1.msra.mxu0 0.0
    %1704 = vmatprep.subr.mxu0 0.0
    %1705 = vmatpush1.msra.mxu0 0.0
    %1706 = vmatprep.subr.mxu0 0.0
    %1707 = vmatpush1.msra.mxu0 0.0
    %1708 = vmatprep.subr.mxu0 0.0
    %1709 = vmatpush1.msra.mxu0 0.0
    %1710 = vmatprep.subr.mxu0 0.0
    %1711 = vmatpush1.msra.mxu0 0.0
    %1712 = vmatprep.subr.mxu0 0.0
    %1713 = vmatpush1.msra.mxu0 %v1677
    %1714 = vmatprep.subr.mxu0 0.0
    %1715 = vmatpush2.msra.mxu0 0.0
    %1716 = vmatprep.subr.mxu0 0.0
    %1717 = vmatpush2.msra.mxu0 0.0
    %1718 = vmatprep.subr.mxu0 0.0
    %1719 = vmatpush2.msra.mxu0 0.0
    %1720 = vmatprep.subr.mxu0 0.0
    %1721 = vmatpush2.msra.mxu0 0.0
    %1722 = vmatprep.subr.mxu0 0.0
    %1723 = vmatpush2.msra.mxu0 0.0
    %1724 = vmatprep.subr.mxu0 0.0
    %1725 = vmatpush2.msra.mxu0 0.0
    %1726 = vmatprep.subr.mxu0 0.0
    %1727 = vmatpush2.msra.mxu0 0.0
    %1728 = vmatprep.subr.mxu0 0.0
    %1729 = vmatpush2.msra.mxu0 0.0
    %1730 = vmatprep.subr.mxu0 0.0
    %1731 = vmatpush2.msra.mxu0 0.0
    %1732 = vmatprep.subr.mxu0 0.0
    %1733 = vmatpush2.msra.mxu0 0.0
    %1734 = vmatprep.subr.mxu0 0.0
    %1735 = vmatpush2.msra.mxu0 0.0
    %1736 = vmatprep.subr.mxu0 0.0
    %1737 = vmatpush2.msra.mxu0 0.0
    %1738 = vmatprep.subr.mxu0 0.0
    %1739 = vmatpush2.msra.mxu0 0.0
    %1740 = vmatprep.subr.mxu0 0.0
    %1741 = vmatpush2.msra.mxu0 0.0
    %1742 = vmatprep.subr.mxu0 0.0
    %1743 = vmatpush2.msra.mxu0 0.0
    %1744 = vmatprep.subr.mxu0 0.0
    %1745 = vmatpush2.msra.mxu0 0.0
    %1746 = vmatprep.mubr.f32.mxu0 0.0
    %1747 = vmatmul.mubr.f32.gmra.mxu0 %v1680
    %v1748 = vpop.f32.mrf.mxu0
    %v1749 = vadd.f32 0.0, %v1748
    %v1750 = vpop.f32.mrf.mxu0
    %1751 = vdwg.mxu0
    %1752 = vrot.lane.b32.xlu0 %v464, 112
    %v1753 = vpop.permute.xlu0 %1752
    %v1756 = vsel %vm750, %v1519, 0
    %1758 = vmatprep.subr.mxu0 0.0
    %1759 = vmatpush1.msra.mxu0 0.0
    %1760 = vmatprep.subr.mxu0 0.0
    %1761 = vmatpush1.msra.mxu0 0.0
    %1762 = vmatprep.subr.mxu0 0.0
    %1763 = vmatpush1.msra.mxu0 0.0
    %1764 = vmatprep.subr.mxu0 0.0
    %1765 = vmatpush1.msra.mxu0 0.0
    %1766 = vmatprep.subr.mxu0 0.0
    %1767 = vmatpush1.msra.mxu0 0.0
    %1768 = vmatprep.subr.mxu0 0.0
    %1769 = vmatpush1.msra.mxu0 0.0
    %1770 = vmatprep.subr.mxu0 0.0
    %1771 = vmatpush1.msra.mxu0 0.0
    %1772 = vmatprep.subr.mxu0 0.0
    %1773 = vmatpush1.msra.mxu0 0.0
    %1774 = vmatprep.subr.mxu0 0.0
    %1775 = vmatpush1.msra.mxu0 0.0
    %1776 = vmatprep.subr.mxu0 0.0
    %1777 = vmatpush1.msra.mxu0 0.0
    %1778 = vmatprep.subr.mxu0 0.0
    %1779 = vmatpush1.msra.mxu0 0.0
    %1780 = vmatprep.subr.mxu0 0.0
    %1781 = vmatpush1.msra.mxu0 0.0
    %1782 = vmatprep.subr.mxu0 0.0
    %1783 = vmatpush1.msra.mxu0 0.0
    %1784 = vmatprep.subr.mxu0 0.0
    %1785 = vmatpush1.msra.mxu0 0.0
    %1786 = vmatprep.subr.mxu0 0.0
    %1787 = vmatpush1.msra.mxu0 0.0
    %1788 = vmatprep.subr.mxu0 0.0
    %1789 = vmatpush1.msra.mxu0 %v1753
    %1790 = vmatprep.subr.mxu0 0.0
    %1791 = vmatpush2.msra.mxu0 0.0
    %1792 = vmatprep.subr.mxu0 0.0
    %1793 = vmatpush2.msra.mxu0 0.0
    %1794 = vmatprep.subr.mxu0 0.0
    %1795 = vmatpush2.msra.mxu0 0.0
    %1796 = vmatprep.subr.mxu0 0.0
    %1797 = vmatpush2.msra.mxu0 0.0
    %1798 = vmatprep.subr.mxu0 0.0
    %1799 = vmatpush2.msra.mxu0 0.0
    %1800 = vmatprep.subr.mxu0 0.0
    %1801 = vmatpush2.msra.mxu0 0.0
    %1802 = vmatprep.subr.mxu0 0.0
    %1803 = vmatpush2.msra.mxu0 0.0
    %1804 = vmatprep.subr.mxu0 0.0
    %1805 = vmatpush2.msra.mxu0 0.0
    %1806 = vmatprep.subr.mxu0 0.0
    %1807 = vmatpush2.msra.mxu0 0.0
    %1808 = vmatprep.subr.mxu0 0.0
    %1809 = vmatpush2.msra.mxu0 0.0
    %1810 = vmatprep.subr.mxu0 0.0
    %1811 = vmatpush2.msra.mxu0 0.0
    %1812 = vmatprep.subr.mxu0 0.0
    %1813 = vmatpush2.msra.mxu0 0.0
    %1814 = vmatprep.subr.mxu0 0.0
    %1815 = vmatpush2.msra.mxu0 0.0
    %1816 = vmatprep.subr.mxu0 0.0
    %1817 = vmatpush2.msra.mxu0 0.0
    %1818 = vmatprep.subr.mxu0 0.0
    %1819 = vmatpush2.msra.mxu0 0.0
    %1820 = vmatprep.subr.mxu0 0.0
    %1821 = vmatpush2.msra.mxu0 0.0
    %1822 = vmatprep.mubr.f32.mxu0 0.0
    %1823 = vmatmul.mubr.f32.gmra.mxu0 %v1756
    %v1824 = vpop.f32.mrf.mxu0
    %v1825 = vadd.f32 0.0, %v1824
    %v1826 = vpop.f32.mrf.mxu0
    %1827 = vdwg.mxu0
    %1828 = vrot.lane.b32.xlu0 %v534, 112
    %v1829 = vpop.permute.xlu0 %1828
    %v1832 = vsel %vm750, %v1520, 0
    %1834 = vmatprep.subr.mxu0 0.0
    %1835 = vmatpush1.msra.mxu0 0.0
    %1836 = vmatprep.subr.mxu0 0.0
    %1837 = vmatpush1.msra.mxu0 0.0
    %1838 = vmatprep.subr.mxu0 0.0
    %1839 = vmatpush1.msra.mxu0 0.0
    %1840 = vmatprep.subr.mxu0 0.0
    %1841 = vmatpush1.msra.mxu0 0.0
    %1842 = vmatprep.subr.mxu0 0.0
    %1843 = vmatpush1.msra.mxu0 0.0
    %1844 = vmatprep.subr.mxu0 0.0
    %1845 = vmatpush1.msra.mxu0 0.0
    %1846 = vmatprep.subr.mxu0 0.0
    %1847 = vmatpush1.msra.mxu0 0.0
    %1848 = vmatprep.subr.mxu0 0.0
    %1849 = vmatpush1.msra.mxu0 0.0
    %1850 = vmatprep.subr.mxu0 0.0
    %1851 = vmatpush1.msra.mxu0 0.0
    %1852 = vmatprep.subr.mxu0 0.0
    %1853 = vmatpush1.msra.mxu0 0.0
    %1854 = vmatprep.subr.mxu0 0.0
    %1855 = vmatpush1.msra.mxu0 0.0
    %1856 = vmatprep.subr.mxu0 0.0
    %1857 = vmatpush1.msra.mxu0 0.0
    %1858 = vmatprep.subr.mxu0 0.0
    %1859 = vmatpush1.msra.mxu0 0.0
    %1860 = vmatprep.subr.mxu0 0.0
    %1861 = vmatpush1.msra.mxu0 0.0
    %1862 = vmatprep.subr.mxu0 0.0
    %1863 = vmatpush1.msra.mxu0 0.0
    %1864 = vmatprep.subr.mxu0 0.0
    %1865 = vmatpush1.msra.mxu0 %v1829
    %1866 = vmatprep.subr.mxu0 0.0
    %1867 = vmatpush2.msra.mxu0 0.0
    %1868 = vmatprep.subr.mxu0 0.0
    %1869 = vmatpush2.msra.mxu0 0.0
    %1870 = vmatprep.subr.mxu0 0.0
    %1871 = vmatpush2.msra.mxu0 0.0
    %1872 = vmatprep.subr.mxu0 0.0
    %1873 = vmatpush2.msra.mxu0 0.0
    %1874 = vmatprep.subr.mxu0 0.0
    %1875 = vmatpush2.msra.mxu0 0.0
    %1876 = vmatprep.subr.mxu0 0.0
    %1877 = vmatpush2.msra.mxu0 0.0
    %1878 = vmatprep.subr.mxu0 0.0
    %1879 = vmatpush2.msra.mxu0 0.0
    %1880 = vmatprep.subr.mxu0 0.0
    %1881 = vmatpush2.msra.mxu0 0.0
    %1882 = vmatprep.subr.mxu0 0.0
    %1883 = vmatpush2.msra.mxu0 0.0
    %1884 = vmatprep.subr.mxu0 0.0
    %1885 = vmatpush2.msra.mxu0 0.0
    %1886 = vmatprep.subr.mxu0 0.0
    %1887 = vmatpush2.msra.mxu0 0.0
    %1888 = vmatprep.subr.mxu0 0.0
    %1889 = vmatpush2.msra.mxu0 0.0
    %1890 = vmatprep.subr.mxu0 0.0
    %1891 = vmatpush2.msra.mxu0 0.0
    %1892 = vmatprep.subr.mxu0 0.0
    %1893 = vmatpush2.msra.mxu0 0.0
    %1894 = vmatprep.subr.mxu0 0.0
    %1895 = vmatpush2.msra.mxu0 0.0
    %1896 = vmatprep.subr.mxu0 0.0
    %1897 = vmatpush2.msra.mxu0 0.0
    %1898 = vmatprep.mubr.f32.mxu0 0.0
    %1899 = vmatmul.mubr.f32.gmra.mxu0 %v1832
    %v1900 = vpop.f32.mrf.mxu0
    %v1901 = vadd.f32 0.0, %v1900
    %v1902 = vpop.f32.mrf.mxu0
    %1903 = vdwg.mxu0
    %1904 = vrot.lane.b32.xlu0 %v604, 112
    %v1905 = vpop.permute.xlu0 %1904
    %v1908 = vsel %vm750, %v1521, 0
    %1910 = vmatprep.subr.mxu0 0.0
    %1911 = vmatpush1.msra.mxu0 0.0
    %1912 = vmatprep.subr.mxu0 0.0
    %1913 = vmatpush1.msra.mxu0 0.0
    %1914 = vmatprep.subr.mxu0 0.0
    %1915 = vmatpush1.msra.mxu0 0.0
    %1916 = vmatprep.subr.mxu0 0.0
    %1917 = vmatpush1.msra.mxu0 0.0
    %1918 = vmatprep.subr.mxu0 0.0
    %1919 = vmatpush1.msra.mxu0 0.0
    %1920 = vmatprep.subr.mxu0 0.0
    %1921 = vmatpush1.msra.mxu0 0.0
    %1922 = vmatprep.subr.mxu0 0.0
    %1923 = vmatpush1.msra.mxu0 0.0
    %1924 = vmatprep.subr.mxu0 0.0
    %1925 = vmatpush1.msra.mxu0 0.0
    %1926 = vmatprep.subr.mxu0 0.0
    %1927 = vmatpush1.msra.mxu0 0.0
    %1928 = vmatprep.subr.mxu0 0.0
    %1929 = vmatpush1.msra.mxu0 0.0
    %1930 = vmatprep.subr.mxu0 0.0
    %1931 = vmatpush1.msra.mxu0 0.0
    %1932 = vmatprep.subr.mxu0 0.0
    %1933 = vmatpush1.msra.mxu0 0.0
    %1934 = vmatprep.subr.mxu0 0.0
    %1935 = vmatpush1.msra.mxu0 0.0
    %1936 = vmatprep.subr.mxu0 0.0
    %1937 = vmatpush1.msra.mxu0 0.0
    %1938 = vmatprep.subr.mxu0 0.0
    %1939 = vmatpush1.msra.mxu0 0.0
    %1940 = vmatprep.subr.mxu0 0.0
    %1941 = vmatpush1.msra.mxu0 %v1905
    %1942 = vmatprep.subr.mxu0 0.0
    %1943 = vmatpush2.msra.mxu0 0.0
    %1944 = vmatprep.subr.mxu0 0.0
    %1945 = vmatpush2.msra.mxu0 0.0
    %1946 = vmatprep.subr.mxu0 0.0
    %1947 = vmatpush2.msra.mxu0 0.0
    %1948 = vmatprep.subr.mxu0 0.0
    %1949 = vmatpush2.msra.mxu0 0.0
    %1950 = vmatprep.subr.mxu0 0.0
    %1951 = vmatpush2.msra.mxu0 0.0
    %1952 = vmatprep.subr.mxu0 0.0
    %1953 = vmatpush2.msra.mxu0 0.0
    %1954 = vmatprep.subr.mxu0 0.0
    %1955 = vmatpush2.msra.mxu0 0.0
    %1956 = vmatprep.subr.mxu0 0.0
    %1957 = vmatpush2.msra.mxu0 0.0
    %1958 = vmatprep.subr.mxu0 0.0
    %1959 = vmatpush2.msra.mxu0 0.0
    %1960 = vmatprep.subr.mxu0 0.0
    %1961 = vmatpush2.msra.mxu0 0.0
    %1962 = vmatprep.subr.mxu0 0.0
    %1963 = vmatpush2.msra.mxu0 0.0
    %1964 = vmatprep.subr.mxu0 0.0
    %1965 = vmatpush2.msra.mxu0 0.0
    %1966 = vmatprep.subr.mxu0 0.0
    %1967 = vmatpush2.msra.mxu0 0.0
    %1968 = vmatprep.subr.mxu0 0.0
    %1969 = vmatpush2.msra.mxu0 0.0
    %1970 = vmatprep.subr.mxu0 0.0
    %1971 = vmatpush2.msra.mxu0 0.0
    %1972 = vmatprep.subr.mxu0 0.0
    %1973 = vmatpush2.msra.mxu0 0.0
    %1974 = vmatprep.mubr.f32.mxu0 0.0
    %1975 = vmatmul.mubr.f32.gmra.mxu0 %v1908
    %v1976 = vpop.f32.mrf.mxu0
    %v1977 = vadd.f32 0.0, %v1976
    %v1978 = vpop.f32.mrf.mxu0
    %1979 = vdwg.mxu0
    %1980 = vrot.lane.b32.xlu0 %v674, 112
    %v1981 = vpop.permute.xlu0 %1980
    %v1984 = vsel %vm750, %v1522, 0
    %1986 = vmatprep.subr.mxu0 0.0
    %1987 = vmatpush1.msra.mxu0 0.0
    %1988 = vmatprep.subr.mxu0 0.0
    %1989 = vmatpush1.msra.mxu0 0.0
    %1990 = vmatprep.subr.mxu0 0.0
    %1991 = vmatpush1.msra.mxu0 0.0
    %1992 = vmatprep.subr.mxu0 0.0
    %1993 = vmatpush1.msra.mxu0 0.0
    %1994 = vmatprep.subr.mxu0 0.0
    %1995 = vmatpush1.msra.mxu0 0.0
    %1996 = vmatprep.subr.mxu0 0.0
    %1997 = vmatpush1.msra.mxu0 0.0
    %1998 = vmatprep.subr.mxu0 0.0
    %1999 = vmatpush1.msra.mxu0 0.0
    %2000 = vmatprep.subr.mxu0 0.0
    %2001 = vmatpush1.msra.mxu0 0.0
    %2002 = vmatprep.subr.mxu0 0.0
    %2003 = vmatpush1.msra.mxu0 0.0
    %2004 = vmatprep.subr.mxu0 0.0
    %2005 = vmatpush1.msra.mxu0 0.0
    %2006 = vmatprep.subr.mxu0 0.0
    %2007 = vmatpush1.msra.mxu0 0.0
    %2008 = vmatprep.subr.mxu0 0.0
    %2009 = vmatpush1.msra.mxu0 0.0
    %2010 = vmatprep.subr.mxu0 0.0
    %2011 = vmatpush1.msra.mxu0 0.0
    %2012 = vmatprep.subr.mxu0 0.0
    %2013 = vmatpush1.msra.mxu0 0.0
    %2014 = vmatprep.subr.mxu0 0.0
    %2015 = vmatpush1.msra.mxu0 0.0
    %2016 = vmatprep.subr.mxu0 0.0
    %2017 = vmatpush1.msra.mxu0 %v1981
    %2018 = vmatprep.subr.mxu0 0.0
    %2019 = vmatpush2.msra.mxu0 0.0
    %2020 = vmatprep.subr.mxu0 0.0
    %2021 = vmatpush2.msra.mxu0 0.0
    %2022 = vmatprep.subr.mxu0 0.0
    %2023 = vmatpush2.msra.mxu0 0.0
    %2024 = vmatprep.subr.mxu0 0.0
    %2025 = vmatpush2.msra.mxu0 0.0
    %2026 = vmatprep.subr.mxu0 0.0
    %2027 = vmatpush2.msra.mxu0 0.0
    %2028 = vmatprep.subr.mxu0 0.0
    %2029 = vmatpush2.msra.mxu0 0.0
    %2030 = vmatprep.subr.mxu0 0.0
    %2031 = vmatpush2.msra.mxu0 0.0
    %2032 = vmatprep.subr.mxu0 0.0
    %2033 = vmatpush2.msra.mxu0 0.0
    %2034 = vmatprep.subr.mxu0 0.0
    %2035 = vmatpush2.msra.mxu0 0.0
    %2036 = vmatprep.subr.mxu0 0.0
    %2037 = vmatpush2.msra.mxu0 0.0
    %2038 = vmatprep.subr.mxu0 0.0
    %2039 = vmatpush2.msra.mxu0 0.0
    %2040 = vmatprep.subr.mxu0 0.0
    %2041 = vmatpush2.msra.mxu0 0.0
    %2042 = vmatprep.subr.mxu0 0.0
    %2043 = vmatpush2.msra.mxu0 0.0
    %2044 = vmatprep.subr.mxu0 0.0
    %2045 = vmatpush2.msra.mxu0 0.0
    %2046 = vmatprep.subr.mxu0 0.0
    %2047 = vmatpush2.msra.mxu0 0.0
    %2048 = vmatprep.subr.mxu0 0.0
    %2049 = vmatpush2.msra.mxu0 0.0
    %2050 = vmatprep.mubr.f32.mxu0 0.0
    %2051 = vmatmul.mubr.f32.gmra.mxu0 %v1984
    %v2052 = vpop.f32.mrf.mxu0
    %v2053 = vadd.f32 0.0, %v2052
    %v2054 = vpop.f32.mrf.mxu0
    %2055 = vdwg.mxu0
    %2056 = vrot.lane.b32.xlu0 %v744, 112
    %v2057 = vpop.permute.xlu0 %2056
    %v2060 = vsel %vm750, %v1523, 0
    %2062 = vmatprep.subr.mxu0 0.0
    %2063 = vmatpush1.msra.mxu0 0.0
    %2064 = vmatprep.subr.mxu0 0.0
    %2065 = vmatpush1.msra.mxu0 0.0
    %2066 = vmatprep.subr.mxu0 0.0
    %2067 = vmatpush1.msra.mxu0 0.0
    %2068 = vmatprep.subr.mxu0 0.0
    %2069 = vmatpush1.msra.mxu0 0.0
    %2070 = vmatprep.subr.mxu0 0.0
    %2071 = vmatpush1.msra.mxu0 0.0
    %2072 = vmatprep.subr.mxu0 0.0
    %2073 = vmatpush1.msra.mxu0 0.0
    %2074 = vmatprep.subr.mxu0 0.0
    %2075 = vmatpush1.msra.mxu0 0.0
    %2076 = vmatprep.subr.mxu0 0.0
    %2077 = vmatpush1.msra.mxu0 0.0
    %2078 = vmatprep.subr.mxu0 0.0
    %2079 = vmatpush1.msra.mxu0 0.0
    %2080 = vmatprep.subr.mxu0 0.0
    %2081 = vmatpush1.msra.mxu0 0.0
    %2082 = vmatprep.subr.mxu0 0.0
    %2083 = vmatpush1.msra.mxu0 0.0
    %2084 = vmatprep.subr.mxu0 0.0
    %2085 = vmatpush1.msra.mxu0 0.0
    %2086 = vmatprep.subr.mxu0 0.0
    %2087 = vmatpush1.msra.mxu0 0.0
    %2088 = vmatprep.subr.mxu0 0.0
    %2089 = vmatpush1.msra.mxu0 0.0
    %2090 = vmatprep.subr.mxu0 0.0
    %2091 = vmatpush1.msra.mxu0 0.0
    %2092 = vmatprep.subr.mxu0 0.0
    %2093 = vmatpush1.msra.mxu0 %v2057
    %2094 = vmatprep.subr.mxu0 0.0
    %2095 = vmatpush2.msra.mxu0 0.0
    %2096 = vmatprep.subr.mxu0 0.0
    %2097 = vmatpush2.msra.mxu0 0.0
    %2098 = vmatprep.subr.mxu0 0.0
    %2099 = vmatpush2.msra.mxu0 0.0
    %2100 = vmatprep.subr.mxu0 0.0
    %2101 = vmatpush2.msra.mxu0 0.0
    %2102 = vmatprep.subr.mxu0 0.0
    %2103 = vmatpush2.msra.mxu0 0.0
    %2104 = vmatprep.subr.mxu0 0.0
    %2105 = vmatpush2.msra.mxu0 0.0
    %2106 = vmatprep.subr.mxu0 0.0
    %2107 = vmatpush2.msra.mxu0 0.0
    %2108 = vmatprep.subr.mxu0 0.0
    %2109 = vmatpush2.msra.mxu0 0.0
    %2110 = vmatprep.subr.mxu0 0.0
    %2111 = vmatpush2.msra.mxu0 0.0
    %2112 = vmatprep.subr.mxu0 0.0
    %2113 = vmatpush2.msra.mxu0 0.0
    %2114 = vmatprep.subr.mxu0 0.0
    %2115 = vmatpush2.msra.mxu0 0.0
    %2116 = vmatprep.subr.mxu0 0.0
    %2117 = vmatpush2.msra.mxu0 0.0
    %2118 = vmatprep.subr.mxu0 0.0
    %2119 = vmatpush2.msra.mxu0 0.0
    %2120 = vmatprep.subr.mxu0 0.0
    %2121 = vmatpush2.msra.mxu0 0.0
    %2122 = vmatprep.subr.mxu0 0.0
    %2123 = vmatpush2.msra.mxu0 0.0
    %2124 = vmatprep.subr.mxu0 0.0
    %2125 = vmatpush2.msra.mxu0 0.0
    %2126 = vmatprep.mubr.f32.mxu0 0.0
    %2127 = vmatmul.mubr.f32.gmra.mxu0 %v2060
    %v2128 = vpop.f32.mrf.mxu0
    %v2129 = vadd.f32 0.0, %v2128
    %v2130 = vpop.f32.mrf.mxu0
    %2131 = vdwg.mxu0
    %v2132 = vld [vmem:[%s4] sm:$0xff]
    %v2133 = vld [vmem:[%s4 + $0x8] sm:$0xff]
    %v2134 = vld [vmem:[%s4 + $0x10] sm:$0xff]
    %v2135 = vld [vmem:[%s4 + $0x18] sm:$0xff]
    %v2136 = vld [vmem:[%s4 + $0x20] sm:$0xff]
    %v2137 = vld [vmem:[%s4 + $0x28] sm:$0xff]
    %v2138 = vld [vmem:[%s4 + $0x30] sm:$0xff]
    %v2139 = vld [vmem:[%s4 + $0x38] sm:$0xff]
    %v2141 = vsel %vm750, %v1597, 0
    %2143 = vmatprep.subr.mxu0 0.0
    %2144 = vmatpush1.msra.mxu0 0.0
    %2145 = vmatprep.subr.mxu0 0.0
    %2146 = vmatpush1.msra.mxu0 0.0
    %2147 = vmatprep.subr.mxu0 0.0
    %2148 = vmatpush1.msra.mxu0 0.0
    %2149 = vmatprep.subr.mxu0 0.0
    %2150 = vmatpush1.msra.mxu0 0.0
    %2151 = vmatprep.subr.mxu0 0.0
    %2152 = vmatpush1.msra.mxu0 0.0
    %2153 = vmatprep.subr.mxu0 0.0
    %2154 = vmatpush1.msra.mxu0 0.0
    %2155 = vmatprep.subr.mxu0 0.0
    %2156 = vmatpush1.msra.mxu0 0.0
    %2157 = vmatprep.subr.mxu0 0.0
    %2158 = vmatpush1.msra.mxu0 0.0
    %2159 = vmatprep.subr.mxu0 0.0
    %2160 = vmatpush1.msra.mxu0 0.0
    %2161 = vmatprep.subr.mxu0 0.0
    %2162 = vmatpush1.msra.mxu0 0.0
    %2163 = vmatprep.subr.mxu0 0.0
    %2164 = vmatpush1.msra.mxu0 0.0
    %2165 = vmatprep.subr.mxu0 0.0
    %2166 = vmatpush1.msra.mxu0 0.0
    %2167 = vmatprep.subr.mxu0 0.0
    %2168 = vmatpush1.msra.mxu0 0.0
    %2169 = vmatprep.subr.mxu0 0.0
    %2170 = vmatpush1.msra.mxu0 0.0
    %2171 = vmatprep.subr.mxu0 0.0
    %2172 = vmatpush1.msra.mxu0 0.0
    %2173 = vmatprep.subr.mxu0 0.0
    %2174 = vmatpush1.msra.mxu0 %v2132
    %2175 = vmatprep.subr.mxu0 0.0
    %2176 = vmatpush2.msra.mxu0 0.0
    %2177 = vmatprep.subr.mxu0 0.0
    %2178 = vmatpush2.msra.mxu0 0.0
    %2179 = vmatprep.subr.mxu0 0.0
    %2180 = vmatpush2.msra.mxu0 0.0
    %2181 = vmatprep.subr.mxu0 0.0
    %2182 = vmatpush2.msra.mxu0 0.0
    %2183 = vmatprep.subr.mxu0 0.0
    %2184 = vmatpush2.msra.mxu0 0.0
    %2185 = vmatprep.subr.mxu0 0.0
    %2186 = vmatpush2.msra.mxu0 0.0
    %2187 = vmatprep.subr.mxu0 0.0
    %2188 = vmatpush2.msra.mxu0 0.0
    %2189 = vmatprep.subr.mxu0 0.0
    %2190 = vmatpush2.msra.mxu0 0.0
    %2191 = vmatprep.subr.mxu0 0.0
    %2192 = vmatpush2.msra.mxu0 0.0
    %2193 = vmatprep.subr.mxu0 0.0
    %2194 = vmatpush2.msra.mxu0 0.0
    %2195 = vmatprep.subr.mxu0 0.0
    %2196 = vmatpush2.msra.mxu0 0.0
    %2197 = vmatprep.subr.mxu0 0.0
    %2198 = vmatpush2.msra.mxu0 0.0
    %2199 = vmatprep.subr.mxu0 0.0
    %2200 = vmatpush2.msra.mxu0 0.0
    %2201 = vmatprep.subr.mxu0 0.0
    %2202 = vmatpush2.msra.mxu0 0.0
    %2203 = vmatprep.subr.mxu0 0.0
    %2204 = vmatpush2.msra.mxu0 0.0
    %2205 = vmatprep.subr.mxu0 0.0
    %2206 = vmatpush2.msra.mxu0 0.0
    %2207 = vmatprep.mubr.f32.mxu0 0.0
    %2208 = vmatmul.mubr.f32.gmra.mxu0 %v2141
    %v2209 = vpop.f32.mrf.mxu0
    %v2210 = vadd.f32 0.0, %v2209
    %v2211 = vpop.f32.mrf.mxu0
    %2212 = vdwg.mxu0
    %v2214 = vsel %vm750, %v1673, 0
    %2216 = vmatprep.subr.mxu0 0.0
    %2217 = vmatpush1.msra.mxu0 0.0
    %2218 = vmatprep.subr.mxu0 0.0
    %2219 = vmatpush1.msra.mxu0 0.0
    %2220 = vmatprep.subr.mxu0 0.0
    %2221 = vmatpush1.msra.mxu0 0.0
    %2222 = vmatprep.subr.mxu0 0.0
    %2223 = vmatpush1.msra.mxu0 0.0
    %2224 = vmatprep.subr.mxu0 0.0
    %2225 = vmatpush1.msra.mxu0 0.0
    %2226 = vmatprep.subr.mxu0 0.0
    %2227 = vmatpush1.msra.mxu0 0.0
    %2228 = vmatprep.subr.mxu0 0.0
    %2229 = vmatpush1.msra.mxu0 0.0
    %2230 = vmatprep.subr.mxu0 0.0
    %2231 = vmatpush1.msra.mxu0 0.0
    %2232 = vmatprep.subr.mxu0 0.0
    %2233 = vmatpush1.msra.mxu0 0.0
    %2234 = vmatprep.subr.mxu0 0.0
    %2235 = vmatpush1.msra.mxu0 0.0
    %2236 = vmatprep.subr.mxu0 0.0
    %2237 = vmatpush1.msra.mxu0 0.0
    %2238 = vmatprep.subr.mxu0 0.0
    %2239 = vmatpush1.msra.mxu0 0.0
    %2240 = vmatprep.subr.mxu0 0.0
    %2241 = vmatpush1.msra.mxu0 0.0
    %2242 = vmatprep.subr.mxu0 0.0
    %2243 = vmatpush1.msra.mxu0 0.0
    %2244 = vmatprep.subr.mxu0 0.0
    %2245 = vmatpush1.msra.mxu0 0.0
    %2246 = vmatprep.subr.mxu0 0.0
    %2247 = vmatpush1.msra.mxu0 %v2133
    %2248 = vmatprep.subr.mxu0 0.0
    %2249 = vmatpush2.msra.mxu0 0.0
    %2250 = vmatprep.subr.mxu0 0.0
    %2251 = vmatpush2.msra.mxu0 0.0
    %2252 = vmatprep.subr.mxu0 0.0
    %2253 = vmatpush2.msra.mxu0 0.0
    %2254 = vmatprep.subr.mxu0 0.0
    %2255 = vmatpush2.msra.mxu0 0.0
    %2256 = vmatprep.subr.mxu0 0.0
    %2257 = vmatpush2.msra.mxu0 0.0
    %2258 = vmatprep.subr.mxu0 0.0
    %2259 = vmatpush2.msra.mxu0 0.0
    %2260 = vmatprep.subr.mxu0 0.0
    %2261 = vmatpush2.msra.mxu0 0.0
    %2262 = vmatprep.subr.mxu0 0.0
    %2263 = vmatpush2.msra.mxu0 0.0
    %2264 = vmatprep.subr.mxu0 0.0
    %2265 = vmatpush2.msra.mxu0 0.0
    %2266 = vmatprep.subr.mxu0 0.0
    %2267 = vmatpush2.msra.mxu0 0.0
    %2268 = vmatprep.subr.mxu0 0.0
    %2269 = vmatpush2.msra.mxu0 0.0
    %2270 = vmatprep.subr.mxu0 0.0
    %2271 = vmatpush2.msra.mxu0 0.0
    %2272 = vmatprep.subr.mxu0 0.0
    %2273 = vmatpush2.msra.mxu0 0.0
    %2274 = vmatprep.subr.mxu0 0.0
    %2275 = vmatpush2.msra.mxu0 0.0
    %2276 = vmatprep.subr.mxu0 0.0
    %2277 = vmatpush2.msra.mxu0 0.0
    %2278 = vmatprep.subr.mxu0 0.0
    %2279 = vmatpush2.msra.mxu0 0.0
    %2280 = vmatprep.mubr.f32.mxu0 0.0
    %2281 = vmatmul.mubr.f32.gmra.mxu0 %v2214
    %v2282 = vpop.f32.mrf.mxu0
    %v2283 = vadd.f32 0.0, %v2282
    %v2284 = vpop.f32.mrf.mxu0
    %2285 = vdwg.mxu0
    %v2287 = vsel %vm750, %v1749, 0
    %2289 = vmatprep.subr.mxu0 0.0
    %2290 = vmatpush1.msra.mxu0 0.0
    %2291 = vmatprep.subr.mxu0 0.0
    %2292 = vmatpush1.msra.mxu0 0.0
    %2293 = vmatprep.subr.mxu0 0.0
    %2294 = vmatpush1.msra.mxu0 0.0
    %2295 = vmatprep.subr.mxu0 0.0
    %2296 = vmatpush1.msra.mxu0 0.0
    %2297 = vmatprep.subr.mxu0 0.0
    %2298 = vmatpush1.msra.mxu0 0.0
    %2299 = vmatprep.subr.mxu0 0.0
    %2300 = vmatpush1.msra.mxu0 0.0
    %2301 = vmatprep.subr.mxu0 0.0
    %2302 = vmatpush1.msra.mxu0 0.0
    %2303 = vmatprep.subr.mxu0 0.0
    %2304 = vmatpush1.msra.mxu0 0.0
    %2305 = vmatprep.subr.mxu0 0.0
    %2306 = vmatpush1.msra.mxu0 0.0
    %2307 = vmatprep.subr.mxu0 0.0
    %2308 = vmatpush1.msra.mxu0 0.0
    %2309 = vmatprep.subr.mxu0 0.0
    %2310 = vmatpush1.msra.mxu0 0.0
    %2311 = vmatprep.subr.mxu0 0.0
    %2312 = vmatpush1.msra.mxu0 0.0
    %2313 = vmatprep.subr.mxu0 0.0
    %2314 = vmatpush1.msra.mxu0 0.0
    %2315 = vmatprep.subr.mxu0 0.0
    %2316 = vmatpush1.msra.mxu0 0.0
    %2317 = vmatprep.subr.mxu0 0.0
    %2318 = vmatpush1.msra.mxu0 0.0
    %2319 = vmatprep.subr.mxu0 0.0
    %2320 = vmatpush1.msra.mxu0 %v2134
    %2321 = vmatprep.subr.mxu0 0.0
    %2322 = vmatpush2.msra.mxu0 0.0
    %2323 = vmatprep.subr.mxu0 0.0
    %2324 = vmatpush2.msra.mxu0 0.0
    %2325 = vmatprep.subr.mxu0 0.0
    %2326 = vmatpush2.msra.mxu0 0.0
    %2327 = vmatprep.subr.mxu0 0.0
    %2328 = vmatpush2.msra.mxu0 0.0
    %2329 = vmatprep.subr.mxu0 0.0
    %2330 = vmatpush2.msra.mxu0 0.0
    %2331 = vmatprep.subr.mxu0 0.0
    %2332 = vmatpush2.msra.mxu0 0.0
    %2333 = vmatprep.subr.mxu0 0.0
    %2334 = vmatpush2.msra.mxu0 0.0
    %2335 = vmatprep.subr.mxu0 0.0
    %2336 = vmatpush2.msra.mxu0 0.0
    %2337 = vmatprep.subr.mxu0 0.0
    %2338 = vmatpush2.msra.mxu0 0.0
    %2339 = vmatprep.subr.mxu0 0.0
    %2340 = vmatpush2.msra.mxu0 0.0
    %2341 = vmatprep.subr.mxu0 0.0
    %2342 = vmatpush2.msra.mxu0 0.0
    %2343 = vmatprep.subr.mxu0 0.0
    %2344 = vmatpush2.msra.mxu0 0.0
    %2345 = vmatprep.subr.mxu0 0.0
    %2346 = vmatpush2.msra.mxu0 0.0
    %2347 = vmatprep.subr.mxu0 0.0
    %2348 = vmatpush2.msra.mxu0 0.0
    %2349 = vmatprep.subr.mxu0 0.0
    %2350 = vmatpush2.msra.mxu0 0.0
    %2351 = vmatprep.subr.mxu0 0.0
    %2352 = vmatpush2.msra.mxu0 0.0
    %2353 = vmatprep.mubr.f32.mxu0 0.0
    %2354 = vmatmul.mubr.f32.gmra.mxu0 %v2287
    %v2355 = vpop.f32.mrf.mxu0
    %v2356 = vadd.f32 0.0, %v2355
    %v2357 = vpop.f32.mrf.mxu0
    %2358 = vdwg.mxu0
    %v2360 = vsel %vm750, %v1825, 0
    %2362 = vmatprep.subr.mxu0 0.0
    %2363 = vmatpush1.msra.mxu0 0.0
    %2364 = vmatprep.subr.mxu0 0.0
    %2365 = vmatpush1.msra.mxu0 0.0
    %2366 = vmatprep.subr.mxu0 0.0
    %2367 = vmatpush1.msra.mxu0 0.0
    %2368 = vmatprep.subr.mxu0 0.0
    %2369 = vmatpush1.msra.mxu0 0.0
    %2370 = vmatprep.subr.mxu0 0.0
    %2371 = vmatpush1.msra.mxu0 0.0
    %2372 = vmatprep.subr.mxu0 0.0
    %2373 = vmatpush1.msra.mxu0 0.0
    %2374 = vmatprep.subr.mxu0 0.0
    %2375 = vmatpush1.msra.mxu0 0.0
    %2376 = vmatprep.subr.mxu0 0.0
    %2377 = vmatpush1.msra.mxu0 0.0
    %2378 = vmatprep.subr.mxu0 0.0
    %2379 = vmatpush1.msra.mxu0 0.0
    %2380 = vmatprep.subr.mxu0 0.0
    %2381 = vmatpush1.msra.mxu0 0.0
    %2382 = vmatprep.subr.mxu0 0.0
    %2383 = vmatpush1.msra.mxu0 0.0
    %2384 = vmatprep.subr.mxu0 0.0
    %2385 = vmatpush1.msra.mxu0 0.0
    %2386 = vmatprep.subr.mxu0 0.0
    %2387 = vmatpush1.msra.mxu0 0.0
    %2388 = vmatprep.subr.mxu0 0.0
    %2389 = vmatpush1.msra.mxu0 0.0
    %2390 = vmatprep.subr.mxu0 0.0
    %2391 = vmatpush1.msra.mxu0 0.0
    %2392 = vmatprep.subr.mxu0 0.0
    %2393 = vmatpush1.msra.mxu0 %v2135
    %2394 = vmatprep.subr.mxu0 0.0
    %2395 = vmatpush2.msra.mxu0 0.0
    %2396 = vmatprep.subr.mxu0 0.0
    %2397 = vmatpush2.msra.mxu0 0.0
    %2398 = vmatprep.subr.mxu0 0.0
    %2399 = vmatpush2.msra.mxu0 0.0
    %2400 = vmatprep.subr.mxu0 0.0
    %2401 = vmatpush2.msra.mxu0 0.0
    %2402 = vmatprep.subr.mxu0 0.0
    %2403 = vmatpush2.msra.mxu0 0.0
    %2404 = vmatprep.subr.mxu0 0.0
    %2405 = vmatpush2.msra.mxu0 0.0
    %2406 = vmatprep.subr.mxu0 0.0
    %2407 = vmatpush2.msra.mxu0 0.0
    %2408 = vmatprep.subr.mxu0 0.0
    %2409 = vmatpush2.msra.mxu0 0.0
    %2410 = vmatprep.subr.mxu0 0.0
    %2411 = vmatpush2.msra.mxu0 0.0
    %2412 = vmatprep.subr.mxu0 0.0
    %2413 = vmatpush2.msra.mxu0 0.0
    %2414 = vmatprep.subr.mxu0 0.0
    %2415 = vmatpush2.msra.mxu0 0.0
    %2416 = vmatprep.subr.mxu0 0.0
    %2417 = vmatpush2.msra.mxu0 0.0
    %2418 = vmatprep.subr.mxu0 0.0
    %2419 = vmatpush2.msra.mxu0 0.0
    %2420 = vmatprep.subr.mxu0 0.0
    %2421 = vmatpush2.msra.mxu0 0.0
    %2422 = vmatprep.subr.mxu0 0.0
    %2423 = vmatpush2.msra.mxu0 0.0
    %2424 = vmatprep.subr.mxu0 0.0
    %2425 = vmatpush2.msra.mxu0 0.0
    %2426 = vmatprep.mubr.f32.mxu0 0.0
    %2427 = vmatmul.mubr.f32.gmra.mxu0 %v2360
    %v2428 = vpop.f32.mrf.mxu0
    %v2429 = vadd.f32 0.0, %v2428
    %v2430 = vpop.f32.mrf.mxu0
    %2431 = vdwg.mxu0
    %v2433 = vsel %vm750, %v1901, 0
    %2435 = vmatprep.subr.mxu0 0.0
    %2436 = vmatpush1.msra.mxu0 0.0
    %2437 = vmatprep.subr.mxu0 0.0
    %2438 = vmatpush1.msra.mxu0 0.0
    %2439 = vmatprep.subr.mxu0 0.0
    %2440 = vmatpush1.msra.mxu0 0.0
    %2441 = vmatprep.subr.mxu0 0.0
    %2442 = vmatpush1.msra.mxu0 0.0
    %2443 = vmatprep.subr.mxu0 0.0
    %2444 = vmatpush1.msra.mxu0 0.0
    %2445 = vmatprep.subr.mxu0 0.0
    %2446 = vmatpush1.msra.mxu0 0.0
    %2447 = vmatprep.subr.mxu0 0.0
    %2448 = vmatpush1.msra.mxu0 0.0
    %2449 = vmatprep.subr.mxu0 0.0
    %2450 = vmatpush1.msra.mxu0 0.0
    %2451 = vmatprep.subr.mxu0 0.0
    %2452 = vmatpush1.msra.mxu0 0.0
    %2453 = vmatprep.subr.mxu0 0.0
    %2454 = vmatpush1.msra.mxu0 0.0
    %2455 = vmatprep.subr.mxu0 0.0
    %2456 = vmatpush1.msra.mxu0 0.0
    %2457 = vmatprep.subr.mxu0 0.0
    %2458 = vmatpush1.msra.mxu0 0.0
    %2459 = vmatprep.subr.mxu0 0.0
    %2460 = vmatpush1.msra.mxu0 0.0
    %2461 = vmatprep.subr.mxu0 0.0
    %2462 = vmatpush1.msra.mxu0 0.0
    %2463 = vmatprep.subr.mxu0 0.0
    %2464 = vmatpush1.msra.mxu0 0.0
    %2465 = vmatprep.subr.mxu0 0.0
    %2466 = vmatpush1.msra.mxu0 %v2136
    %2467 = vmatprep.subr.mxu0 0.0
    %2468 = vmatpush2.msra.mxu0 0.0
    %2469 = vmatprep.subr.mxu0 0.0
    %2470 = vmatpush2.msra.mxu0 0.0
    %2471 = vmatprep.subr.mxu0 0.0
    %2472 = vmatpush2.msra.mxu0 0.0
    %2473 = vmatprep.subr.mxu0 0.0
    %2474 = vmatpush2.msra.mxu0 0.0
    %2475 = vmatprep.subr.mxu0 0.0
    %2476 = vmatpush2.msra.mxu0 0.0
    %2477 = vmatprep.subr.mxu0 0.0
    %2478 = vmatpush2.msra.mxu0 0.0
    %2479 = vmatprep.subr.mxu0 0.0
    %2480 = vmatpush2.msra.mxu0 0.0
    %2481 = vmatprep.subr.mxu0 0.0
    %2482 = vmatpush2.msra.mxu0 0.0
    %2483 = vmatprep.subr.mxu0 0.0
    %2484 = vmatpush2.msra.mxu0 0.0
    %2485 = vmatprep.subr.mxu0 0.0
    %2486 = vmatpush2.msra.mxu0 0.0
    %2487 = vmatprep.subr.mxu0 0.0
    %2488 = vmatpush2.msra.mxu0 0.0
    %2489 = vmatprep.subr.mxu0 0.0
    %2490 = vmatpush2.msra.mxu0 0.0
    %2491 = vmatprep.subr.mxu0 0.0
    %2492 = vmatpush2.msra.mxu0 0.0
    %2493 = vmatprep.subr.mxu0 0.0
    %2494 = vmatpush2.msra.mxu0 0.0
    %2495 = vmatprep.subr.mxu0 0.0
    %2496 = vmatpush2.msra.mxu0 0.0
    %2497 = vmatprep.subr.mxu0 0.0
    %2498 = vmatpush2.msra.mxu0 0.0
    %2499 = vmatprep.mubr.f32.mxu0 0.0
    %2500 = vmatmul.mubr.f32.gmra.mxu0 %v2433
    %v2501 = vpop.f32.mrf.mxu0
    %v2502 = vadd.f32 0.0, %v2501
    %v2503 = vpop.f32.mrf.mxu0
    %2504 = vdwg.mxu0
    %v2506 = vsel %vm750, %v1977, 0
    %2508 = vmatprep.subr.mxu0 0.0
    %2509 = vmatpush1.msra.mxu0 0.0
    %2510 = vmatprep.subr.mxu0 0.0
    %2511 = vmatpush1.msra.mxu0 0.0
    %2512 = vmatprep.subr.mxu0 0.0
    %2513 = vmatpush1.msra.mxu0 0.0
    %2514 = vmatprep.subr.mxu0 0.0
    %2515 = vmatpush1.msra.mxu0 0.0
    %2516 = vmatprep.subr.mxu0 0.0
    %2517 = vmatpush1.msra.mxu0 0.0
    %2518 = vmatprep.subr.mxu0 0.0
    %2519 = vmatpush1.msra.mxu0 0.0
    %2520 = vmatprep.subr.mxu0 0.0
    %2521 = vmatpush1.msra.mxu0 0.0
    %2522 = vmatprep.subr.mxu0 0.0
    %2523 = vmatpush1.msra.mxu0 0.0
    %2524 = vmatprep.subr.mxu0 0.0
    %2525 = vmatpush1.msra.mxu0 0.0
    %2526 = vmatprep.subr.mxu0 0.0
    %2527 = vmatpush1.msra.mxu0 0.0
    %2528 = vmatprep.subr.mxu0 0.0
    %2529 = vmatpush1.msra.mxu0 0.0
    %2530 = vmatprep.subr.mxu0 0.0
    %2531 = vmatpush1.msra.mxu0 0.0
    %2532 = vmatprep.subr.mxu0 0.0
    %2533 = vmatpush1.msra.mxu0 0.0
    %2534 = vmatprep.subr.mxu0 0.0
    %2535 = vmatpush1.msra.mxu0 0.0
    %2536 = vmatprep.subr.mxu0 0.0
    %2537 = vmatpush1.msra.mxu0 0.0
    %2538 = vmatprep.subr.mxu0 0.0
    %2539 = vmatpush1.msra.mxu0 %v2137
    %2540 = vmatprep.subr.mxu0 0.0
    %2541 = vmatpush2.msra.mxu0 0.0
    %2542 = vmatprep.subr.mxu0 0.0
    %2543 = vmatpush2.msra.mxu0 0.0
    %2544 = vmatprep.subr.mxu0 0.0
    %2545 = vmatpush2.msra.mxu0 0.0
    %2546 = vmatprep.subr.mxu0 0.0
    %2547 = vmatpush2.msra.mxu0 0.0
    %2548 = vmatprep.subr.mxu0 0.0
    %2549 = vmatpush2.msra.mxu0 0.0
    %2550 = vmatprep.subr.mxu0 0.0
    %2551 = vmatpush2.msra.mxu0 0.0
    %2552 = vmatprep.subr.mxu0 0.0
    %2553 = vmatpush2.msra.mxu0 0.0
    %2554 = vmatprep.subr.mxu0 0.0
    %2555 = vmatpush2.msra.mxu0 0.0
    %2556 = vmatprep.subr.mxu0 0.0
    %2557 = vmatpush2.msra.mxu0 0.0
    %2558 = vmatprep.subr.mxu0 0.0
    %2559 = vmatpush2.msra.mxu0 0.0
    %2560 = vmatprep.subr.mxu0 0.0
    %2561 = vmatpush2.msra.mxu0 0.0
    %2562 = vmatprep.subr.mxu0 0.0
    %2563 = vmatpush2.msra.mxu0 0.0
    %2564 = vmatprep.subr.mxu0 0.0
    %2565 = vmatpush2.msra.mxu0 0.0
    %2566 = vmatprep.subr.mxu0 0.0
    %2567 = vmatpush2.msra.mxu0 0.0
    %2568 = vmatprep.subr.mxu0 0.0
    %2569 = vmatpush2.msra.mxu0 0.0
    %2570 = vmatprep.subr.mxu0 0.0
    %2571 = vmatpush2.msra.mxu0 0.0
    %2572 = vmatprep.mubr.f32.mxu0 0.0
    %2573 = vmatmul.mubr.f32.gmra.mxu0 %v2506
    %v2574 = vpop.f32.mrf.mxu0
    %v2575 = vadd.f32 0.0, %v2574
    %v2576 = vpop.f32.mrf.mxu0
    %2577 = vdwg.mxu0
    %v2579 = vsel %vm750, %v2053, 0
    %2581 = vmatprep.subr.mxu0 0.0
    %2582 = vmatpush1.msra.mxu0 0.0
    %2583 = vmatprep.subr.mxu0 0.0
    %2584 = vmatpush1.msra.mxu0 0.0
    %2585 = vmatprep.subr.mxu0 0.0
    %2586 = vmatpush1.msra.mxu0 0.0
    %2587 = vmatprep.subr.mxu0 0.0
    %2588 = vmatpush1.msra.mxu0 0.0
    %2589 = vmatprep.subr.mxu0 0.0
    %2590 = vmatpush1.msra.mxu0 0.0
    %2591 = vmatprep.subr.mxu0 0.0
    %2592 = vmatpush1.msra.mxu0 0.0
    %2593 = vmatprep.subr.mxu0 0.0
    %2594 = vmatpush1.msra.mxu0 0.0
    %2595 = vmatprep.subr.mxu0 0.0
    %2596 = vmatpush1.msra.mxu0 0.0
    %2597 = vmatprep.subr.mxu0 0.0
    %2598 = vmatpush1.msra.mxu0 0.0
    %2599 = vmatprep.subr.mxu0 0.0
    %2600 = vmatpush1.msra.mxu0 0.0
    %2601 = vmatprep.subr.mxu0 0.0
    %2602 = vmatpush1.msra.mxu0 0.0
    %2603 = vmatprep.subr.mxu0 0.0
    %2604 = vmatpush1.msra.mxu0 0.0
    %2605 = vmatprep.subr.mxu0 0.0
    %2606 = vmatpush1.msra.mxu0 0.0
    %2607 = vmatprep.subr.mxu0 0.0
    %2608 = vmatpush1.msra.mxu0 0.0
    %2609 = vmatprep.subr.mxu0 0.0
    %2610 = vmatpush1.msra.mxu0 0.0
    %2611 = vmatprep.subr.mxu0 0.0
    %2612 = vmatpush1.msra.mxu0 %v2138
    %2613 = vmatprep.subr.mxu0 0.0
    %2614 = vmatpush2.msra.mxu0 0.0
    %2615 = vmatprep.subr.mxu0 0.0
    %2616 = vmatpush2.msra.mxu0 0.0
    %2617 = vmatprep.subr.mxu0 0.0
    %2618 = vmatpush2.msra.mxu0 0.0
    %2619 = vmatprep.subr.mxu0 0.0
    %2620 = vmatpush2.msra.mxu0 0.0
    %2621 = vmatprep.subr.mxu0 0.0
    %2622 = vmatpush2.msra.mxu0 0.0
    %2623 = vmatprep.subr.mxu0 0.0
    %2624 = vmatpush2.msra.mxu0 0.0
    %2625 = vmatprep.subr.mxu0 0.0
    %2626 = vmatpush2.msra.mxu0 0.0
    %2627 = vmatprep.subr.mxu0 0.0
    %2628 = vmatpush2.msra.mxu0 0.0
    %2629 = vmatprep.subr.mxu0 0.0
    %2630 = vmatpush2.msra.mxu0 0.0
    %2631 = vmatprep.subr.mxu0 0.0
    %2632 = vmatpush2.msra.mxu0 0.0
    %2633 = vmatprep.subr.mxu0 0.0
    %2634 = vmatpush2.msra.mxu0 0.0
    %2635 = vmatprep.subr.mxu0 0.0
    %2636 = vmatpush2.msra.mxu0 0.0
    %2637 = vmatprep.subr.mxu0 0.0
    %2638 = vmatpush2.msra.mxu0 0.0
    %2639 = vmatprep.subr.mxu0 0.0
    %2640 = vmatpush2.msra.mxu0 0.0
    %2641 = vmatprep.subr.mxu0 0.0
    %2642 = vmatpush2.msra.mxu0 0.0
    %2643 = vmatprep.subr.mxu0 0.0
    %2644 = vmatpush2.msra.mxu0 0.0
    %2645 = vmatprep.mubr.f32.mxu0 0.0
    %2646 = vmatmul.mubr.f32.gmra.mxu0 %v2579
    %v2647 = vpop.f32.mrf.mxu0
    %v2648 = vadd.f32 0.0, %v2647
    %v2649 = vpop.f32.mrf.mxu0
    %2650 = vdwg.mxu0
    %v2652 = vsel %vm750, %v2129, 0
    %2654 = vmatprep.subr.mxu0 0.0
    %2655 = vmatpush1.msra.mxu0 0.0
    %2656 = vmatprep.subr.mxu0 0.0
    %2657 = vmatpush1.msra.mxu0 0.0
    %2658 = vmatprep.subr.mxu0 0.0
    %2659 = vmatpush1.msra.mxu0 0.0
    %2660 = vmatprep.subr.mxu0 0.0
    %2661 = vmatpush1.msra.mxu0 0.0
    %2662 = vmatprep.subr.mxu0 0.0
    %2663 = vmatpush1.msra.mxu0 0.0
    %2664 = vmatprep.subr.mxu0 0.0
    %2665 = vmatpush1.msra.mxu0 0.0
    %2666 = vmatprep.subr.mxu0 0.0
    %2667 = vmatpush1.msra.mxu0 0.0
    %2668 = vmatprep.subr.mxu0 0.0
    %2669 = vmatpush1.msra.mxu0 0.0
    %2670 = vmatprep.subr.mxu0 0.0
    %2671 = vmatpush1.msra.mxu0 0.0
    %2672 = vmatprep.subr.mxu0 0.0
    %2673 = vmatpush1.msra.mxu0 0.0
    %2674 = vmatprep.subr.mxu0 0.0
    %2675 = vmatpush1.msra.mxu0 0.0
    %2676 = vmatprep.subr.mxu0 0.0
    %2677 = vmatpush1.msra.mxu0 0.0
    %2678 = vmatprep.subr.mxu0 0.0
    %2679 = vmatpush1.msra.mxu0 0.0
    %2680 = vmatprep.subr.mxu0 0.0
    %2681 = vmatpush1.msra.mxu0 0.0
    %2682 = vmatprep.subr.mxu0 0.0
    %2683 = vmatpush1.msra.mxu0 0.0
    %2684 = vmatprep.subr.mxu0 0.0
    %2685 = vmatpush1.msra.mxu0 %v2139
    %2686 = vmatprep.subr.mxu0 0.0
    %2687 = vmatpush2.msra.mxu0 0.0
    %2688 = vmatprep.subr.mxu0 0.0
    %2689 = vmatpush2.msra.mxu0 0.0
    %2690 = vmatprep.subr.mxu0 0.0
    %2691 = vmatpush2.msra.mxu0 0.0
    %2692 = vmatprep.subr.mxu0 0.0
    %2693 = vmatpush2.msra.mxu0 0.0
    %2694 = vmatprep.subr.mxu0 0.0
    %2695 = vmatpush2.msra.mxu0 0.0
    %2696 = vmatprep.subr.mxu0 0.0
    %2697 = vmatpush2.msra.mxu0 0.0
    %2698 = vmatprep.subr.mxu0 0.0
    %2699 = vmatpush2.msra.mxu0 0.0
    %2700 = vmatprep.subr.mxu0 0.0
    %2701 = vmatpush2.msra.mxu0 0.0
    %2702 = vmatprep.subr.mxu0 0.0
    %2703 = vmatpush2.msra.mxu0 0.0
    %2704 = vmatprep.subr.mxu0 0.0
    %2705 = vmatpush2.msra.mxu0 0.0
    %2706 = vmatprep.subr.mxu0 0.0
    %2707 = vmatpush2.msra.mxu0 0.0
    %2708 = vmatprep.subr.mxu0 0.0
    %2709 = vmatpush2.msra.mxu0 0.0
    %2710 = vmatprep.subr.mxu0 0.0
    %2711 = vmatpush2.msra.mxu0 0.0
    %2712 = vmatprep.subr.mxu0 0.0
    %2713 = vmatpush2.msra.mxu0 0.0
    %2714 = vmatprep.subr.mxu0 0.0
    %2715 = vmatpush2.msra.mxu0 0.0
    %2716 = vmatprep.subr.mxu0 0.0
    %2717 = vmatpush2.msra.mxu0 0.0
    %2718 = vmatprep.mubr.f32.mxu0 0.0
    %2719 = vmatmul.mubr.f32.gmra.mxu0 %v2652
    %v2720 = vpop.f32.mrf.mxu0
    %v2721 = vadd.f32 0.0, %v2720
    %v2722 = vpop.f32.mrf.mxu0
    %2723 = vdwg.mxu0
    %v2724 = vadd.f32 %v2210, %v2356
    %v2725 = vadd.f32 %v2283, %v2429
    %v2726 = vadd.f32 %v2724, %v2502
    %v2727 = vadd.f32 %v2725, %v2575
    %v2728 = vadd.f32 %v2726, %v2648
    %v2729 = vadd.f32 %v2727, %v2721
    %v2730 = vlaneseq
    %v2731 = vshrl.u32 %v2730, 7
    %v2732 = vsub.s32 0, %v2731
    %v2733 = vrot.slane %v31, %v2732
    %v2734 = vadd.f32 %v2728, %v2733
    %v2735 = vadd.f32 %v2729, %v2733
    %v2736 = vadd.f32 %v37, %v2734
    %v2737 = vadd.f32 %v38, %v2735
    %v2738 = vsel %vm39, %v2736, 0.0
    %2739 = vadd.xlane.f32.xlu0 %v2738
    %v2740 = vpop.xlane.xlu0 %2739
    %v2741 = vsel %vm39, %v2737, 0.0
    %2742 = vadd.xlane.f32.xlu0 %v2741
    %v2743 = vpop.xlane.xlu0 %2742
    %v2744 = vmul.f32 %v2740, %v46
    %v2745 = vmul.f32 %v2743, %v46
    %v2746 = vsub.f32 %v2736, %v2744
    %v2747 = vsub.f32 %v2737, %v2745
    %v2748 = vmul.f32 %v2746, %v2746
    %v2749 = vmul.f32 %v2747, %v2747
    %v2750 = vsel %vm39, %v2748, 0.0
    %2751 = vadd.xlane.f32.xlu0 %v2750
    %v2752 = vpop.xlane.xlu0 %2751
    %v2753 = vsel %vm39, %v2749, 0.0
    %2754 = vadd.xlane.f32.xlu0 %v2753
    %v2755 = vpop.xlane.xlu0 %2754
    %v2756 = vmul.f32 %v2752, 0.032258064
    %v2757 = vmul.f32 %v2755, 0.032258064
    %v2758 = vrsqrt.pop %v2756
    %v2759 = vmul.f32 %v2756, %v2758
    %vm2760 = vcmp.eq.f32.partialorder %v2756, inf
    %v2761 = vsel %vm2760, %v2756, %v2759
    %vm2762 = vcmp.eq.f32.partialorder %v2756, 0.0
    %v2763 = vand.u32 %v2756, 2147483648
    %v2764 = vsel %vm2762, %v2763, %v2761
    %v2765 = vrsqrt.pop %v2757
    %v2766 = vmul.f32 %v2757, %v2765
    %vm2767 = vcmp.eq.f32.partialorder %v2757, inf
    %v2768 = vsel %vm2767, %v2757, %v2766
    %vm2769 = vcmp.eq.f32.partialorder %v2757, 0.0
    %v2770 = vand.u32 %v2757, 2147483648
    %v2771 = vsel %vm2769, %v2770, %v2768
    %v2772 = vadd.f32 %v2764, 1e-06
    %v2773 = vadd.f32 %v2771, 1e-06
    %v2774 = vrcp.pop %v2772
    %v2775 = vrcp.pop %v2773
    %v2776 = vmul.f32 %v2746, %v2774
    %v2777 = vmul.f32 %v2747, %v2775
    %v2778 = vlaneseq
    %v2779 = vshrl.u32 %v2778, 7
    %v2780 = vsub.s32 0, %v2779
    %v2781 = vrot.slane %v35, %v2780
    %v2782 = vmul.f32 %v2781, %v2776
    %v2783 = vmul.f32 %v2781, %v2777
    %v2784 = vlaneseq
    %v2785 = vshrl.u32 %v2784, 7
    %v2786 = vsub.s32 0, %v2785
    %v2787 = vrot.slane %v36, %v2786
    %v2788 = vadd.f32 %v2782, %v2787
    %v2789 = vadd.f32 %v2783, %v2787
    %v2790 = vld [vmem:[%s5] sm:$0xff]
    %v2791 = vld [vmem:[%s5 + $0x8] sm:$0xff]
    %v2792 = vld [vmem:[%s5 + $0x10] sm:$0xff]
    %v2793 = vld [vmem:[%s5 + $0x18] sm:$0xff]
    %v2794 = vlaneseq
    %v2795 = vshrl.u32 %v2794, 7
    %v2796 = vsub.s32 0, %v2795
    %v2797 = vrot.slane %v30, %v2796
    %v2799 = vsel %vm39, %v2788, 0
    %v2802 = vsel %vm39, %v2789, 0
    %2804 = vmatprep.subr.mxu0 0.0
    %2805 = vmatpush1.msra.mxu0 0.0
    %2806 = vmatprep.subr.mxu0 0.0
    %2807 = vmatpush1.msra.mxu0 0.0
    %2808 = vmatprep.subr.mxu0 0.0
    %2809 = vmatpush1.msra.mxu0 0.0
    %2810 = vmatprep.subr.mxu0 0.0
    %2811 = vmatpush1.msra.mxu0 0.0
    %2812 = vmatprep.subr.mxu0 0.0
    %2813 = vmatpush1.msra.mxu0 0.0
    %2814 = vmatprep.subr.mxu0 0.0
    %2815 = vmatpush1.msra.mxu0 0.0
    %2816 = vmatprep.subr.mxu0 0.0
    %2817 = vmatpush1.msra.mxu0 0.0
    %2818 = vmatprep.subr.mxu0 0.0
    %2819 = vmatpush1.msra.mxu0 0.0
    %2820 = vmatprep.subr.mxu0 0.0
    %2821 = vmatpush1.msra.mxu0 0.0
    %2822 = vmatprep.subr.mxu0 0.0
    %2823 = vmatpush1.msra.mxu0 0.0
    %2824 = vmatprep.subr.mxu0 0.0
    %2825 = vmatpush1.msra.mxu0 0.0
    %2826 = vmatprep.subr.mxu0 0.0
    %2827 = vmatpush1.msra.mxu0 0.0
    %2828 = vmatprep.subr.mxu0 0.0
    %2829 = vmatpush1.msra.mxu0 %v2793
    %2830 = vmatprep.subr.mxu0 0.0
    %2831 = vmatpush1.msra.mxu0 %v2792
    %2832 = vmatprep.subr.mxu0 0.0
    %2833 = vmatpush1.msra.mxu0 %v2791
    %2834 = vmatprep.subr.mxu0 0.0
    %2835 = vmatpush1.msra.mxu0 %v2790
    %2836 = vmatprep.subr.mxu0 0.0
    %2837 = vmatpush2.msra.mxu0 0.0
    %2838 = vmatprep.subr.mxu0 0.0
    %2839 = vmatpush2.msra.mxu0 0.0
    %2840 = vmatprep.subr.mxu0 0.0
    %2841 = vmatpush2.msra.mxu0 0.0
    %2842 = vmatprep.subr.mxu0 0.0
    %2843 = vmatpush2.msra.mxu0 0.0
    %2844 = vmatprep.subr.mxu0 0.0
    %2845 = vmatpush2.msra.mxu0 0.0
    %2846 = vmatprep.subr.mxu0 0.0
    %2847 = vmatpush2.msra.mxu0 0.0
    %2848 = vmatprep.subr.mxu0 0.0
    %2849 = vmatpush2.msra.mxu0 0.0
    %2850 = vmatprep.subr.mxu0 0.0
    %2851 = vmatpush2.msra.mxu0 0.0
    %2852 = vmatprep.subr.mxu0 0.0
    %2853 = vmatpush2.msra.mxu0 0.0
    %2854 = vmatprep.subr.mxu0 0.0
    %2855 = vmatpush2.msra.mxu0 0.0
    %2856 = vmatprep.subr.mxu0 0.0
    %2857 = vmatpush2.msra.mxu0 0.0
    %2858 = vmatprep.subr.mxu0 0.0
    %2859 = vmatpush2.msra.mxu0 0.0
    %2860 = vmatprep.subr.mxu0 0.0
    %2861 = vmatpush2.msra.mxu0 0.0
    %2862 = vmatprep.subr.mxu0 0.0
    %2863 = vmatpush2.msra.mxu0 0.0
    %2864 = vmatprep.subr.mxu0 0.0
    %2865 = vmatpush2.msra.mxu0 0.0
    %2866 = vmatprep.subr.mxu0 0.0
    %2867 = vmatpush2.msra.mxu0 0.0
    %2868 = vmatprep.mubr.f32.mxu0 0.0
    %2869 = vmatmul.mubr.f32.gmra.mxu0 %v2799
    %v2870 = vpop.f32.mrf.mxu0
    %v2871 = vadd.f32 %v2797, %v2870
    %v2872 = vpop.f32.mrf.mxu0
    %2873 = vmatprep.mubr.f32.mxu0 0.0
    %2874 = vmatmul.mubr.f32.gmra.mxu0 %v2802
    %v2875 = vpop.f32.mrf.mxu0
    %v2876 = vadd.f32 %v2797, %v2875
    %v2877 = vpop.f32.mrf.mxu0
    %2878 = vdwg.mxu0
    %v2879 = vmax.f32 %v2871, 0.0
    %v2880 = vmax.f32 %v2876, 0.0
    %v2881 = vld [vmem:[%s6] sm:$0xff]
    %v2882 = vld [vmem:[%s6 + $0x8] sm:$0xff]
    %v2883 = vld [vmem:[%s6 + $0x10] sm:$0xff]
    %v2884 = vld [vmem:[%s6 + $0x18] sm:$0xff]
    %v2885 = vld [vmem:[%s6 + $0x20] sm:$0xff]
    %v2886 = vld [vmem:[%s6 + $0x28] sm:$0xff]
    %v2887 = vld [vmem:[%s6 + $0x30] sm:$0xff]
    %v2888 = vld [vmem:[%s6 + $0x38] sm:$0xff]
    %v2889 = vlaneseq
    %v2890 = vshrl.u32 %v2889, 7
    %v2891 = vsub.s32 0, %v2890
    %v2892 = vrot.slane %v32, %v2891
    %vm2893 = vcmask 523264
    %v2895 = vsel %vm2893, %v2879, 0
    %v2898 = vsel %vm2893, %v2880, 0
    %2900 = vmatprep.subr.mxu0 0.0
    %2901 = vmatpush1.msra.mxu0 0.0
    %2902 = vmatprep.subr.mxu0 0.0
    %2903 = vmatpush1.msra.mxu0 0.0
    %2904 = vmatprep.subr.mxu0 0.0
    %2905 = vmatpush1.msra.mxu0 0.0
    %2906 = vmatprep.subr.mxu0 0.0
    %2907 = vmatpush1.msra.mxu0 0.0
    %2908 = vmatprep.subr.mxu0 0.0
    %2909 = vmatpush1.msra.mxu0 0.0
    %2910 = vmatprep.subr.mxu0 0.0
    %2911 = vmatpush1.msra.mxu0 0.0
    %2912 = vmatprep.subr.mxu0 0.0
    %2913 = vmatpush1.msra.mxu0 0.0
    %2914 = vmatprep.subr.mxu0 0.0
    %2915 = vmatpush1.msra.mxu0 0.0
    %2916 = vmatprep.subr.mxu0 0.0
    %2917 = vmatpush1.msra.mxu0 %v2888
    %2918 = vmatprep.subr.mxu0 0.0
    %2919 = vmatpush1.msra.mxu0 %v2887
    %2920 = vmatprep.subr.mxu0 0.0
    %2921 = vmatpush1.msra.mxu0 %v2886
    %2922 = vmatprep.subr.mxu0 0.0
    %2923 = vmatpush1.msra.mxu0 %v2885
    %2924 = vmatprep.subr.mxu0 0.0
    %2925 = vmatpush1.msra.mxu0 %v2884
    %2926 = vmatprep.subr.mxu0 0.0
    %2927 = vmatpush1.msra.mxu0 %v2883
    %2928 = vmatprep.subr.mxu0 0.0
    %2929 = vmatpush1.msra.mxu0 %v2882
    %2930 = vmatprep.subr.mxu0 0.0
    %2931 = vmatpush1.msra.mxu0 %v2881
    %2932 = vmatprep.subr.mxu0 0.0
    %2933 = vmatpush2.msra.mxu0 0.0
    %2934 = vmatprep.subr.mxu0 0.0
    %2935 = vmatpush2.msra.mxu0 0.0
    %2936 = vmatprep.subr.mxu0 0.0
    %2937 = vmatpush2.msra.mxu0 0.0
    %2938 = vmatprep.subr.mxu0 0.0
    %2939 = vmatpush2.msra.mxu0 0.0
    %2940 = vmatprep.subr.mxu0 0.0
    %2941 = vmatpush2.msra.mxu0 0.0
    %2942 = vmatprep.subr.mxu0 0.0
    %2943 = vmatpush2.msra.mxu0 0.0
    %2944 = vmatprep.subr.mxu0 0.0
    %2945 = vmatpush2.msra.mxu0 0.0
    %2946 = vmatprep.subr.mxu0 0.0
    %2947 = vmatpush2.msra.mxu0 0.0
    %2948 = vmatprep.subr.mxu0 0.0
    %2949 = vmatpush2.msra.mxu0 0.0
    %2950 = vmatprep.subr.mxu0 0.0
    %2951 = vmatpush2.msra.mxu0 0.0
    %2952 = vmatprep.subr.mxu0 0.0
    %2953 = vmatpush2.msra.mxu0 0.0
    %2954 = vmatprep.subr.mxu0 0.0
    %2955 = vmatpush2.msra.mxu0 0.0
    %2956 = vmatprep.subr.mxu0 0.0
    %2957 = vmatpush2.msra.mxu0 0.0
    %2958 = vmatprep.subr.mxu0 0.0
    %2959 = vmatpush2.msra.mxu0 0.0
    %2960 = vmatprep.subr.mxu0 0.0
    %2961 = vmatpush2.msra.mxu0 0.0
    %2962 = vmatprep.subr.mxu0 0.0
    %2963 = vmatpush2.msra.mxu0 0.0
    %2964 = vmatprep.mubr.f32.mxu0 0.0
    %2965 = vmatmul.mubr.f32.gmra.mxu0 %v2895
    %v2966 = vpop.f32.mrf.mxu0
    %v2967 = vadd.f32 %v2892, %v2966
    %v2968 = vpop.f32.mrf.mxu0
    %2969 = vmatprep.mubr.f32.mxu0 0.0
    %2970 = vmatmul.mubr.f32.gmra.mxu0 %v2898
    %v2971 = vpop.f32.mrf.mxu0
    %v2972 = vadd.f32 %v2892, %v2971
    %v2973 = vpop.f32.mrf.mxu0
    %2974 = vdwg.mxu0
    %v2975 = vadd.f32 %v2736, %v2967
    %v2976 = vadd.f32 %v2737, %v2972
    %2977 = vst.msk [vmem:[#allocation2] sm:$0xff] %vm39, %v2975
    %2978 = vst.msk [vmem:[#allocation2 + $0x8] sm:$0xff] %vm39, %v2976
    // Predicated region
    $region34: #{tpu_custom_call.1} parent=1 // pred_check
      _
    $region35: #{tpu_custom_call.1} parent=1 // pred_check_branch
      %2980 = sbr.rel (0) target = $region37
    $region36: #{tpu_custom_call.1} parent=1 // pred_region
      %s2982 = ssub.s32 256, 256
      %2983 = vsyncadd [#allocation3], %s2982
      %s2984 = sshll.u32 [#allocation2], 4
      %s2985 = int_to_ptr.vmem [resolvable:$true] %s2984
      %2990 = dma.vmem_to_hbm [thread:$0]  %s2985, 256, %s8, [#allocation3], 128, 128, 8
    $region37: #{tpu_custom_call.1} parent=1 // pred_fallthru
      _
    // Predicated region
    $region38: #{tpu_custom_call.1} parent=1 // pred_check
      _
    $region39: #{tpu_custom_call.1} parent=1 // pred_check_branch
      %2992 = sbr.rel (0) target = $region41
    $region40: #{tpu_custom_call.1} parent=1 // pred_region
      %2993 = dma.done [#allocation3], 256
    $region41: #{tpu_custom_call.1} parent=1 // pred_fallthru
      _
    %2994 = vsyncpa [#allocation3], 1

</llo_original>
